<compile_context>
chip_gen: v7x
topology: tpu7x:2x2x1
jax: 0.10.0
libtpu: 0.0.40
codegen_flags: <defaults>
</compile_context>

<pallas_src>
import functools

import jax
import jax.numpy as jnp
from jax.experimental import pallas as pl
from jax.experimental.pallas import tpu as pltpu


# ----------------------------------------------------------------------------
# Helpers
# ----------------------------------------------------------------------------

def _vmem_params(semantics, block_bytes):
    """CompilerParams with dimension semantics and an explicit scoped-VMEM budget.

    block_bytes ~ per-grid-step bytes of pipelined blocks + in-kernel temporaries;
    double-buffering and slack are added, then clamped to the v7x 64 MiB ceiling.
    """
    need = 2 * int(block_bytes) + (8 << 20)
    limit = int(max(32 << 20, min(need, 64 << 20)))
    return pltpu.CompilerParams(dimension_semantics=semantics, vmem_limit_bytes=limit)


# ----------------------------------------------------------------------------
# Pallas kernels
# ----------------------------------------------------------------------------

def _knn_kernel(cq_ref, cr_ref, idx_ref, *, k, tm):
    """Fused KNN for one (batch, query-row-tile).

    cq: [TM, 3] query coords, cr: [3, N] all coords, idx out: [TM, k] int32
    neighbor indices (self excluded).  Distances live only in VMEM.
    """
    n = cr_ref.shape[-1]
    row0 = pl.program_id(1) * tm
    d = jnp.zeros((tm, n), jnp.float32)
    for a in range(3):                      # pure VPU broadcasts; no 3-deep MXU push
        q = cq_ref[:, a:a + 1]              # [TM, 1]  broadcast along lanes
        r = cr_ref[a:a + 1, :]              # [1, N]   broadcast along sublanes
        diff = q - r
        d = d + diff * diff
    col = jax.lax.broadcasted_iota(jnp.int32, (tm, n), 1)
    row = jax.lax.broadcasted_iota(jnp.int32, (tm, n), 0) + row0
    # Exclude self (knn_cuda takes k+1 neighbors and drops the zero-distance hit).
    d = jnp.where(col == row, jnp.inf, d)
    # TODO(synk): tie-breaking for exactly equidistant points (lowest index wins here)
    # may differ from the CUDA KNN; the subsequent max-over-k is order invariant.
    for j in range(k):                      # k is small & static: unrolled select passes
        m = jnp.min(d, axis=-1, keepdims=True)              # [TM, 1]
        cand = jnp.where(d == m, col, n)                     # lowest index among ties
        sel = jnp.min(cand, axis=-1, keepdims=True)          # [TM, 1] int32
        idx_ref[:, j:j + 1] = sel
        d = jnp.where(col == sel, jnp.inf, d)                # mask the selected column


def _edge_conv_kernel(feat_ref, idx_ref, w_eff_ref, w_nb_ref, o_ref, *, k, eps, slope):
    """Fused (per batch): in-VMEM neighbor gather + conv1x1 over cat(x, nb - x)
    + InstanceNorm2d + LeakyReLU + max over k.

    feat: [C, N] bf16, idx: [k, N] int32, w_eff = W[:, :C]-W[:, C:], w_nb = W[:, C:]
    (both [Cout, C] bf16)  ->  o: [Cout, N] (o_ref.dtype, bf16).
    """
    c, n = feat_ref.shape
    feat_bf = feat_ref[...]                                  # [C, N] bf16
    feat_f32 = feat_bf.astype(jnp.float32)                   # gather on 32-bit lanes
    # Gather all k neighbor sets in VMEM (no [B,k,C,N] HBM intermediate) and lay them
    # out as [C, k*N] so a single long-N matmul streams the MXU.
    nbs = []
    for j in range(k):
        idx_j = jnp.broadcast_to(idx_ref[j:j + 1, :], (c, n))          # [C, N] int32
        nbs.append(jnp.take_along_axis(feat_f32, idx_j, axis=-1).astype(jnp.bfloat16))
    nb_all = jnp.concatenate(nbs, axis=-1)                             # [C, k*N] bf16
    base = jnp.dot(w_eff_ref[...], feat_bf, preferred_element_type=jnp.float32)  # [Cout, N]
    ynb = jnp.dot(w_nb_ref[...], nb_all, preferred_element_type=jnp.float32)     # [Cout, k*N]
    cout = base.shape[0]
    s1 = jnp.zeros((cout, 1), jnp.float32)
    s2 = jnp.zeros((cout, 1), jnp.float32)
    mx = None
    for j in range(k):
        y = base + ynb[:, j * n:(j + 1) * n]
        # Reduce to per-channel stats immediately (XLU lane reductions; keeps the live
        # set at ~3 full-width tiles instead of 5 -> no vreg spills).
        s1 = s1 + jnp.sum(y, axis=-1, keepdims=True)
        s2 = s2 + jnp.sum(y * y, axis=-1, keepdims=True)
        mx = y if mx is None else jnp.maximum(mx, y)
    inv = 1.0 / (k * n)
    mean = s1 * inv                                          # IN stats over (k, N), f32
    var = jnp.maximum(s2 * inv - mean * mean, 0.0)
    # InstanceNorm (positive per-channel scale) + LeakyReLU are monotone per channel,
    # so the max over k commutes: apply them once to the running max.
    z = (mx - mean) * jax.lax.rsqrt(var + eps)
    o_ref[...] = jnp.where(z >= 0, z, slope * z).astype(o_ref.dtype)


def _concat_conv_kernel(x0_ref, x1_ref, x2_ref, w_ref, o_ref, *, eps, slope):
    """Fused (per batch): on-chip sublane concat of (x0, x1, x2) + conv1x1 as a single
    [Cout,4C] x [4C,N] matmul + InstanceNorm + LeakyReLU (spatial extent = N, k = 1)."""
    x = jnp.concatenate([x0_ref[...], x1_ref[...], x2_ref[...]], axis=0)   # [4C, N] bf16, VMEM only
    y = jnp.dot(w_ref[...], x, preferred_element_type=jnp.float32)         # [Cout, N] f32
    inv = 1.0 / y.shape[-1]
    mean = jnp.sum(y, axis=-1, keepdims=True) * inv
    var = jnp.maximum(jnp.sum(y * y, axis=-1, keepdims=True) * inv - mean * mean, 0.0)
    z = (y - mean) * jax.lax.rsqrt(var + eps)
    o_ref[...] = jnp.where(z >= 0, z, slope * z).astype(o_ref.dtype)


# ----------------------------------------------------------------------------
# Pallas wrappers
# ----------------------------------------------------------------------------

def knn_indices(coords, k):
    """k nearest neighbors (excluding self) per point, fully in Pallas.

    coords [B, 3, N] -> idx [B, N, k] int32.  The [N, N] distance matrix never leaves
    VMEM; the kernel is row-tiled so the per-step footprint is ~TM*N*4 bytes.
    """
    B, _, N = coords.shape
    coords = coords.astype(jnp.float32)
    coords_t = jnp.transpose(coords, (0, 2, 1))              # [B, N, 3] query rows
    tm = 128 if N % 128 == 0 else N
    kern = functools.partial(_knn_kernel, k=k, tm=tm)
    block_bytes = tm * 3 * 4 + 3 * N * 4 + tm * k * 4 + 4 * tm * N * 4
    return pl.pallas_call(
        kern,
        out_shape=jax.ShapeDtypeStruct((B, N, k), jnp.int32),
        grid=(B, N // tm),
        in_specs=[
            pl.BlockSpec((None, tm, 3), lambda b, t: (b, t, 0)),
            pl.BlockSpec((None, 3, N), lambda b, t: (b, 0, 0)),
        ],
        out_specs=pl.BlockSpec((None, tm, k), lambda b, t: (b, t, 0)),
        compiler_params=_vmem_params(("parallel", "parallel"), block_bytes),
    )(coords_t, coords)


def edge_conv_in_act_max(feats, idx_t, w, *, slope=0.2, eps=1e-5):
    """Conv2d(2C->Cout, 1x1, bias=False) over cat(x, nb-x) + InstanceNorm2d + LeakyReLU
    + max over k, with the neighbor gather fused in-kernel.

    feats: [B, C, N], idx_t: [B, k, N] int32, w: [Cout, 2C] with the reference's channel
    order [center, neighbor - center].  Returns [B, Cout, N] bf16.
    """
    B, C, N = feats.shape
    k = idx_t.shape[1]
    Cout = w.shape[0]
    wf = w.astype(jnp.float32)
    w_eff = (wf[:, :C] - wf[:, C:]).astype(jnp.bfloat16)   # multiplies the center features
    w_nb = wf[:, C:].astype(jnp.bfloat16)                  # multiplies the gathered neighbors
    kern = functools.partial(_edge_conv_kernel, k=k, eps=eps, slope=slope)
    block_bytes = (C * N * 2 + k * N * 4 + 2 * Cout * C * 2 + Cout * N * 2
                   + (k + 2) * Cout * N * 4 + (k + 1) * C * N * 4)
    return pl.pallas_call(
        kern,
        out_shape=jax.ShapeDtypeStruct((B, Cout, N), jnp.bfloat16),
        grid=(B,),
        in_specs=[
            pl.BlockSpec((None, C, N), lambda b: (b, 0, 0)),
            pl.BlockSpec((None, k, N), lambda b: (b, 0, 0)),
            pl.BlockSpec((Cout, C), lambda b: (0, 0)),        # resident weights
            pl.BlockSpec((Cout, C), lambda b: (0, 0)),
        ],
        out_specs=pl.BlockSpec((None, Cout, N), lambda b: (b, 0, 0)),
        compiler_params=_vmem_params(("parallel",), block_bytes),
    )(feats.astype(jnp.bfloat16), idx_t, w_eff, w_nb)


def concat_conv_in_act(x0, x1, x2, w, *, slope=0.2, eps=1e-5):
    """Conv2d(4C->Cout, 1x1) over cat(x0, x1, x2) + InstanceNorm2d + LeakyReLU.

    The 4C concat is built on-chip (sublane concat in VMEM), never in HBM.
    Returns [B, Cout, N] f32 (module output dtype).
    """
    B, C0, N = x0.shape
    C1, C2 = x1.shape[1], x2.shape[1]
    Cin = C0 + C1 + C2
    Cout = w.shape[0]
    wb = w.astype(jnp.bfloat16)
    kern = functools.partial(_concat_conv_kernel, eps=eps, slope=slope)
    block_bytes = 2 * Cin * N * 2 + Cout * Cin * 2 + 2 * Cout * N * 4
    return pl.pallas_call(
        kern,
        out_shape=jax.ShapeDtypeStruct((B, Cout, N), jnp.float32),
        grid=(B,),
        in_specs=[
            pl.BlockSpec((None, C0, N), lambda b: (b, 0, 0)),
            pl.BlockSpec((None, C1, N), lambda b: (b, 0, 0)),
            pl.BlockSpec((None, C2, N), lambda b: (b, 0, 0)),
            pl.BlockSpec((Cout, Cin), lambda b: (0, 0)),      # resident weight
        ],
        out_specs=pl.BlockSpec((None, Cout, N), lambda b: (b, 0, 0)),
        compiler_params=_vmem_params(("parallel",), block_bytes),
    )(x0.astype(jnp.bfloat16), x1.astype(jnp.bfloat16), x2.astype(jnp.bfloat16), wb)


# ----------------------------------------------------------------------------
# SelfAttention forward
# ----------------------------------------------------------------------------

@functools.partial(jax.jit, static_argnames=('k',))
def self_attention_forward(params, coords, feats, *, k):
    """SelfAttention.forward: coords [B,3,N], feats [B,C,N] -> [B,C,N] (f32)."""
    # Both get_graph_feature calls use the same coords -> compute the KNN once and reuse.
    idx = knn_indices(coords, k)                                       # [B, N, k] int32
    idx_t = jnp.transpose(idx, (0, 2, 1))                              # [B, k, N] (tiny int32)
    x0 = feats.astype(jnp.bfloat16)
    x1 = edge_conv_in_act_max(x0, idx_t, params['w1'], slope=0.2)      # [B, C, N]  bf16
    x2 = edge_conv_in_act_max(x1, idx_t, params['w2'], slope=0.2)      # [B, 2C, N] bf16
    return concat_conv_in_act(x0, x1, x2, params['w3'], slope=0.2)     # [B, C, N]  f32


# ----------------------------------------------------------------------------
# Deterministic parameter init (shapes from the PyTorch __init__; all convs bias=False)
# ----------------------------------------------------------------------------

def _uniform(key, shape, fan_in):
    bound = 1.0 / (fan_in ** 0.5)
    return jax.random.uniform(key, shape, jnp.float32, -bound, bound)


def init_params(key, feature_dim):
    F = feature_dim
    k1, k2, k3 = jax.random.split(key, 3)
    return {
        'w1': _uniform(k1, (F, 2 * F), 2 * F),        # conv1: 2F -> F
        'w2': _uniform(k2, (2 * F, 2 * F), 2 * F),    # conv2: 2F -> 2F
        'w3': _uniform(k3, (F, 4 * F), 4 * F),        # conv3: 4F -> F
    }


# ----------------------------------------------------------------------------
# Main
# ----------------------------------------------------------------------------

if __name__ == "__main__":
    # Lane-dense demo shapes (N multiple of 128, channel counts multiples of 16).
    B, F, N = 2, 16, 128
    K_NEIGHBORS = 4

    key = jax.random.PRNGKey(0)
    kc, kf, kp = jax.random.split(key, 3)
    coords = jax.random.normal(kc, (B, 3, N), jnp.float32)
    feats = jax.random.normal(kf, (B, F, N), jnp.float32)
    params = init_params(kp, F)

    out = self_attention_forward(params, coords, feats, k=K_NEIGHBORS)
    out = jax.block_until_ready(out)

    assert out.shape == (B, F, N)
    assert bool(jnp.all(jnp.isfinite(out)))
    print("KERNEL_OK")
</pallas_src>

<mosaic_0001>
module attributes {stable_mosaic.version = 11 : i64} {
  func.func @_knn_kernel(%arg0: i32, %arg1: i32, %arg2: memref<1x128x3xf32, #tpu.memory_space<vmem>>, %arg3: memref<1x3x128xf32, #tpu.memory_space<vmem>>, %arg4: memref<1x128x4xi32, #tpu.memory_space<vmem>>) attributes {dimension_semantics = [#tpu.dimension_semantics<parallel>, #tpu.dimension_semantics<parallel>], iteration_bounds = array<i64: 2, 1>, scalar_prefetch = 0 : i64, scratch_operands = 0 : i64, tpu.core_type = #tpu.core_type<tc>, window_params = [{transform_indices = @transform_0, window_bounds = array<i64: 1, 128, 3>}, {transform_indices = @transform_1, window_bounds = array<i64: 1, 3, 128>}, {transform_indices = @transform_2, window_bounds = array<i64: 1, 128, 4>}]} {
    %c128_i32 = arith.constant 128 : i32
    %0 = arith.muli %arg1, %c128_i32 : i32
    %cst = arith.constant 0.000000e+00 : f32
    %1 = vector.broadcast %cst : f32 to vector<128x128xf32>
    %c0 = arith.constant 0 : index
    %c0_0 = arith.constant 0 : index
    %c0_1 = arith.constant 0 : index
    %2 = vector.load %arg2[%c0, %c0_0, %c0_1] : memref<1x128x3xf32, #tpu.memory_space<vmem>>, vector<1x128x1xf32>
    %3 = vector.shape_cast %2 : vector<1x128x1xf32> to vector<128x1xf32>
    %c0_2 = arith.constant 0 : index
    %c0_3 = arith.constant 0 : index
    %c0_4 = arith.constant 0 : index
    %4 = vector.load %arg3[%c0_2, %c0_3, %c0_4] : memref<1x3x128xf32, #tpu.memory_space<vmem>>, vector<1x1x128xf32>
    %5 = vector.shape_cast %4 : vector<1x1x128xf32> to vector<1x128xf32>
    %6 = vector.broadcast %3 : vector<128x1xf32> to vector<128x128xf32>
    %7 = vector.broadcast %5 : vector<1x128xf32> to vector<128x128xf32>
    %8 = arith.subf %6, %7 : vector<128x128xf32>
    %9 = arith.mulf %8, %8 : vector<128x128xf32>
    %10 = arith.addf %1, %9 : vector<128x128xf32>
    %c0_5 = arith.constant 0 : index
    %c0_6 = arith.constant 0 : index
    %c1 = arith.constant 1 : index
    %11 = vector.load %arg2[%c0_5, %c0_6, %c1] : memref<1x128x3xf32, #tpu.memory_space<vmem>>, vector<1x128x1xf32>
    %12 = vector.shape_cast %11 : vector<1x128x1xf32> to vector<128x1xf32>
    %c0_7 = arith.constant 0 : index
    %c1_8 = arith.constant 1 : index
    %c0_9 = arith.constant 0 : index
    %13 = vector.load %arg3[%c0_7, %c1_8, %c0_9] : memref<1x3x128xf32, #tpu.memory_space<vmem>>, vector<1x1x128xf32>
    %14 = vector.shape_cast %13 : vector<1x1x128xf32> to vector<1x128xf32>
    %15 = vector.broadcast %12 : vector<128x1xf32> to vector<128x128xf32>
    %16 = vector.broadcast %14 : vector<1x128xf32> to vector<128x128xf32>
    %17 = arith.subf %15, %16 : vector<128x128xf32>
    %18 = arith.mulf %17, %17 : vector<128x128xf32>
    %19 = arith.addf %10, %18 : vector<128x128xf32>
    %c0_10 = arith.constant 0 : index
    %c0_11 = arith.constant 0 : index
    %c2 = arith.constant 2 : index
    %20 = vector.load %arg2[%c0_10, %c0_11, %c2] : memref<1x128x3xf32, #tpu.memory_space<vmem>>, vector<1x128x1xf32>
    %21 = vector.shape_cast %20 : vector<1x128x1xf32> to vector<128x1xf32>
    %c0_12 = arith.constant 0 : index
    %c2_13 = arith.constant 2 : index
    %c0_14 = arith.constant 0 : index
    %22 = vector.load %arg3[%c0_12, %c2_13, %c0_14] : memref<1x3x128xf32, #tpu.memory_space<vmem>>, vector<1x1x128xf32>
    %23 = vector.shape_cast %22 : vector<1x1x128xf32> to vector<1x128xf32>
    %24 = vector.broadcast %21 : vector<128x1xf32> to vector<128x128xf32>
    %25 = vector.broadcast %23 : vector<1x128xf32> to vector<128x128xf32>
    %26 = arith.subf %24, %25 : vector<128x128xf32>
    %27 = arith.mulf %26, %26 : vector<128x128xf32>
    %28 = arith.addf %19, %27 : vector<128x128xf32>
    %29 = tpu.iota {dimensions = array<i32: 1>} : vector<128x128xi32>
    %30 = tpu.iota {dimensions = array<i32: 0>} : vector<128x128xi32>
    %31 = vector.broadcast %0 : i32 to vector<128x128xi32>
    %32 = arith.addi %30, %31 : vector<128x128xi32>
    %33 = arith.cmpi eq, %29, %32 : vector<128x128xi32>
    %cst_15 = arith.constant 0x7F800000 : f32
    %34 = vector.broadcast %cst_15 : f32 to vector<128x128xf32>
    %35 = arith.select %33, %34, %28 : vector<128x128xi1>, vector<128x128xf32>
    %cst_16 = arith.constant dense<0x7F800000> : vector<128xf32>
    %36 = vector.multi_reduction <minimumf>, %35, %cst_16 [1] : vector<128x128xf32> to vector<128xf32>
    %37 = vector.shape_cast %36 : vector<128xf32> to vector<128x1xf32>
    %38 = vector.broadcast %37 : vector<128x1xf32> to vector<128x128xf32>
    %39 = arith.cmpf oeq, %35, %38 : vector<128x128xf32>
    %c128_i32_17 = arith.constant 128 : i32
    %40 = vector.broadcast %c128_i32_17 : i32 to vector<128x128xi32>
    %41 = arith.select %39, %29, %40 : vector<128x128xi1>, vector<128x128xi32>
    %cst_18 = arith.constant dense<2147483647> : vector<128xi32>
    %42 = vector.multi_reduction <minsi>, %41, %cst_18 [1] : vector<128x128xi32> to vector<128xi32>
    %43 = vector.shape_cast %42 : vector<128xi32> to vector<128x1xi32>
    %c0_19 = arith.constant 0 : index
    %c0_20 = arith.constant 0 : index
    %c0_21 = arith.constant 0 : index
    %44 = vector.load %arg4[%c0_19, %c0_20, %c0_21] : memref<1x128x4xi32, #tpu.memory_space<vmem>>, vector<1x128x1xi32>
    %45 = vector.shape_cast %44 : vector<1x128x1xi32> to vector<128x1xi32>
    %46 = vector.shape_cast %43 : vector<128x1xi32> to vector<1x128x1xi32>
    tpu.vector_store %arg4[%c0_19, %c0_20, %c0_21], %46 {strides = array<i32>} : memref<1x128x4xi32, #tpu.memory_space<vmem>>, vector<1x128x1xi32>,
    %47 = vector.broadcast %43 : vector<128x1xi32> to vector<128x128xi32>
    %48 = arith.cmpi eq, %29, %47 : vector<128x128xi32>
    %cst_22 = arith.constant 0x7F800000 : f32
    %49 = vector.broadcast %cst_22 : f32 to vector<128x128xf32>
    %50 = arith.select %48, %49, %35 : vector<128x128xi1>, vector<128x128xf32>
    %cst_23 = arith.constant dense<0x7F800000> : vector<128xf32>
    %51 = vector.multi_reduction <minimumf>, %50, %cst_23 [1] : vector<128x128xf32> to vector<128xf32>
    %52 = vector.shape_cast %51 : vector<128xf32> to vector<128x1xf32>
    %53 = vector.broadcast %52 : vector<128x1xf32> to vector<128x128xf32>
    %54 = arith.cmpf oeq, %50, %53 : vector<128x128xf32>
    %c128_i32_24 = arith.constant 128 : i32
    %55 = vector.broadcast %c128_i32_24 : i32 to vector<128x128xi32>
    %56 = arith.select %54, %29, %55 : vector<128x128xi1>, vector<128x128xi32>
    %cst_25 = arith.constant dense<2147483647> : vector<128xi32>
    %57 = vector.multi_reduction <minsi>, %56, %cst_25 [1] : vector<128x128xi32> to vector<128xi32>
    %58 = vector.shape_cast %57 : vector<128xi32> to vector<128x1xi32>
    %c0_26 = arith.constant 0 : index
    %c0_27 = arith.constant 0 : index
    %c1_28 = arith.constant 1 : index
    %59 = vector.load %arg4[%c0_26, %c0_27, %c1_28] : memref<1x128x4xi32, #tpu.memory_space<vmem>>, vector<1x128x1xi32>
    %60 = vector.shape_cast %59 : vector<1x128x1xi32> to vector<128x1xi32>
    %61 = vector.shape_cast %58 : vector<128x1xi32> to vector<1x128x1xi32>
    tpu.vector_store %arg4[%c0_26, %c0_27, %c1_28], %61 {strides = array<i32>} : memref<1x128x4xi32, #tpu.memory_space<vmem>>, vector<1x128x1xi32>,
    %62 = vector.broadcast %58 : vector<128x1xi32> to vector<128x128xi32>
    %63 = arith.cmpi eq, %29, %62 : vector<128x128xi32>
    %cst_29 = arith.constant 0x7F800000 : f32
    %64 = vector.broadcast %cst_29 : f32 to vector<128x128xf32>
    %65 = arith.select %63, %64, %50 : vector<128x128xi1>, vector<128x128xf32>
    %cst_30 = arith.constant dense<0x7F800000> : vector<128xf32>
    %66 = vector.multi_reduction <minimumf>, %65, %cst_30 [1] : vector<128x128xf32> to vector<128xf32>
    %67 = vector.shape_cast %66 : vector<128xf32> to vector<128x1xf32>
    %68 = vector.broadcast %67 : vector<128x1xf32> to vector<128x128xf32>
    %69 = arith.cmpf oeq, %65, %68 : vector<128x128xf32>
    %c128_i32_31 = arith.constant 128 : i32
    %70 = vector.broadcast %c128_i32_31 : i32 to vector<128x128xi32>
    %71 = arith.select %69, %29, %70 : vector<128x128xi1>, vector<128x128xi32>
    %cst_32 = arith.constant dense<2147483647> : vector<128xi32>
    %72 = vector.multi_reduction <minsi>, %71, %cst_32 [1] : vector<128x128xi32> to vector<128xi32>
    %73 = vector.shape_cast %72 : vector<128xi32> to vector<128x1xi32>
    %c0_33 = arith.constant 0 : index
    %c0_34 = arith.constant 0 : index
    %c2_35 = arith.constant 2 : index
    %74 = vector.load %arg4[%c0_33, %c0_34, %c2_35] : memref<1x128x4xi32, #tpu.memory_space<vmem>>, vector<1x128x1xi32>
    %75 = vector.shape_cast %74 : vector<1x128x1xi32> to vector<128x1xi32>
    %76 = vector.shape_cast %73 : vector<128x1xi32> to vector<1x128x1xi32>
    tpu.vector_store %arg4[%c0_33, %c0_34, %c2_35], %76 {strides = array<i32>} : memref<1x128x4xi32, #tpu.memory_space<vmem>>, vector<1x128x1xi32>,
    %77 = vector.broadcast %73 : vector<128x1xi32> to vector<128x128xi32>
    %78 = arith.cmpi eq, %29, %77 : vector<128x128xi32>
    %cst_36 = arith.constant 0x7F800000 : f32
    %79 = vector.broadcast %cst_36 : f32 to vector<128x128xf32>
    %80 = arith.select %78, %79, %65 : vector<128x128xi1>, vector<128x128xf32>
    %cst_37 = arith.constant dense<0x7F800000> : vector<128xf32>
    %81 = vector.multi_reduction <minimumf>, %80, %cst_37 [1] : vector<128x128xf32> to vector<128xf32>
    %82 = vector.shape_cast %81 : vector<128xf32> to vector<128x1xf32>
    %83 = vector.broadcast %82 : vector<128x1xf32> to vector<128x128xf32>
    %84 = arith.cmpf oeq, %80, %83 : vector<128x128xf32>
    %c128_i32_38 = arith.constant 128 : i32
    %85 = vector.broadcast %c128_i32_38 : i32 to vector<128x128xi32>
    %86 = arith.select %84, %29, %85 : vector<128x128xi1>, vector<128x128xi32>
    %cst_39 = arith.constant dense<2147483647> : vector<128xi32>
    %87 = vector.multi_reduction <minsi>, %86, %cst_39 [1] : vector<128x128xi32> to vector<128xi32>
    %88 = vector.shape_cast %87 : vector<128xi32> to vector<128x1xi32>
    %c0_40 = arith.constant 0 : index
    %c0_41 = arith.constant 0 : index
    %c3 = arith.constant 3 : index
    %89 = vector.load %arg4[%c0_40, %c0_41, %c3] : memref<1x128x4xi32, #tpu.memory_space<vmem>>, vector<1x128x1xi32>
    %90 = vector.shape_cast %89 : vector<1x128x1xi32> to vector<128x1xi32>
    %91 = vector.shape_cast %88 : vector<128x1xi32> to vector<1x128x1xi32>
    tpu.vector_store %arg4[%c0_40, %c0_41, %c3], %91 {strides = array<i32>} : memref<1x128x4xi32, #tpu.memory_space<vmem>>, vector<1x128x1xi32>,
    return
  }
  func.func @transform_0(%arg0: i32, %arg1: i32) -> (i32, i32, i32) {
    %c0_i32 = arith.constant 0 : i32
    %c0_i32_0 = arith.constant 0 : i32
    return %arg0, %arg1, %c0_i32 : i32, i32, i32
  }
  func.func @transform_1(%arg0: i32, %arg1: i32) -> (i32, i32, i32) {
    %c0_i32 = arith.constant 0 : i32
    %c0_i32_0 = arith.constant 0 : i32
    %c0_i32_1 = arith.constant 0 : i32
    return %arg0, %c0_i32, %c0_i32_0 : i32, i32, i32
  }
  func.func @transform_2(%arg0: i32, %arg1: i32) -> (i32, i32, i32) {
    %c0_i32 = arith.constant 0 : i32
    %c0_i32_0 = arith.constant 0 : i32
    return %arg0, %arg1, %c0_i32 : i32, i32, i32
  }
}

module attributes {stable_mosaic.version = 11 : i64} {
  func.func @_edge_conv_kernel(%arg0: i32, %arg1: memref<1x16x128xbf16, #tpu.memory_space<vmem>>, %arg2: memref<1x4x128xi32, #tpu.memory_space<vmem>>, %arg3: memref<16x16xbf16, #tpu.memory_space<vmem>>, %arg4: memref<16x16xbf16, #tpu.memory_space<vmem>>, %arg5: memref<1x16x128xbf16, #tpu.memory_space<vmem>>) attributes {dimension_semantics = [#tpu.dimension_semantics<parallel>], iteration_bounds = array<i64: 2>, scalar_prefetch = 0 : i64, scratch_operands = 0 : i64, tpu.core_type = #tpu.core_type<tc>, window_params = [{transform_indices = @transform_0, window_bounds = array<i64: 1, 16, 128>}, {transform_indices = @transform_1, window_bounds = array<i64: 1, 4, 128>}, {pipeline_mode = #tpu.pipeline_mode<synchronous>, transform_indices = @transform_2, window_bounds = array<i64: 16, 16>}, {pipeline_mode = #tpu.pipeline_mode<synchronous>, transform_indices = @transform_3, window_bounds = array<i64: 16, 16>}, {transform_indices = @transform_4, window_bounds = array<i64: 1, 16, 128>}]} {
    %c0 = arith.constant 0 : index
    %c0_0 = arith.constant 0 : index
    %c0_1 = arith.constant 0 : index
    %0 = vector.load %arg1[%c0, %c0_0, %c0_1] : memref<1x16x128xbf16, #tpu.memory_space<vmem>>, vector<1x16x128xbf16>
    %1 = vector.shape_cast %0 : vector<1x16x128xbf16> to vector<16x128xbf16>
    %2 = arith.extf %1 : vector<16x128xbf16> to vector<16x128xf32>
    %c0_2 = arith.constant 0 : index
    %c0_3 = arith.constant 0 : index
    %c0_4 = arith.constant 0 : index
    %3 = vector.load %arg2[%c0_2, %c0_3, %c0_4] : memref<1x4x128xi32, #tpu.memory_space<vmem>>, vector<1x1x128xi32>
    %4 = vector.shape_cast %3 : vector<1x1x128xi32> to vector<1x128xi32>
    %5 = vector.shape_cast %4 : vector<1x128xi32> to vector<1x128xi32>
    %6 = vector.broadcast %5 : vector<1x128xi32> to vector<16x128xi32>
    %c0_i32 = arith.constant 0 : i32
    %7 = vector.broadcast %c0_i32 : i32 to vector<16x128xi32>
    %8 = arith.cmpi slt, %6, %7 : vector<16x128xi32>
    %c128_i32 = arith.constant 128 : i32
    %9 = vector.broadcast %c128_i32 : i32 to vector<16x128xi32>
    %10 = arith.addi %6, %9 : vector<16x128xi32>
    %11 = arith.select %8, %10, %6 : vector<16x128xi1>, vector<16x128xi32>
    %12 = vector.shape_cast %11 : vector<16x128xi32> to vector<16x128x1xi32>
    %13 = vector.shape_cast %12 : vector<16x128x1xi32> to vector<16x128xi32>
    %14 = tpu.dynamic_gather %2[%13] in [1] : vector<16x128xf32>, vector<16x128xi32> -> vector<16x128xf32>
    %15 = arith.truncf %14 : vector<16x128xf32> to vector<16x128xbf16>
    %c0_5 = arith.constant 0 : index
    %c1 = arith.constant 1 : index
    %c0_6 = arith.constant 0 : index
    %16 = vector.load %arg2[%c0_5, %c1, %c0_6] : memref<1x4x128xi32, #tpu.memory_space<vmem>>, vector<1x1x128xi32>
    %17 = vector.shape_cast %16 : vector<1x1x128xi32> to vector<1x128xi32>
    %18 = vector.shape_cast %17 : vector<1x128xi32> to vector<1x128xi32>
    %19 = vector.broadcast %18 : vector<1x128xi32> to vector<16x128xi32>
    %c0_i32_7 = arith.constant 0 : i32
    %20 = vector.broadcast %c0_i32_7 : i32 to vector<16x128xi32>
    %21 = arith.cmpi slt, %19, %20 : vector<16x128xi32>
    %c128_i32_8 = arith.constant 128 : i32
    %22 = vector.broadcast %c128_i32_8 : i32 to vector<16x128xi32>
    %23 = arith.addi %19, %22 : vector<16x128xi32>
    %24 = arith.select %21, %23, %19 : vector<16x128xi1>, vector<16x128xi32>
    %25 = vector.shape_cast %24 : vector<16x128xi32> to vector<16x128x1xi32>
    %26 = vector.shape_cast %25 : vector<16x128x1xi32> to vector<16x128xi32>
    %27 = tpu.dynamic_gather %2[%26] in [1] : vector<16x128xf32>, vector<16x128xi32> -> vector<16x128xf32>
    %28 = arith.truncf %27 : vector<16x128xf32> to vector<16x128xbf16>
    %c0_9 = arith.constant 0 : index
    %c2 = arith.constant 2 : index
    %c0_10 = arith.constant 0 : index
    %29 = vector.load %arg2[%c0_9, %c2, %c0_10] : memref<1x4x128xi32, #tpu.memory_space<vmem>>, vector<1x1x128xi32>
    %30 = vector.shape_cast %29 : vector<1x1x128xi32> to vector<1x128xi32>
    %31 = vector.shape_cast %30 : vector<1x128xi32> to vector<1x128xi32>
    %32 = vector.broadcast %31 : vector<1x128xi32> to vector<16x128xi32>
    %c0_i32_11 = arith.constant 0 : i32
    %33 = vector.broadcast %c0_i32_11 : i32 to vector<16x128xi32>
    %34 = arith.cmpi slt, %32, %33 : vector<16x128xi32>
    %c128_i32_12 = arith.constant 128 : i32
    %35 = vector.broadcast %c128_i32_12 : i32 to vector<16x128xi32>
    %36 = arith.addi %32, %35 : vector<16x128xi32>
    %37 = arith.select %34, %36, %32 : vector<16x128xi1>, vector<16x128xi32>
    %38 = vector.shape_cast %37 : vector<16x128xi32> to vector<16x128x1xi32>
    %39 = vector.shape_cast %38 : vector<16x128x1xi32> to vector<16x128xi32>
    %40 = tpu.dynamic_gather %2[%39] in [1] : vector<16x128xf32>, vector<16x128xi32> -> vector<16x128xf32>
    %41 = arith.truncf %40 : vector<16x128xf32> to vector<16x128xbf16>
    %c0_13 = arith.constant 0 : index
    %c3 = arith.constant 3 : index
    %c0_14 = arith.constant 0 : index
    %42 = vector.load %arg2[%c0_13, %c3, %c0_14] : memref<1x4x128xi32, #tpu.memory_space<vmem>>, vector<1x1x128xi32>
    %43 = vector.shape_cast %42 : vector<1x1x128xi32> to vector<1x128xi32>
    %44 = vector.shape_cast %43 : vector<1x128xi32> to vector<1x128xi32>
    %45 = vector.broadcast %44 : vector<1x128xi32> to vector<16x128xi32>
    %c0_i32_15 = arith.constant 0 : i32
    %46 = vector.broadcast %c0_i32_15 : i32 to vector<16x128xi32>
    %47 = arith.cmpi slt, %45, %46 : vector<16x128xi32>
    %c128_i32_16 = arith.constant 128 : i32
    %48 = vector.broadcast %c128_i32_16 : i32 to vector<16x128xi32>
    %49 = arith.addi %45, %48 : vector<16x128xi32>
    %50 = arith.select %47, %49, %45 : vector<16x128xi1>, vector<16x128xi32>
    %51 = vector.shape_cast %50 : vector<16x128xi32> to vector<16x128x1xi32>
    %52 = vector.shape_cast %51 : vector<16x128x1xi32> to vector<16x128xi32>
    %53 = tpu.dynamic_gather %2[%52] in [1] : vector<16x128xf32>, vector<16x128xi32> -> vector<16x128xf32>
    %54 = arith.truncf %53 : vector<16x128xf32> to vector<16x128xbf16>
    %55 = tpu.concatenate %15, %28, %41, %54 in 1 : vector<16x128xbf16>, vector<16x128xbf16>, vector<16x128xbf16>, vector<16x128xbf16> -> vector<16x512xbf16>
    %c0_17 = arith.constant 0 : index
    %c0_18 = arith.constant 0 : index
    %56 = vector.load %arg3[%c0_17, %c0_18] : memref<16x16xbf16, #tpu.memory_space<vmem>>, vector<16x16xbf16>
    %cst = arith.constant dense<0.000000e+00> : vector<16x128xf32>
    %57 = tpu.matmul %56, %1, %cst {dimension_numbers = #tpu.dot_dimension_numbers<[1], [0], [0], [1], [0, 0, 1, 1], [], []>} : vector<16x16xbf16>, vector<16x128xbf16>, vector<16x128xf32> -> vector<16x128xf32>
    %c0_19 = arith.constant 0 : index
    %c0_20 = arith.constant 0 : index
    %58 = vector.load %arg4[%c0_19, %c0_20] : memref<16x16xbf16, #tpu.memory_space<vmem>>, vector<16x16xbf16>
    %cst_21 = arith.constant dense<0.000000e+00> : vector<16x512xf32>
    %59 = tpu.matmul %58, %55, %cst_21 {dimension_numbers = #tpu.dot_dimension_numbers<[1], [0], [0], [1], [0, 0, 1, 1], [], []>} : vector<16x16xbf16>, vector<16x512xbf16>, vector<16x512xf32> -> vector<16x512xf32>
    %cst_22 = arith.constant 0.000000e+00 : f32
    %60 = vector.broadcast %cst_22 : f32 to vector<16x1xf32>
    %cst_23 = arith.constant 0.000000e+00 : f32
    %61 = vector.broadcast %cst_23 : f32 to vector<16x1xf32>
    %62 = vector.extract_strided_slice %59 {offsets = [0, 0], sizes = [16, 128], strides = [1, 1]} : vector<16x512xf32> to vector<16x128xf32>
    %63 = arith.addf %57, %62 : vector<16x128xf32>
    %cst_24 = arith.constant dense<0.000000e+00> : vector<16xf32>
    %64 = vector.multi_reduction <add>, %63, %cst_24 [1] : vector<16x128xf32> to vector<16xf32>
    %65 = vector.shape_cast %64 : vector<16xf32> to vector<16x1xf32>
    %66 = arith.addf %60, %65 : vector<16x1xf32>
    %67 = arith.mulf %63, %63 : vector<16x128xf32>
    %cst_25 = arith.constant dense<0.000000e+00> : vector<16xf32>
    %68 = vector.multi_reduction <add>, %67, %cst_25 [1] : vector<16x128xf32> to vector<16xf32>
    %69 = vector.shape_cast %68 : vector<16xf32> to vector<16x1xf32>
    %70 = arith.addf %61, %69 : vector<16x1xf32>
    %71 = vector.extract_strided_slice %59 {offsets = [0, 128], sizes = [16, 128], strides = [1, 1]} : vector<16x512xf32> to vector<16x128xf32>
    %72 = arith.addf %57, %71 : vector<16x128xf32>
    %cst_26 = arith.constant dense<0.000000e+00> : vector<16xf32>
    %73 = vector.multi_reduction <add>, %72, %cst_26 [1] : vector<16x128xf32> to vector<16xf32>
    %74 = vector.shape_cast %73 : vector<16xf32> to vector<16x1xf32>
    %75 = arith.addf %66, %74 : vector<16x1xf32>
    %76 = arith.mulf %72, %72 : vector<16x128xf32>
    %cst_27 = arith.constant dense<0.000000e+00> : vector<16xf32>
    %77 = vector.multi_reduction <add>, %76, %cst_27 [1] : vector<16x128xf32> to vector<16xf32>
    %78 = vector.shape_cast %77 : vector<16xf32> to vector<16x1xf32>
    %79 = arith.addf %70, %78 : vector<16x1xf32>
    %80 = arith.maximumf %63, %72 : vector<16x128xf32>
    %81 = vector.extract_strided_slice %59 {offsets = [0, 256], sizes = [16, 128], strides = [1, 1]} : vector<16x512xf32> to vector<16x128xf32>
    %82 = arith.addf %57, %81 : vector<16x128xf32>
    %cst_28 = arith.constant dense<0.000000e+00> : vector<16xf32>
    %83 = vector.multi_reduction <add>, %82, %cst_28 [1] : vector<16x128xf32> to vector<16xf32>
    %84 = vector.shape_cast %83 : vector<16xf32> to vector<16x1xf32>
    %85 = arith.addf %75, %84 : vector<16x1xf32>
    %86 = arith.mulf %82, %82 : vector<16x128xf32>
    %cst_29 = arith.constant dense<0.000000e+00> : vector<16xf32>
    %87 = vector.multi_reduction <add>, %86, %cst_29 [1] : vector<16x128xf32> to vector<16xf32>
    %88 = vector.shape_cast %87 : vector<16xf32> to vector<16x1xf32>
    %89 = arith.addf %79, %88 : vector<16x1xf32>
    %90 = arith.maximumf %80, %82 : vector<16x128xf32>
    %91 = vector.extract_strided_slice %59 {offsets = [0, 384], sizes = [16, 128], strides = [1, 1]} : vector<16x512xf32> to vector<16x128xf32>
    %92 = arith.addf %57, %91 : vector<16x128xf32>
    %cst_30 = arith.constant dense<0.000000e+00> : vector<16xf32>
    %93 = vector.multi_reduction <add>, %92, %cst_30 [1] : vector<16x128xf32> to vector<16xf32>
    %94 = vector.shape_cast %93 : vector<16xf32> to vector<16x1xf32>
    %95 = arith.addf %85, %94 : vector<16x1xf32>
    %96 = arith.mulf %92, %92 : vector<16x128xf32>
    %cst_31 = arith.constant dense<0.000000e+00> : vector<16xf32>
    %97 = vector.multi_reduction <add>, %96, %cst_31 [1] : vector<16x128xf32> to vector<16xf32>
    %98 = vector.shape_cast %97 : vector<16xf32> to vector<16x1xf32>
    %99 = arith.addf %89, %98 : vector<16x1xf32>
    %100 = arith.maximumf %90, %92 : vector<16x128xf32>
    %cst_32 = arith.constant 0.001953125 : f32
    %101 = vector.broadcast %cst_32 : f32 to vector<16x1xf32>
    %102 = arith.mulf %95, %101 : vector<16x1xf32>
    %cst_33 = arith.constant 0.001953125 : f32
    %103 = vector.broadcast %cst_33 : f32 to vector<16x1xf32>
    %104 = arith.mulf %99, %103 : vector<16x1xf32>
    %105 = arith.mulf %102, %102 : vector<16x1xf32>
    %106 = arith.subf %104, %105 : vector<16x1xf32>
    %cst_34 = arith.constant 0.000000e+00 : f32
    %107 = vector.broadcast %cst_34 : f32 to vector<16x1xf32>
    %108 = arith.maximumf %106, %107 : vector<16x1xf32>
    %109 = vector.broadcast %102 : vector<16x1xf32> to vector<16x128xf32>
    %110 = arith.subf %100, %109 : vector<16x128xf32>
    %cst_35 = arith.constant 9.99999974E-6 : f32
    %111 = vector.broadcast %cst_35 : f32 to vector<16x1xf32>
    %112 = arith.addf %108, %111 : vector<16x1xf32>
    %113 = math.rsqrt %112 : vector<16x1xf32>
    %114 = vector.broadcast %113 : vector<16x1xf32> to vector<16x128xf32>
    %115 = arith.mulf %110, %114 : vector<16x128xf32>
    %cst_36 = arith.constant 0.000000e+00 : f32
    %116 = vector.broadcast %cst_36 : f32 to vector<16x128xf32>
    %117 = arith.cmpf oge, %115, %116 : vector<16x128xf32>
    %cst_37 = arith.constant 2.000000e-01 : f32
    %118 = vector.broadcast %cst_37 : f32 to vector<16x128xf32>
    %119 = arith.mulf %118, %115 : vector<16x128xf32>
    %120 = arith.select %117, %115, %119 : vector<16x128xi1>, vector<16x128xf32>
    %121 = arith.truncf %120 : vector<16x128xf32> to vector<16x128xbf16>
    %c0_38 = arith.constant 0 : index
    %c0_39 = arith.constant 0 : index
    %c0_40 = arith.constant 0 : index
    %122 = vector.load %arg5[%c0_38, %c0_39, %c0_40] : memref<1x16x128xbf16, #tpu.memory_space<vmem>>, vector<1x16x128xbf16>
    %123 = vector.shape_cast %122 : vector<1x16x128xbf16> to vector<16x128xbf16>
    %124 = vector.shape_cast %121 : vector<16x128xbf16> to vector<1x16x128xbf16>
    tpu.vector_store %arg5[%c0_38, %c0_39, %c0_40], %124 {strides = array<i32>} : memref<1x16x128xbf16, #tpu.memory_space<vmem>>, vector<1x16x128xbf16>,
    return
  }
  func.func @transform_0(%arg0: i32) -> (i32, i32, i32) {
    %c0_i32 = arith.constant 0 : i32
    %c0_i32_0 = arith.constant 0 : i32
    %c0_i32_1 = arith.constant 0 : i32
    return %arg0, %c0_i32, %c0_i32_0 : i32, i32, i32
  }
  func.func @transform_1(%arg0: i32) -> (i32, i32, i32) {
    %c0_i32 = arith.constant 0 : i32
    %c0_i32_0 = arith.constant 0 : i32
    %c0_i32_1 = arith.constant 0 : i32
    return %arg0, %c0_i32, %c0_i32_0 : i32, i32, i32
  }
  func.func @transform_2(%arg0: i32) -> (i32, i32) {
    %c0_i32 = arith.constant 0 : i32
    %c0_i32_0 = arith.constant 0 : i32
    %c0_i32_1 = arith.constant 0 : i32
    return %c0_i32, %c0_i32_0 : i32, i32
  }
  func.func @transform_3(%arg0: i32) -> (i32, i32) {
    %c0_i32 = arith.constant 0 : i32
    %c0_i32_0 = arith.constant 0 : i32
    %c0_i32_1 = arith.constant 0 : i32
    return %c0_i32, %c0_i32_0 : i32, i32
  }
  func.func @transform_4(%arg0: i32) -> (i32, i32, i32) {
    %c0_i32 = arith.constant 0 : i32
    %c0_i32_0 = arith.constant 0 : i32
    %c0_i32_1 = arith.constant 0 : i32
    return %arg0, %c0_i32, %c0_i32_0 : i32, i32, i32
  }
}

module attributes {stable_mosaic.version = 11 : i64} {
  func.func @_edge_conv_kernel(%arg0: i32, %arg1: memref<1x16x128xbf16, #tpu.memory_space<vmem>>, %arg2: memref<1x4x128xi32, #tpu.memory_space<vmem>>, %arg3: memref<32x16xbf16, #tpu.memory_space<vmem>>, %arg4: memref<32x16xbf16, #tpu.memory_space<vmem>>, %arg5: memref<1x32x128xbf16, #tpu.memory_space<vmem>>) attributes {dimension_semantics = [#tpu.dimension_semantics<parallel>], iteration_bounds = array<i64: 2>, scalar_prefetch = 0 : i64, scratch_operands = 0 : i64, tpu.core_type = #tpu.core_type<tc>, window_params = [{transform_indices = @transform_0, window_bounds = array<i64: 1, 16, 128>}, {transform_indices = @transform_1, window_bounds = array<i64: 1, 4, 128>}, {pipeline_mode = #tpu.pipeline_mode<synchronous>, transform_indices = @transform_2, window_bounds = array<i64: 32, 16>}, {pipeline_mode = #tpu.pipeline_mode<synchronous>, transform_indices = @transform_3, window_bounds = array<i64: 32, 16>}, {transform_indices = @transform_4, window_bounds = array<i64: 1, 32, 128>}]} {
    %c0 = arith.constant 0 : index
    %c0_0 = arith.constant 0 : index
    %c0_1 = arith.constant 0 : index
    %0 = vector.load %arg1[%c0, %c0_0, %c0_1] : memref<1x16x128xbf16, #tpu.memory_space<vmem>>, vector<1x16x128xbf16>
    %1 = vector.shape_cast %0 : vector<1x16x128xbf16> to vector<16x128xbf16>
    %2 = arith.extf %1 : vector<16x128xbf16> to vector<16x128xf32>
    %c0_2 = arith.constant 0 : index
    %c0_3 = arith.constant 0 : index
    %c0_4 = arith.constant 0 : index
    %3 = vector.load %arg2[%c0_2, %c0_3, %c0_4] : memref<1x4x128xi32, #tpu.memory_space<vmem>>, vector<1x1x128xi32>
    %4 = vector.shape_cast %3 : vector<1x1x128xi32> to vector<1x128xi32>
    %5 = vector.shape_cast %4 : vector<1x128xi32> to vector<1x128xi32>
    %6 = vector.broadcast %5 : vector<1x128xi32> to vector<16x128xi32>
    %c0_i32 = arith.constant 0 : i32
    %7 = vector.broadcast %c0_i32 : i32 to vector<16x128xi32>
    %8 = arith.cmpi slt, %6, %7 : vector<16x128xi32>
    %c128_i32 = arith.constant 128 : i32
    %9 = vector.broadcast %c128_i32 : i32 to vector<16x128xi32>
    %10 = arith.addi %6, %9 : vector<16x128xi32>
    %11 = arith.select %8, %10, %6 : vector<16x128xi1>, vector<16x128xi32>
    %12 = vector.shape_cast %11 : vector<16x128xi32> to vector<16x128x1xi32>
    %13 = vector.shape_cast %12 : vector<16x128x1xi32> to vector<16x128xi32>
    %14 = tpu.dynamic_gather %2[%13] in [1] : vector<16x128xf32>, vector<16x128xi32> -> vector<16x128xf32>
    %15 = arith.truncf %14 : vector<16x128xf32> to vector<16x128xbf16>
    %c0_5 = arith.constant 0 : index
    %c1 = arith.constant 1 : index
    %c0_6 = arith.constant 0 : index
    %16 = vector.load %arg2[%c0_5, %c1, %c0_6] : memref<1x4x128xi32, #tpu.memory_space<vmem>>, vector<1x1x128xi32>
    %17 = vector.shape_cast %16 : vector<1x1x128xi32> to vector<1x128xi32>
    %18 = vector.shape_cast %17 : vector<1x128xi32> to vector<1x128xi32>
    %19 = vector.broadcast %18 : vector<1x128xi32> to vector<16x128xi32>
    %c0_i32_7 = arith.constant 0 : i32
    %20 = vector.broadcast %c0_i32_7 : i32 to vector<16x128xi32>
    %21 = arith.cmpi slt, %19, %20 : vector<16x128xi32>
    %c128_i32_8 = arith.constant 128 : i32
    %22 = vector.broadcast %c128_i32_8 : i32 to vector<16x128xi32>
    %23 = arith.addi %19, %22 : vector<16x128xi32>
    %24 = arith.select %21, %23, %19 : vector<16x128xi1>, vector<16x128xi32>
    %25 = vector.shape_cast %24 : vector<16x128xi32> to vector<16x128x1xi32>
    %26 = vector.shape_cast %25 : vector<16x128x1xi32> to vector<16x128xi32>
    %27 = tpu.dynamic_gather %2[%26] in [1] : vector<16x128xf32>, vector<16x128xi32> -> vector<16x128xf32>
    %28 = arith.truncf %27 : vector<16x128xf32> to vector<16x128xbf16>
    %c0_9 = arith.constant 0 : index
    %c2 = arith.constant 2 : index
    %c0_10 = arith.constant 0 : index
    %29 = vector.load %arg2[%c0_9, %c2, %c0_10] : memref<1x4x128xi32, #tpu.memory_space<vmem>>, vector<1x1x128xi32>
    %30 = vector.shape_cast %29 : vector<1x1x128xi32> to vector<1x128xi32>
    %31 = vector.shape_cast %30 : vector<1x128xi32> to vector<1x128xi32>
    %32 = vector.broadcast %31 : vector<1x128xi32> to vector<16x128xi32>
    %c0_i32_11 = arith.constant 0 : i32
    %33 = vector.broadcast %c0_i32_11 : i32 to vector<16x128xi32>
    %34 = arith.cmpi slt, %32, %33 : vector<16x128xi32>
    %c128_i32_12 = arith.constant 128 : i32
    %35 = vector.broadcast %c128_i32_12 : i32 to vector<16x128xi32>
    %36 = arith.addi %32, %35 : vector<16x128xi32>
    %37 = arith.select %34, %36, %32 : vector<16x128xi1>, vector<16x128xi32>
    %38 = vector.shape_cast %37 : vector<16x128xi32> to vector<16x128x1xi32>
    %39 = vector.shape_cast %38 : vector<16x128x1xi32> to vector<16x128xi32>
    %40 = tpu.dynamic_gather %2[%39] in [1] : vector<16x128xf32>, vector<16x128xi32> -> vector<16x128xf32>
    %41 = arith.truncf %40 : vector<16x128xf32> to vector<16x128xbf16>
    %c0_13 = arith.constant 0 : index
    %c3 = arith.constant 3 : index
    %c0_14 = arith.constant 0 : index
    %42 = vector.load %arg2[%c0_13, %c3, %c0_14] : memref<1x4x128xi32, #tpu.memory_space<vmem>>, vector<1x1x128xi32>
    %43 = vector.shape_cast %42 : vector<1x1x128xi32> to vector<1x128xi32>
    %44 = vector.shape_cast %43 : vector<1x128xi32> to vector<1x128xi32>
    %45 = vector.broadcast %44 : vector<1x128xi32> to vector<16x128xi32>
    %c0_i32_15 = arith.constant 0 : i32
    %46 = vector.broadcast %c0_i32_15 : i32 to vector<16x128xi32>
    %47 = arith.cmpi slt, %45, %46 : vector<16x128xi32>
    %c128_i32_16 = arith.constant 128 : i32
    %48 = vector.broadcast %c128_i32_16 : i32 to vector<16x128xi32>
    %49 = arith.addi %45, %48 : vector<16x128xi32>
    %50 = arith.select %47, %49, %45 : vector<16x128xi1>, vector<16x128xi32>
    %51 = vector.shape_cast %50 : vector<16x128xi32> to vector<16x128x1xi32>
    %52 = vector.shape_cast %51 : vector<16x128x1xi32> to vector<16x128xi32>
    %53 = tpu.dynamic_gather %2[%52] in [1] : vector<16x128xf32>, vector<16x128xi32> -> vector<16x128xf32>
    %54 = arith.truncf %53 : vector<16x128xf32> to vector<16x128xbf16>
    %55 = tpu.concatenate %15, %28, %41, %54 in 1 : vector<16x128xbf16>, vector<16x128xbf16>, vector<16x128xbf16>, vector<16x128xbf16> -> vector<16x512xbf16>
    %c0_17 = arith.constant 0 : index
    %c0_18 = arith.constant 0 : index
    %56 = vector.load %arg3[%c0_17, %c0_18] : memref<32x16xbf16, #tpu.memory_space<vmem>>, vector<32x16xbf16>
    %cst = arith.constant dense<0.000000e+00> : vector<32x128xf32>
    %57 = tpu.matmul %56, %1, %cst {dimension_numbers = #tpu.dot_dimension_numbers<[1], [0], [0], [1], [0, 0, 1, 1], [], []>} : vector<32x16xbf16>, vector<16x128xbf16>, vector<32x128xf32> -> vector<32x128xf32>
    %c0_19 = arith.constant 0 : index
    %c0_20 = arith.constant 0 : index
    %58 = vector.load %arg4[%c0_19, %c0_20] : memref<32x16xbf16, #tpu.memory_space<vmem>>, vector<32x16xbf16>
    %cst_21 = arith.constant dense<0.000000e+00> : vector<32x512xf32>
    %59 = tpu.matmul %58, %55, %cst_21 {dimension_numbers = #tpu.dot_dimension_numbers<[1], [0], [0], [1], [0, 0, 1, 1], [], []>} : vector<32x16xbf16>, vector<16x512xbf16>, vector<32x512xf32> -> vector<32x512xf32>
    %cst_22 = arith.constant 0.000000e+00 : f32
    %60 = vector.broadcast %cst_22 : f32 to vector<32x1xf32>
    %cst_23 = arith.constant 0.000000e+00 : f32
    %61 = vector.broadcast %cst_23 : f32 to vector<32x1xf32>
    %62 = vector.extract_strided_slice %59 {offsets = [0, 0], sizes = [32, 128], strides = [1, 1]} : vector<32x512xf32> to vector<32x128xf32>
    %63 = arith.addf %57, %62 : vector<32x128xf32>
    %cst_24 = arith.constant dense<0.000000e+00> : vector<32xf32>
    %64 = vector.multi_reduction <add>, %63, %cst_24 [1] : vector<32x128xf32> to vector<32xf32>
    %65 = vector.shape_cast %64 : vector<32xf32> to vector<32x1xf32>
    %66 = arith.addf %60, %65 : vector<32x1xf32>
    %67 = arith.mulf %63, %63 : vector<32x128xf32>
    %cst_25 = arith.constant dense<0.000000e+00> : vector<32xf32>
    %68 = vector.multi_reduction <add>, %67, %cst_25 [1] : vector<32x128xf32> to vector<32xf32>
    %69 = vector.shape_cast %68 : vector<32xf32> to vector<32x1xf32>
    %70 = arith.addf %61, %69 : vector<32x1xf32>
    %71 = vector.extract_strided_slice %59 {offsets = [0, 128], sizes = [32, 128], strides = [1, 1]} : vector<32x512xf32> to vector<32x128xf32>
    %72 = arith.addf %57, %71 : vector<32x128xf32>
    %cst_26 = arith.constant dense<0.000000e+00> : vector<32xf32>
    %73 = vector.multi_reduction <add>, %72, %cst_26 [1] : vector<32x128xf32> to vector<32xf32>
    %74 = vector.shape_cast %73 : vector<32xf32> to vector<32x1xf32>
    %75 = arith.addf %66, %74 : vector<32x1xf32>
    %76 = arith.mulf %72, %72 : vector<32x128xf32>
    %cst_27 = arith.constant dense<0.000000e+00> : vector<32xf32>
    %77 = vector.multi_reduction <add>, %76, %cst_27 [1] : vector<32x128xf32> to vector<32xf32>
    %78 = vector.shape_cast %77 : vector<32xf32> to vector<32x1xf32>
    %79 = arith.addf %70, %78 : vector<32x1xf32>
    %80 = arith.maximumf %63, %72 : vector<32x128xf32>
    %81 = vector.extract_strided_slice %59 {offsets = [0, 256], sizes = [32, 128], strides = [1, 1]} : vector<32x512xf32> to vector<32x128xf32>
    %82 = arith.addf %57, %81 : vector<32x128xf32>
    %cst_28 = arith.constant dense<0.000000e+00> : vector<32xf32>
    %83 = vector.multi_reduction <add>, %82, %cst_28 [1] : vector<32x128xf32> to vector<32xf32>
    %84 = vector.shape_cast %83 : vector<32xf32> to vector<32x1xf32>
    %85 = arith.addf %75, %84 : vector<32x1xf32>
    %86 = arith.mulf %82, %82 : vector<32x128xf32>
    %cst_29 = arith.constant dense<0.000000e+00> : vector<32xf32>
    %87 = vector.multi_reduction <add>, %86, %cst_29 [1] : vector<32x128xf32> to vector<32xf32>
    %88 = vector.shape_cast %87 : vector<32xf32> to vector<32x1xf32>
    %89 = arith.addf %79, %88 : vector<32x1xf32>
    %90 = arith.maximumf %80, %82 : vector<32x128xf32>
    %91 = vector.extract_strided_slice %59 {offsets = [0, 384], sizes = [32, 128], strides = [1, 1]} : vector<32x512xf32> to vector<32x128xf32>
    %92 = arith.addf %57, %91 : vector<32x128xf32>
    %cst_30 = arith.constant dense<0.000000e+00> : vector<32xf32>
    %93 = vector.multi_reduction <add>, %92, %cst_30 [1] : vector<32x128xf32> to vector<32xf32>
    %94 = vector.shape_cast %93 : vector<32xf32> to vector<32x1xf32>
    %95 = arith.addf %85, %94 : vector<32x1xf32>
    %96 = arith.mulf %92, %92 : vector<32x128xf32>
    %cst_31 = arith.constant dense<0.000000e+00> : vector<32xf32>
    %97 = vector.multi_reduction <add>, %96, %cst_31 [1] : vector<32x128xf32> to vector<32xf32>
    %98 = vector.shape_cast %97 : vector<32xf32> to vector<32x1xf32>
    %99 = arith.addf %89, %98 : vector<32x1xf32>
    %100 = arith.maximumf %90, %92 : vector<32x128xf32>
    %cst_32 = arith.constant 0.001953125 : f32
    %101 = vector.broadcast %cst_32 : f32 to vector<32x1xf32>
    %102 = arith.mulf %95, %101 : vector<32x1xf32>
    %cst_33 = arith.constant 0.001953125 : f32
    %103 = vector.broadcast %cst_33 : f32 to vector<32x1xf32>
    %104 = arith.mulf %99, %103 : vector<32x1xf32>
    %105 = arith.mulf %102, %102 : vector<32x1xf32>
    %106 = arith.subf %104, %105 : vector<32x1xf32>
    %cst_34 = arith.constant 0.000000e+00 : f32
    %107 = vector.broadcast %cst_34 : f32 to vector<32x1xf32>
    %108 = arith.maximumf %106, %107 : vector<32x1xf32>
    %109 = vector.broadcast %102 : vector<32x1xf32> to vector<32x128xf32>
    %110 = arith.subf %100, %109 : vector<32x128xf32>
    %cst_35 = arith.constant 9.99999974E-6 : f32
    %111 = vector.broadcast %cst_35 : f32 to vector<32x1xf32>
    %112 = arith.addf %108, %111 : vector<32x1xf32>
    %113 = math.rsqrt %112 : vector<32x1xf32>
    %114 = vector.broadcast %113 : vector<32x1xf32> to vector<32x128xf32>
    %115 = arith.mulf %110, %114 : vector<32x128xf32>
    %cst_36 = arith.constant 0.000000e+00 : f32
    %116 = vector.broadcast %cst_36 : f32 to vector<32x128xf32>
    %117 = arith.cmpf oge, %115, %116 : vector<32x128xf32>
    %cst_37 = arith.constant 2.000000e-01 : f32
    %118 = vector.broadcast %cst_37 : f32 to vector<32x128xf32>
    %119 = arith.mulf %118, %115 : vector<32x128xf32>
    %120 = arith.select %117, %115, %119 : vector<32x128xi1>, vector<32x128xf32>
    %121 = arith.truncf %120 : vector<32x128xf32> to vector<32x128xbf16>
    %c0_38 = arith.constant 0 : index
    %c0_39 = arith.constant 0 : index
    %c0_40 = arith.constant 0 : index
    %122 = vector.load %arg5[%c0_38, %c0_39, %c0_40] : memref<1x32x128xbf16, #tpu.memory_space<vmem>>, vector<1x32x128xbf16>
    %123 = vector.shape_cast %122 : vector<1x32x128xbf16> to vector<32x128xbf16>
    %124 = vector.shape_cast %121 : vector<32x128xbf16> to vector<1x32x128xbf16>
    tpu.vector_store %arg5[%c0_38, %c0_39, %c0_40], %124 {strides = array<i32>} : memref<1x32x128xbf16, #tpu.memory_space<vmem>>, vector<1x32x128xbf16>,
    return
  }
  func.func @transform_0(%arg0: i32) -> (i32, i32, i32) {
    %c0_i32 = arith.constant 0 : i32
    %c0_i32_0 = arith.constant 0 : i32
    %c0_i32_1 = arith.constant 0 : i32
    return %arg0, %c0_i32, %c0_i32_0 : i32, i32, i32
  }
  func.func @transform_1(%arg0: i32) -> (i32, i32, i32) {
    %c0_i32 = arith.constant 0 : i32
    %c0_i32_0 = arith.constant 0 : i32
    %c0_i32_1 = arith.constant 0 : i32
    return %arg0, %c0_i32, %c0_i32_0 : i32, i32, i32
  }
  func.func @transform_2(%arg0: i32) -> (i32, i32) {
    %c0_i32 = arith.constant 0 : i32
    %c0_i32_0 = arith.constant 0 : i32
    %c0_i32_1 = arith.constant 0 : i32
    return %c0_i32, %c0_i32_0 : i32, i32
  }
  func.func @transform_3(%arg0: i32) -> (i32, i32) {
    %c0_i32 = arith.constant 0 : i32
    %c0_i32_0 = arith.constant 0 : i32
    %c0_i32_1 = arith.constant 0 : i32
    return %c0_i32, %c0_i32_0 : i32, i32
  }
  func.func @transform_4(%arg0: i32) -> (i32, i32, i32) {
    %c0_i32 = arith.constant 0 : i32
    %c0_i32_0 = arith.constant 0 : i32
    %c0_i32_1 = arith.constant 0 : i32
    return %arg0, %c0_i32, %c0_i32_0 : i32, i32, i32
  }
}

module attributes {stable_mosaic.version = 11 : i64} {
  func.func @_concat_conv_kernel(%arg0: i32, %arg1: memref<1x16x128xbf16, #tpu.memory_space<vmem>>, %arg2: memref<1x16x128xbf16, #tpu.memory_space<vmem>>, %arg3: memref<1x32x128xbf16, #tpu.memory_space<vmem>>, %arg4: memref<16x64xbf16, #tpu.memory_space<vmem>>, %arg5: memref<1x16x128xf32, #tpu.memory_space<vmem>>) attributes {dimension_semantics = [#tpu.dimension_semantics<parallel>], iteration_bounds = array<i64: 2>, scalar_prefetch = 0 : i64, scratch_operands = 0 : i64, tpu.core_type = #tpu.core_type<tc>, window_params = [{transform_indices = @transform_0, window_bounds = array<i64: 1, 16, 128>}, {transform_indices = @transform_1, window_bounds = array<i64: 1, 16, 128>}, {transform_indices = @transform_2, window_bounds = array<i64: 1, 32, 128>}, {pipeline_mode = #tpu.pipeline_mode<synchronous>, transform_indices = @transform_3, window_bounds = array<i64: 16, 64>}, {transform_indices = @transform_4, window_bounds = array<i64: 1, 16, 128>}]} {
    %c0 = arith.constant 0 : index
    %c0_0 = arith.constant 0 : index
    %c0_1 = arith.constant 0 : index
    %0 = vector.load %arg1[%c0, %c0_0, %c0_1] : memref<1x16x128xbf16, #tpu.memory_space<vmem>>, vector<1x16x128xbf16>
    %1 = vector.shape_cast %0 : vector<1x16x128xbf16> to vector<16x128xbf16>
    %c0_2 = arith.constant 0 : index
    %c0_3 = arith.constant 0 : index
    %c0_4 = arith.constant 0 : index
    %2 = vector.load %arg2[%c0_2, %c0_3, %c0_4] : memref<1x16x128xbf16, #tpu.memory_space<vmem>>, vector<1x16x128xbf16>
    %3 = vector.shape_cast %2 : vector<1x16x128xbf16> to vector<16x128xbf16>
    %c0_5 = arith.constant 0 : index
    %c0_6 = arith.constant 0 : index
    %c0_7 = arith.constant 0 : index
    %4 = vector.load %arg3[%c0_5, %c0_6, %c0_7] : memref<1x32x128xbf16, #tpu.memory_space<vmem>>, vector<1x32x128xbf16>
    %5 = vector.shape_cast %4 : vector<1x32x128xbf16> to vector<32x128xbf16>
    %6 = tpu.concatenate %1, %3, %5 in 0 : vector<16x128xbf16>, vector<16x128xbf16>, vector<32x128xbf16> -> vector<64x128xbf16>
    %c0_8 = arith.constant 0 : index
    %c0_9 = arith.constant 0 : index
    %7 = vector.load %arg4[%c0_8, %c0_9] : memref<16x64xbf16, #tpu.memory_space<vmem>>, vector<16x64xbf16>
    %cst = arith.constant dense<0.000000e+00> : vector<16x128xf32>
    %8 = tpu.matmul %7, %6, %cst {dimension_numbers = #tpu.dot_dimension_numbers<[1], [0], [0], [1], [0, 0, 1, 1], [], []>} : vector<16x64xbf16>, vector<64x128xbf16>, vector<16x128xf32> -> vector<16x128xf32>
    %cst_10 = arith.constant dense<0.000000e+00> : vector<16xf32>
    %9 = vector.multi_reduction <add>, %8, %cst_10 [1] : vector<16x128xf32> to vector<16xf32>
    %10 = vector.shape_cast %9 : vector<16xf32> to vector<16x1xf32>
    %cst_11 = arith.constant 7.812500e-03 : f32
    %11 = vector.broadcast %cst_11 : f32 to vector<16x1xf32>
    %12 = arith.mulf %10, %11 : vector<16x1xf32>
    %13 = arith.mulf %8, %8 : vector<16x128xf32>
    %cst_12 = arith.constant dense<0.000000e+00> : vector<16xf32>
    %14 = vector.multi_reduction <add>, %13, %cst_12 [1] : vector<16x128xf32> to vector<16xf32>
    %15 = vector.shape_cast %14 : vector<16xf32> to vector<16x1xf32>
    %cst_13 = arith.constant 7.812500e-03 : f32
    %16 = vector.broadcast %cst_13 : f32 to vector<16x1xf32>
    %17 = arith.mulf %15, %16 : vector<16x1xf32>
    %18 = arith.mulf %12, %12 : vector<16x1xf32>
    %19 = arith.subf %17, %18 : vector<16x1xf32>
    %cst_14 = arith.constant 0.000000e+00 : f32
    %20 = vector.broadcast %cst_14 : f32 to vector<16x1xf32>
    %21 = arith.maximumf %19, %20 : vector<16x1xf32>
    %22 = vector.broadcast %12 : vector<16x1xf32> to vector<16x128xf32>
    %23 = arith.subf %8, %22 : vector<16x128xf32>
    %cst_15 = arith.constant 9.99999974E-6 : f32
    %24 = vector.broadcast %cst_15 : f32 to vector<16x1xf32>
    %25 = arith.addf %21, %24 : vector<16x1xf32>
    %26 = math.rsqrt %25 : vector<16x1xf32>
    %27 = vector.broadcast %26 : vector<16x1xf32> to vector<16x128xf32>
    %28 = arith.mulf %23, %27 : vector<16x128xf32>
    %cst_16 = arith.constant 0.000000e+00 : f32
    %29 = vector.broadcast %cst_16 : f32 to vector<16x128xf32>
    %30 = arith.cmpf oge, %28, %29 : vector<16x128xf32>
    %cst_17 = arith.constant 2.000000e-01 : f32
    %31 = vector.broadcast %cst_17 : f32 to vector<16x128xf32>
    %32 = arith.mulf %31, %28 : vector<16x128xf32>
    %33 = arith.select %30, %28, %32 : vector<16x128xi1>, vector<16x128xf32>
    %c0_18 = arith.constant 0 : index
    %c0_19 = arith.constant 0 : index
    %c0_20 = arith.constant 0 : index
    %34 = vector.load %arg5[%c0_18, %c0_19, %c0_20] : memref<1x16x128xf32, #tpu.memory_space<vmem>>, vector<1x16x128xf32>
    %35 = vector.shape_cast %34 : vector<1x16x128xf32> to vector<16x128xf32>
    %36 = vector.shape_cast %33 : vector<16x128xf32> to vector<1x16x128xf32>
    tpu.vector_store %arg5[%c0_18, %c0_19, %c0_20], %36 {strides = array<i32>} : memref<1x16x128xf32, #tpu.memory_space<vmem>>, vector<1x16x128xf32>,
    return
  }
  func.func @transform_0(%arg0: i32) -> (i32, i32, i32) {
    %c0_i32 = arith.constant 0 : i32
    %c0_i32_0 = arith.constant 0 : i32
    %c0_i32_1 = arith.constant 0 : i32
    return %arg0, %c0_i32, %c0_i32_0 : i32, i32, i32
  }
  func.func @transform_1(%arg0: i32) -> (i32, i32, i32) {
    %c0_i32 = arith.constant 0 : i32
    %c0_i32_0 = arith.constant 0 : i32
    %c0_i32_1 = arith.constant 0 : i32
    return %arg0, %c0_i32, %c0_i32_0 : i32, i32, i32
  }
  func.func @transform_2(%arg0: i32) -> (i32, i32, i32) {
    %c0_i32 = arith.constant 0 : i32
    %c0_i32_0 = arith.constant 0 : i32
    %c0_i32_1 = arith.constant 0 : i32
    return %arg0, %c0_i32, %c0_i32_0 : i32, i32, i32
  }
  func.func @transform_3(%arg0: i32) -> (i32, i32) {
    %c0_i32 = arith.constant 0 : i32
    %c0_i32_0 = arith.constant 0 : i32
    %c0_i32_1 = arith.constant 0 : i32
    return %c0_i32, %c0_i32_0 : i32, i32
  }
  func.func @transform_4(%arg0: i32) -> (i32, i32, i32) {
    %c0_i32 = arith.constant 0 : i32
    %c0_i32_0 = arith.constant 0 : i32
    %c0_i32_1 = arith.constant 0 : i32
    return %arg0, %c0_i32, %c0_i32_0 : i32, i32, i32
  }
}

</mosaic_0001>

<llo_original>
// kernel: self_attention_forward.5
$region0: #{self_attention_forward.5}
  #allocation0 [shape = 'u32[]', space=smem, size = 0x4, offset = 0x4, fixed_abs, tag = 'smem constant byte address 0x4 - core index']
  #allocation1 [shape = 'u32[144,128]{1,0:T(1,128)}', space=vmem, size = 0x12000, scoped, tag = 'internal scratch']
  %s0 = inlined_call_operand.vmem [shape: bf16[2,16,128], index: 0, kind: input, shape index: {}]
  %s1 = inlined_call_operand.vmem [shape: s32[2,4,128], index: 1, kind: input, shape index: {}]
  %s2 = inlined_call_operand.vmem [shape: bf16[16,16], index: 2, kind: input, shape index: {}]
  %s3 = inlined_call_operand.vmem [shape: bf16[16,16], index: 3, kind: input, shape index: {}]
  %s4 = inlined_call_operand.vmem [shape: bf16[2,16,128], index: 4, kind: output, shape index: {}]
  %s5 = sld [smem:[#allocation0]]
  $region49: #{self_attention_forward.5} parent=0
    _
  %s7 = ssub.s32 1, %s5
  %s8 = scalar_select 0, %s7, %s5
  loop: start=0, step=1, limit=4
  $region2: #{self_attention_forward.5} parent=0 // loop_pre_header
    _
  $region3: #{self_attention_forward.5} parent=0 // loop_header
    %s10 = sphi 0, %s14
    %p11 = scmp.ge.s32.totalorder %s10, 4
    %s20 = sphi 0, %s22
    %s23 = sphi 0, %s20
    %s24 = sphi 0, %s23
    %s40 = sphi 0, %s24
    %s46 = sphi 0, %s48
    %s49 = sphi 0, %s46
    %s50 = sphi 0, %s49
    %s66 = sphi 0, %s50
    %s70 = sphi 0, %s70
    %s72 = sphi 0, %s70
    %s73 = sphi 0, %s72
    %s87 = sphi 0, %s73
    %s91 = sphi 0, %s91
    %s93 = sphi 0, %s91
    %s94 = sphi 0, %s93
    %s108 = sphi 0, %s94
    %s114 = sphi 0, %s116
    %s117 = sphi 0, %s114
    %s118 = sphi 0, %s117
    %s134 = sphi 0, %s118
  $region4: #{self_attention_forward.5} parent=0 // loop_header_branch
    %13 = sbr.rel (%p11) target = $region8
  $region5: #{self_attention_forward.5} parent=0 // loop_body
    %s15 = ssub.s32 %s10, 1
    %s16 = ssub.s32 %s10, 2
    %s17 = sadd.s32 %s10, 1
    %s18 = ssub.s32 %s10, %s17
    %p19 = scmp.eq.s32.totalorder %s18, 0
    %s21 = sadd.s32 %s20, 1
    %s22 = scalar_select %p19, %s20, %s21
    %p25 = pneg %p19
    %p26 = scmp.eq.s32.totalorder %s10, 1
    %p27 = por %p25, %p26
    %p28 = scmp.ne.s32.totalorder %s20, %s23
    %p29 = scmp.eq.s32.totalorder %s10, 0
    %p30 = por %p28, %p29
    %p31 = scmp.ne.s32.totalorder %s20, %s23
    %p32 = scmp.eq.s32.totalorder %s15, 1
    %p33 = por %p31, %p32
    %p34 = scmp.ne.s32.totalorder %s23, %s24
    %p35 = scmp.eq.s32.totalorder %s15, 0
    %p36 = por %p34, %p35
    %p37 = scmp.ne.s32.totalorder %s23, %s24
    %p38 = scmp.eq.s32.totalorder %s16, 1
    %p39 = por %p37, %p38
    %p41 = scmp.ne.s32.totalorder %s24, %s40
    %p42 = scmp.eq.s32.totalorder %s16, 0
    %p43 = por %p41, %p42
    %s44 = ssub.s32 %s10, %s17
    %p45 = scmp.eq.s32.totalorder %s44, 0
    %s47 = sadd.s32 %s46, 1
    %s48 = scalar_select %p45, %s46, %s47
    %p51 = pneg %p45
    %p52 = scmp.eq.s32.totalorder %s10, 1
    %p53 = por %p51, %p52
    %p54 = scmp.ne.s32.totalorder %s46, %s49
    %p55 = scmp.eq.s32.totalorder %s10, 0
    %p56 = por %p54, %p55
    %p57 = scmp.ne.s32.totalorder %s46, %s49
    %p58 = scmp.eq.s32.totalorder %s15, 1
    %p59 = por %p57, %p58
    %p60 = scmp.ne.s32.totalorder %s49, %s50
    %p61 = scmp.eq.s32.totalorder %s15, 0
    %p62 = por %p60, %p61
    %p63 = scmp.ne.s32.totalorder %s49, %s50
    %p64 = scmp.eq.s32.totalorder %s16, 1
    %p65 = por %p63, %p64
    %p67 = scmp.ne.s32.totalorder %s50, %s66
    %p68 = scmp.eq.s32.totalorder %s16, 0
    %p69 = por %p67, %p68
    %s71 = sadd.s32 %s70, 1
    %p74 = scmp.eq.s32.totalorder %s10, 1
    %p75 = scmp.ne.s32.totalorder %s70, %s72
    %p76 = scmp.eq.s32.totalorder %s10, 0
    %p77 = por %p75, %p76
    %p78 = scmp.ne.s32.totalorder %s70, %s72
    %p79 = scmp.eq.s32.totalorder %s15, 1
    %p80 = por %p78, %p79
    %p81 = scmp.ne.s32.totalorder %s72, %s73
    %p82 = scmp.eq.s32.totalorder %s15, 0
    %p83 = por %p81, %p82
    %p84 = scmp.ne.s32.totalorder %s72, %s73
    %p85 = scmp.eq.s32.totalorder %s16, 1
    %p86 = por %p84, %p85
    %p88 = scmp.ne.s32.totalorder %s73, %s87
    %p89 = scmp.eq.s32.totalorder %s16, 0
    %p90 = por %p88, %p89
    %s92 = sadd.s32 %s91, 1
    %p95 = scmp.eq.s32.totalorder %s10, 1
    %p96 = scmp.ne.s32.totalorder %s91, %s93
    %p97 = scmp.eq.s32.totalorder %s10, 0
    %p98 = por %p96, %p97
    %p99 = scmp.ne.s32.totalorder %s91, %s93
    %p100 = scmp.eq.s32.totalorder %s15, 1
    %p101 = por %p99, %p100
    %p102 = scmp.ne.s32.totalorder %s93, %s94
    %p103 = scmp.eq.s32.totalorder %s15, 0
    %p104 = por %p102, %p103
    %p105 = scmp.ne.s32.totalorder %s93, %s94
    %p106 = scmp.eq.s32.totalorder %s16, 1
    %p107 = por %p105, %p106
    %p109 = scmp.ne.s32.totalorder %s94, %s108
    %p110 = scmp.eq.s32.totalorder %s16, 0
    %p111 = por %p109, %p110
    %s112 = ssub.s32 %s10, %s17
    %p113 = scmp.eq.s32.totalorder %s112, 0
    %s115 = sadd.s32 %s114, 1
    %s116 = scalar_select %p113, %s114, %s115
    %p119 = pneg %p113
    %p120 = scmp.eq.s32.totalorder %s10, 1
    %p121 = por %p119, %p120
    %p122 = scmp.ne.s32.totalorder %s114, %s117
    %p123 = scmp.eq.s32.totalorder %s10, 0
    %p124 = por %p122, %p123
    %p125 = scmp.ne.s32.totalorder %s114, %s117
    %p126 = scmp.eq.s32.totalorder %s15, 1
    %p127 = por %p125, %p126
    %p128 = scmp.ne.s32.totalorder %s117, %s118
    %p129 = scmp.eq.s32.totalorder %s15, 0
    %p130 = por %p128, %p129
    %p131 = scmp.ne.s32.totalorder %s117, %s118
    %p132 = scmp.eq.s32.totalorder %s16, 1
    %p133 = por %p131, %p132
    %p135 = scmp.ne.s32.totalorder %s118, %s134
    %p136 = scmp.eq.s32.totalorder %s16, 0
    %p137 = por %p135, %p136
    %p138 = scmp.le.s32.totalorder 1, %s10
    %p139 = scmp.lt.s32.totalorder %s10, 3
    %p140 = pnand %p138, %p139
    %p141 = pneg %p140
    // Predicated region
    $region9: #{self_attention_forward.5} parent=5 // pred_check
      _
    $region10: #{self_attention_forward.5} parent=5 // pred_check_branch
      %143 = sbr.rel (%p140) target = $region12
    $region11: #{self_attention_forward.5} parent=5 // pred_region
      %s144 = ssub.s32 %s10, 1
      // Predicated region
      $region13: #{self_attention_forward.5} parent=11 // pred_check
        %p145 = pneg %p83
      $region14: #{self_attention_forward.5} parent=11 // pred_check_branch
        %147 = sbr.rel (%p145) target = $region16
      $region15: #{self_attention_forward.5} parent=11 // pred_region
        _
      $region16: #{self_attention_forward.5} parent=11 // pred_fallthru
        _
      // Predicated region
      $region17: #{self_attention_forward.5} parent=11 // pred_check
        %p148 = pneg %p104
      $region18: #{self_attention_forward.5} parent=11 // pred_check_branch
        %150 = sbr.rel (%p148) target = $region20
      $region19: #{self_attention_forward.5} parent=11 // pred_region
        _
      $region20: #{self_attention_forward.5} parent=11 // pred_fallthru
        _
    $region12: #{self_attention_forward.5} parent=5 // pred_fallthru
      _
    %p151 = scmp.lt.s32.totalorder %s10, 2
    // Predicated region
    $region21: #{self_attention_forward.5} parent=5 // pred_check
      %p152 = pneg %p151
    $region22: #{self_attention_forward.5} parent=5 // pred_check_branch
      %154 = sbr.rel (%p152) target = $region24
    $region23: #{self_attention_forward.5} parent=5 // pred_region
      // Predicated region
      $region25: #{self_attention_forward.5} parent=23 // pred_check
        %p155 = pneg %p30
      $region26: #{self_attention_forward.5} parent=23 // pred_check_branch
        %157 = sbr.rel (%p155) target = $region28
      $region27: #{self_attention_forward.5} parent=23 // pred_region
        %p158 = scmp.lt.s32.totalorder %s10, 1
        %s159 = scalar_select %p158, %s10, 1
        %s160 = smul.addr %s159, 2
        %s161 = smul.addr %s160, 4
        %s162 = scalar_lea.vmem %s0, %s161
      $region28: #{self_attention_forward.5} parent=23 // pred_fallthru
        _
      // Predicated region
      $region29: #{self_attention_forward.5} parent=23 // pred_check
        %p163 = pneg %p56
      $region30: #{self_attention_forward.5} parent=23 // pred_check_branch
        %165 = sbr.rel (%p163) target = $region32
      $region31: #{self_attention_forward.5} parent=23 // pred_region
        %p166 = scmp.lt.s32.totalorder %s10, 1
        %s167 = scalar_select %p166, %s10, 1
        %s168 = smul.addr %s167, 4
        %s169 = scalar_lea.vmem %s1, %s168
      $region32: #{self_attention_forward.5} parent=23 // pred_fallthru
        _
    $region24: #{self_attention_forward.5} parent=5 // pred_fallthru
      _
    %p170 = scmp.le.s32.totalorder 1, %s10
    %p171 = scmp.lt.s32.totalorder %s10, 3
    %p172 = pnand %p170, %p171
    %p173 = pneg %p172
    // Predicated region
    $region33: #{self_attention_forward.5} parent=5 // pred_check
      _
    $region34: #{self_attention_forward.5} parent=5 // pred_check_branch
      %175 = sbr.rel (%p172) target = $region36
    $region35: #{self_attention_forward.5} parent=5 // pred_region
      %s176 = ssub.s32 %s10, 1
      %p177 = scmp.lt.s32.totalorder %s15, 1
      %s178 = scalar_select %p177, %s15, 1
      %s179 = smul.addr %s178, 2
      %s180 = smul.addr %s179, 4
      %s181 = scalar_lea.vmem %s0, %s180
      %p182 = pneg %p36
      %p183 = pneg %p33
      %p184 = scmp.lt.s32.totalorder %s15, 1
      %s185 = scalar_select %p184, %s15, 1
      %s186 = smul.addr %s185, 4
      %s187 = scalar_lea.vmem %s1, %s186
      %p188 = pneg %p62
      %p189 = pneg %p59
      %p190 = pneg %p83
      %p191 = pneg %p80
      %p192 = pneg %p104
      %p193 = pneg %p101
      %p194 = pneg %p130
      %p195 = pneg %p127
      %p196 = scmp.lt.s32.totalorder %s15, 1
      %s197 = scalar_select %p196, %s15, 1
      %s198 = smul.addr %s197, 2
      %s199 = smul.addr %s198, 4
      %s200 = scalar_lea.vmem %s4, %s199
      %p201 = scmp.lt.s32.totalorder %s15, 1
      %s202 = scalar_select %p201, %s15, 1
      %s203 = smul.addr %s202, 2
      %s204 = smul.addr %s203, 4
      %s205 = scalar_lea.vmem %s0, %s204
      %p206 = scmp.lt.s32.totalorder %s15, 1
      %s207 = scalar_select %p206, %s15, 1
      %s208 = smul.addr %s207, 4
      %s209 = scalar_lea.vmem %s1, %s208
      %p210 = scmp.lt.s32.totalorder %s15, 1
      %s211 = scalar_select %p210, %s15, 1
      %s212 = smul.addr %s211, 2
      %s213 = smul.addr %s212, 4
      %s214 = scalar_lea.vmem %s4, %s213
      %v216 = vld [vmem:[%s205] sm:$0xf]
      %v217 = vld [vmem:[%s205 + $0x4] sm:$0xf]
      %v218 = vunpack.c.l.bf16 %v216
      %v219 = vunpack.c.l.bf16 %v217
      %v220 = vld [vmem:[%s209] sm:$0x1]
      %v221 = vlaneseq
      %v222 = vshrl.u32 %v221, 7
      %v223 = vsub.s32 0, %v222
      %v224 = vrot.slane %v220, %v223
      %vm225 = vcmp.lt.s32.totalorder %v224, 0
      %v226 = vadd.s32 %v224, 128
      %v227 = vsel %vm225, %v226, %v224
      %228 = vset.pattern.permute.xlu0 %v227
      %229 = vperm.xlu0 %228, %v218
      %v230 = vpop.permute.xlu0 %229
      %231 = vset.pattern.permute.xlu0 %v227
      %232 = vperm.xlu0 %231, %v219
      %v233 = vpop.permute.xlu0 %232
      %v234 = vpack.c.bf16 %v233, %v230
      %v235 = vld [vmem:[%s209 + $0x1] sm:$0x1]
      %v236 = vlaneseq
      %v237 = vshrl.u32 %v236, 7
      %v238 = vsub.s32 0, %v237
      %v239 = vrot.slane %v235, %v238
      %vm240 = vcmp.lt.s32.totalorder %v239, 0
      %v241 = vadd.s32 %v239, 128
      %v242 = vsel %vm240, %v241, %v239
      %243 = vset.pattern.permute.xlu0 %v242
      %244 = vperm.xlu0 %243, %v218
      %v245 = vpop.permute.xlu0 %244
      %246 = vset.pattern.permute.xlu0 %v242
      %247 = vperm.xlu0 %246, %v219
      %v248 = vpop.permute.xlu0 %247
      %v249 = vpack.c.bf16 %v248, %v245
      %v250 = vld [vmem:[%s209 + $0x2] sm:$0x1]
      %v251 = vlaneseq
      %v252 = vshrl.u32 %v251, 7
      %v253 = vsub.s32 0, %v252
      %v254 = vrot.slane %v250, %v253
      %vm255 = vcmp.lt.s32.totalorder %v254, 0
      %v256 = vadd.s32 %v254, 128
      %v257 = vsel %vm255, %v256, %v254
      %258 = vset.pattern.permute.xlu0 %v257
      %259 = vperm.xlu0 %258, %v218
      %v260 = vpop.permute.xlu0 %259
      %261 = vset.pattern.permute.xlu0 %v257
      %262 = vperm.xlu0 %261, %v219
      %v263 = vpop.permute.xlu0 %262
      %v264 = vpack.c.bf16 %v263, %v260
      %v265 = vld [vmem:[%s209 + $0x3] sm:$0x1]
      %v266 = vlaneseq
      %v267 = vshrl.u32 %v266, 7
      %v268 = vsub.s32 0, %v267
      %v269 = vrot.slane %v265, %v268
      %vm270 = vcmp.lt.s32.totalorder %v269, 0
      %v271 = vadd.s32 %v269, 128
      %v272 = vsel %vm270, %v271, %v269
      %273 = vset.pattern.permute.xlu0 %v272
      %274 = vperm.xlu0 %273, %v218
      %v275 = vpop.permute.xlu0 %274
      %276 = vset.pattern.permute.xlu0 %v272
      %277 = vperm.xlu0 %276, %v219
      %v278 = vpop.permute.xlu0 %277
      %v279 = vpack.c.bf16 %v278, %v275
      %v280 = vld [vmem:[%s2] sm:$0xf]
      %v281 = vld [vmem:[%s2 + $0x4] sm:$0xf]
      %v284 = vunpack.c.l.b16 %v280
      %v285 = vunpack.c.l.b16 %v281
      %v286 = vpack.c.b16 %v285, %v284
      %v289 = vunpack.c.l.b16 %v216
      %v290 = vunpack.c.l.b16 %v217
      %v291 = vpack.c.b16 %v290, %v289
      %vm293 = vcmask 130048
      %v295 = vsel %vm293, %v286, 0
      %297 = vmatprep.subr.bf16.mxu0 0
      %298 = vmatpush1.bf16.msra.mxu0 %v291
      %299 = vmatprep.subr.bf16.mxu0 0
      %300 = vmatpush1.bf16.msra.mxu0 0
      %301 = vmatprep.subr.bf16.mxu0 0
      %302 = vmatpush1.bf16.msra.mxu0 0
      %303 = vmatprep.subr.bf16.mxu0 0
      %304 = vmatpush1.bf16.msra.mxu0 0
      %305 = vmatprep.subr.bf16.mxu0 0
      %306 = vmatpush1.bf16.msra.mxu0 0
      %307 = vmatprep.subr.bf16.mxu0 0
      %308 = vmatpush1.bf16.msra.mxu0 0
      %309 = vmatprep.subr.bf16.mxu0 0
      %310 = vmatpush1.bf16.msra.mxu0 0
      %311 = vmatprep.subr.bf16.mxu0 0
      %312 = vmatpush1.bf16.msra.mxu0 0
      %313 = vmatprep.subr.bf16.mxu0 0
      %314 = vmatpush1.bf16.msra.mxu0 0
      %315 = vmatprep.subr.bf16.mxu0 0
      %316 = vmatpush1.bf16.msra.mxu0 0
      %317 = vmatprep.subr.bf16.mxu0 0
      %318 = vmatpush1.bf16.msra.mxu0 0
      %319 = vmatprep.subr.bf16.mxu0 0
      %320 = vmatpush1.bf16.msra.mxu0 0
      %321 = vmatprep.subr.bf16.mxu0 0
      %322 = vmatpush1.bf16.msra.mxu0 0
      %323 = vmatprep.subr.bf16.mxu0 0
      %324 = vmatpush1.bf16.msra.mxu0 0
      %325 = vmatprep.subr.bf16.mxu0 0
      %326 = vmatpush1.bf16.msra.mxu0 0
      %327 = vmatprep.subr.bf16.mxu0 0
      %328 = vmatpush1.bf16.msra.mxu0 0
      %329 = vmatprep.mubr.bf16.mxu0 0
      %330 = vmatmul.mubr.bf16.gmra.mrb[0].mxu0 %v295
      %v331 = vpop.f32.mrb[0].mxu0
      %v332 = vadd.f32 0.0, %v331
      %v333 = vpop.f32.mrb[0].mxu0
      %v334 = vpop.f32.mrb[0].mxu0
      %v335 = vadd.f32 0.0, %v334
      %v336 = vpop.f32.mrb[0].mxu0
      %337 = vdwg.mxu0
      %v338 = vld [vmem:[%s3] sm:$0xf]
      %v339 = vld [vmem:[%s3 + $0x4] sm:$0xf]
      %v342 = vunpack.c.l.b16 %v338
      %v343 = vunpack.c.l.b16 %v339
      %v344 = vpack.c.b16 %v343, %v342
      %v346 = vsel %vm293, %v344, 0
      %348 = vmatprep.subr.bf16.mxu0 %v249
      %349 = vmatpush1.bf16.msra.mxu0 %v234
      %350 = vmatprep.subr.bf16.mxu0 0
      %351 = vmatpush1.bf16.msra.mxu0 0
      %352 = vmatprep.subr.bf16.mxu0 0
      %353 = vmatpush1.bf16.msra.mxu0 0
      %354 = vmatprep.subr.bf16.mxu0 0
      %355 = vmatpush1.bf16.msra.mxu0 0
      %356 = vmatprep.subr.bf16.mxu0 0
      %357 = vmatpush1.bf16.msra.mxu0 0
      %358 = vmatprep.subr.bf16.mxu0 0
      %359 = vmatpush1.bf16.msra.mxu0 0
      %360 = vmatprep.subr.bf16.mxu0 0
      %361 = vmatpush1.bf16.msra.mxu0 0
      %362 = vmatprep.subr.bf16.mxu0 0
      %363 = vmatpush1.bf16.msra.mxu0 0
      %364 = vmatprep.subr.bf16.mxu0 0
      %365 = vmatpush1.bf16.msra.mxu0 0
      %366 = vmatprep.subr.bf16.mxu0 0
      %367 = vmatpush1.bf16.msra.mxu0 0
      %368 = vmatprep.subr.bf16.mxu0 0
      %369 = vmatpush1.bf16.msra.mxu0 0
      %370 = vmatprep.subr.bf16.mxu0 0
      %371 = vmatpush1.bf16.msra.mxu0 0
      %372 = vmatprep.subr.bf16.mxu0 0
      %373 = vmatpush1.bf16.msra.mxu0 0
      %374 = vmatprep.subr.bf16.mxu0 0
      %375 = vmatpush1.bf16.msra.mxu0 0
      %376 = vmatprep.subr.bf16.mxu0 0
      %377 = vmatpush1.bf16.msra.mxu0 0
      %378 = vmatprep.subr.bf16.mxu0 0
      %379 = vmatpush1.bf16.msra.mxu0 0
      %380 = vmatprep.mubr.bf16.mxu0 0
      %381 = vmatmul.mubr.bf16.gmra.mrb[0].mxu0 %v346
      %v382 = vpop.f32.mrb[0].mxu0
      %v383 = vadd.f32 0.0, %v382
      %v384 = vpop.f32.mrb[0].mxu0
      %v385 = vadd.f32 0.0, %v384
      %v386 = vpop.f32.mrb[0].mxu0
      %v387 = vadd.f32 0.0, %v386
      %v388 = vpop.f32.mrb[0].mxu0
      %v389 = vadd.f32 0.0, %v388
      %390 = vdwg.mxu0
      %391 = vmatprep.subr.bf16.mxu0 %v279
      %392 = vmatpush1.bf16.msra.mxu0 %v264
      %393 = vmatprep.subr.bf16.mxu0 0
      %394 = vmatpush1.bf16.msra.mxu0 0
      %395 = vmatprep.subr.bf16.mxu0 0
      %396 = vmatpush1.bf16.msra.mxu0 0
      %397 = vmatprep.subr.bf16.mxu0 0
      %398 = vmatpush1.bf16.msra.mxu0 0
      %399 = vmatprep.subr.bf16.mxu0 0
      %400 = vmatpush1.bf16.msra.mxu0 0
      %401 = vmatprep.subr.bf16.mxu0 0
      %402 = vmatpush1.bf16.msra.mxu0 0
      %403 = vmatprep.subr.bf16.mxu0 0
      %404 = vmatpush1.bf16.msra.mxu0 0
      %405 = vmatprep.subr.bf16.mxu0 0
      %406 = vmatpush1.bf16.msra.mxu0 0
      %407 = vmatprep.subr.bf16.mxu0 0
      %408 = vmatpush1.bf16.msra.mxu0 0
      %409 = vmatprep.subr.bf16.mxu0 0
      %410 = vmatpush1.bf16.msra.mxu0 0
      %411 = vmatprep.subr.bf16.mxu0 0
      %412 = vmatpush1.bf16.msra.mxu0 0
      %413 = vmatprep.subr.bf16.mxu0 0
      %414 = vmatpush1.bf16.msra.mxu0 0
      %415 = vmatprep.subr.bf16.mxu0 0
      %416 = vmatpush1.bf16.msra.mxu0 0
      %417 = vmatprep.subr.bf16.mxu0 0
      %418 = vmatpush1.bf16.msra.mxu0 0
      %419 = vmatprep.subr.bf16.mxu0 0
      %420 = vmatpush1.bf16.msra.mxu0 0
      %421 = vmatprep.subr.bf16.mxu0 0
      %422 = vmatpush1.bf16.msra.mxu0 0
      %423 = vmatprep.mubr.bf16.mxu0 0
      %424 = vmatmul.mubr.bf16.gmra.mrb[0].mxu0 %v346
      %v425 = vpop.f32.mrb[0].mxu0
      %v426 = vadd.f32 0.0, %v425
      %v427 = vpop.f32.mrb[0].mxu0
      %v428 = vadd.f32 0.0, %v427
      %v429 = vpop.f32.mrb[0].mxu0
      %v430 = vadd.f32 0.0, %v429
      %v431 = vpop.f32.mrb[0].mxu0
      %v432 = vadd.f32 0.0, %v431
      %433 = vdwg.mxu0
      %v434 = vadd.f32 %v332, %v383
      %v435 = vadd.f32 %v335, %v387
      %436 = vadd.xlane.f32.xlu0 %v434
      %v437 = vpop.xlane.xlu0 %436
      %438 = vadd.xlane.f32.xlu0 %v435
      %v439 = vpop.xlane.xlu0 %438
      %v440 = vadd.f32 %v437, 0.0
      %v441 = vadd.f32 %v439, 0.0
      %v442 = vmul.f32 %v434, %v434
      %v443 = vmul.f32 %v435, %v435
      %444 = vadd.xlane.f32.xlu0 %v442
      %v445 = vpop.xlane.xlu0 %444
      %446 = vadd.xlane.f32.xlu0 %v443
      %v447 = vpop.xlane.xlu0 %446
      %v448 = vadd.f32 %v445, 0.0
      %v449 = vadd.f32 %v447, 0.0
      %v450 = vadd.f32 %v332, %v385
      %v451 = vadd.f32 %v335, %v389
      %452 = vadd.xlane.f32.xlu0 %v450
      %v453 = vpop.xlane.xlu0 %452
      %454 = vadd.xlane.f32.xlu0 %v451
      %v455 = vpop.xlane.xlu0 %454
      %v456 = vadd.f32 %v440, %v453
      %v457 = vadd.f32 %v441, %v455
      %v458 = vmul.f32 %v450, %v450
      %v459 = vmul.f32 %v451, %v451
      %460 = vadd.xlane.f32.xlu0 %v458
      %v461 = vpop.xlane.xlu0 %460
      %462 = vadd.xlane.f32.xlu0 %v459
      %v463 = vpop.xlane.xlu0 %462
      %v464 = vadd.f32 %v448, %v461
      %v465 = vadd.f32 %v449, %v463
      %v466 = vmax.f32 %v434, %v450
      %v467 = vmax.f32 %v435, %v451
      %v468 = vadd.f32 %v332, %v426
      %v469 = vadd.f32 %v335, %v430
      %470 = vadd.xlane.f32.xlu0 %v468
      %v471 = vpop.xlane.xlu0 %470
      %472 = vadd.xlane.f32.xlu0 %v469
      %v473 = vpop.xlane.xlu0 %472
      %v474 = vadd.f32 %v456, %v471
      %v475 = vadd.f32 %v457, %v473
      %v476 = vmul.f32 %v468, %v468
      %v477 = vmul.f32 %v469, %v469
      %478 = vadd.xlane.f32.xlu0 %v476
      %v479 = vpop.xlane.xlu0 %478
      %480 = vadd.xlane.f32.xlu0 %v477
      %v481 = vpop.xlane.xlu0 %480
      %v482 = vadd.f32 %v464, %v479
      %v483 = vadd.f32 %v465, %v481
      %v484 = vmax.f32 %v466, %v468
      %v485 = vmax.f32 %v467, %v469
      %v486 = vadd.f32 %v332, %v428
      %v487 = vadd.f32 %v335, %v432
      %488 = vadd.xlane.f32.xlu0 %v486
      %v489 = vpop.xlane.xlu0 %488
      %490 = vadd.xlane.f32.xlu0 %v487
      %v491 = vpop.xlane.xlu0 %490
      %v492 = vadd.f32 %v474, %v489
      %v493 = vadd.f32 %v475, %v491
      %v494 = vmul.f32 %v486, %v486
      %v495 = vmul.f32 %v487, %v487
      %496 = vadd.xlane.f32.xlu0 %v494
      %v497 = vpop.xlane.xlu0 %496
      %498 = vadd.xlane.f32.xlu0 %v495
      %v499 = vpop.xlane.xlu0 %498
      %v500 = vadd.f32 %v482, %v497
      %v501 = vadd.f32 %v483, %v499
      %v502 = vmax.f32 %v484, %v486
      %v503 = vmax.f32 %v485, %v487
      %v504 = vmul.f32 %v492, 0.001953125
      %v505 = vmul.f32 %v493, 0.001953125
      %v506 = vmul.f32 %v500, 0.001953125
      %v507 = vmul.f32 %v501, 0.001953125
      %v508 = vmul.f32 %v504, %v504
      %v509 = vmul.f32 %v505, %v505
      %v510 = vsub.f32 %v506, %v508
      %v511 = vsub.f32 %v507, %v509
      %v512 = vmax.f32 %v510, 0.0
      %v513 = vmax.f32 %v511, 0.0
      %v514 = vsub.f32 %v502, %v504
      %v515 = vsub.f32 %v503, %v505
      %v516 = vadd.f32 %v512, 1e-05
      %v517 = vadd.f32 %v513, 1e-05
      %v518 = vrsqrt.pop %v516
      %v519 = vrsqrt.pop %v517
      %v520 = vmul.f32 %v514, %v518
      %v521 = vmul.f32 %v515, %v519
      %vm522 = vcmp.ge.f32.partialorder %v520, 0.0
      %vm523 = vcmp.ge.f32.partialorder %v521, 0.0
      %v524 = vmul.f32 %v520, 0.2
      %v525 = vmul.f32 %v521, 0.2
      %v526 = vsel %vm522, %v520, %v524
      %v527 = vsel %vm523, %v521, %v525
      %v528 = vpack.c.bf16 %v527, %v526
      %v530 = vunpack.c.l.b16 %v528
      %v531 = vunpack.c.h.b16 %v528
      %v532 = vpack.c.b16 %v530, %v530
      %v533 = vpack.c.b16 %v531, %v531
      %536 = vst [vmem:[%s214] sm:$0xf] %v532
      %537 = vst [vmem:[%s214 + $0x4] sm:$0xf] %v533
      %p538 = scmp.lt.s32.totalorder %s15, 1
      %s539 = scalar_select %p538, %s15, 1
      %s540 = smul.addr %s539, 2
      %s541 = smul.addr %s540, 4
      %s542 = scalar_lea.vmem %s4, %s541
      // Predicated region
      $region37: #{self_attention_forward.5} parent=35 // pred_check
        %p543 = pneg %p127
      $region38: #{self_attention_forward.5} parent=35 // pred_check_branch
        %545 = sbr.rel (%p543) target = $region40
      $region39: #{self_attention_forward.5} parent=35 // pred_region
        _
      $region40: #{self_attention_forward.5} parent=35 // pred_fallthru
        _
    $region36: #{self_attention_forward.5} parent=5 // pred_fallthru
      _
    %p546 = scmp.le.s32.totalorder 2, %s10
    // Predicated region
    $region41: #{self_attention_forward.5} parent=5 // pred_check
      %p547 = pneg %p546
    $region42: #{self_attention_forward.5} parent=5 // pred_check_branch
      %549 = sbr.rel (%p547) target = $region44
    $region43: #{self_attention_forward.5} parent=5 // pred_region
      %s550 = ssub.s32 %s10, 2
      // Predicated region
      $region45: #{self_attention_forward.5} parent=43 // pred_check
        %p551 = pneg %p133
      $region46: #{self_attention_forward.5} parent=43 // pred_check_branch
        %553 = sbr.rel (%p551) target = $region48
      $region47: #{self_attention_forward.5} parent=43 // pred_region
        %p554 = scmp.lt.s32.totalorder %s16, 1
        %s555 = scalar_select %p554, %s16, 1
        %s556 = smul.addr %s555, 2
        %s557 = smul.addr %s556, 4
        %s558 = scalar_lea.vmem %s4, %s557
      $region48: #{self_attention_forward.5} parent=43 // pred_fallthru
        _
    $region44: #{self_attention_forward.5} parent=5 // pred_fallthru
      _
  $region6: #{self_attention_forward.5} parent=0 // loop_footer
    %s14 = sadd.s32 1, %s10
  $region7: #{self_attention_forward.5} parent=0 // loop_footer_branch
    %9 = sbr.rel target = $region3
  $region8: #{self_attention_forward.5} parent=0 // loop_exit
    _

// kernel: self_attention_forward.6
$region0: #{self_attention_forward.6}
  #allocation0 [shape = 'u32[]', space=smem, size = 0x4, offset = 0x4, fixed_abs, tag = 'smem constant byte address 0x4 - core index']
  #allocation1 [shape = 'u32[144,128]{1,0:T(1,128)}', space=vmem, size = 0x12000, scoped, tag = 'internal scratch']
  %s0 = inlined_call_operand.vmem [shape: bf16[2,16,128], index: 0, kind: input, shape index: {}]
  %s1 = inlined_call_operand.vmem [shape: s32[2,4,128], index: 1, kind: input, shape index: {}]
  %s2 = inlined_call_operand.vmem [shape: bf16[32,16], index: 2, kind: input, shape index: {}]
  %s3 = inlined_call_operand.vmem [shape: bf16[32,16], index: 3, kind: input, shape index: {}]
  %s4 = inlined_call_operand.vmem [shape: bf16[2,32,128], index: 4, kind: output, shape index: {}]
  %s5 = sld [smem:[#allocation0]]
  $region49: #{self_attention_forward.6} parent=0
    _
  %s7 = ssub.s32 1, %s5
  %s8 = scalar_select 0, %s7, %s5
  loop: start=0, step=1, limit=4
  $region2: #{self_attention_forward.6} parent=0 // loop_pre_header
    _
  $region3: #{self_attention_forward.6} parent=0 // loop_header
    %s10 = sphi 0, %s14
    %p11 = scmp.ge.s32.totalorder %s10, 4
    %s20 = sphi 0, %s22
    %s23 = sphi 0, %s20
    %s24 = sphi 0, %s23
    %s40 = sphi 0, %s24
    %s46 = sphi 0, %s48
    %s49 = sphi 0, %s46
    %s50 = sphi 0, %s49
    %s66 = sphi 0, %s50
    %s70 = sphi 0, %s70
    %s72 = sphi 0, %s70
    %s73 = sphi 0, %s72
    %s87 = sphi 0, %s73
    %s91 = sphi 0, %s91
    %s93 = sphi 0, %s91
    %s94 = sphi 0, %s93
    %s108 = sphi 0, %s94
    %s114 = sphi 0, %s116
    %s117 = sphi 0, %s114
    %s118 = sphi 0, %s117
    %s134 = sphi 0, %s118
  $region4: #{self_attention_forward.6} parent=0 // loop_header_branch
    %13 = sbr.rel (%p11) target = $region8
  $region5: #{self_attention_forward.6} parent=0 // loop_body
    %s15 = ssub.s32 %s10, 1
    %s16 = ssub.s32 %s10, 2
    %s17 = sadd.s32 %s10, 1
    %s18 = ssub.s32 %s10, %s17
    %p19 = scmp.eq.s32.totalorder %s18, 0
    %s21 = sadd.s32 %s20, 1
    %s22 = scalar_select %p19, %s20, %s21
    %p25 = pneg %p19
    %p26 = scmp.eq.s32.totalorder %s10, 1
    %p27 = por %p25, %p26
    %p28 = scmp.ne.s32.totalorder %s20, %s23
    %p29 = scmp.eq.s32.totalorder %s10, 0
    %p30 = por %p28, %p29
    %p31 = scmp.ne.s32.totalorder %s20, %s23
    %p32 = scmp.eq.s32.totalorder %s15, 1
    %p33 = por %p31, %p32
    %p34 = scmp.ne.s32.totalorder %s23, %s24
    %p35 = scmp.eq.s32.totalorder %s15, 0
    %p36 = por %p34, %p35
    %p37 = scmp.ne.s32.totalorder %s23, %s24
    %p38 = scmp.eq.s32.totalorder %s16, 1
    %p39 = por %p37, %p38
    %p41 = scmp.ne.s32.totalorder %s24, %s40
    %p42 = scmp.eq.s32.totalorder %s16, 0
    %p43 = por %p41, %p42
    %s44 = ssub.s32 %s10, %s17
    %p45 = scmp.eq.s32.totalorder %s44, 0
    %s47 = sadd.s32 %s46, 1
    %s48 = scalar_select %p45, %s46, %s47
    %p51 = pneg %p45
    %p52 = scmp.eq.s32.totalorder %s10, 1
    %p53 = por %p51, %p52
    %p54 = scmp.ne.s32.totalorder %s46, %s49
    %p55 = scmp.eq.s32.totalorder %s10, 0
    %p56 = por %p54, %p55
    %p57 = scmp.ne.s32.totalorder %s46, %s49
    %p58 = scmp.eq.s32.totalorder %s15, 1
    %p59 = por %p57, %p58
    %p60 = scmp.ne.s32.totalorder %s49, %s50
    %p61 = scmp.eq.s32.totalorder %s15, 0
    %p62 = por %p60, %p61
    %p63 = scmp.ne.s32.totalorder %s49, %s50
    %p64 = scmp.eq.s32.totalorder %s16, 1
    %p65 = por %p63, %p64
    %p67 = scmp.ne.s32.totalorder %s50, %s66
    %p68 = scmp.eq.s32.totalorder %s16, 0
    %p69 = por %p67, %p68
    %s71 = sadd.s32 %s70, 1
    %p74 = scmp.eq.s32.totalorder %s10, 1
    %p75 = scmp.ne.s32.totalorder %s70, %s72
    %p76 = scmp.eq.s32.totalorder %s10, 0
    %p77 = por %p75, %p76
    %p78 = scmp.ne.s32.totalorder %s70, %s72
    %p79 = scmp.eq.s32.totalorder %s15, 1
    %p80 = por %p78, %p79
    %p81 = scmp.ne.s32.totalorder %s72, %s73
    %p82 = scmp.eq.s32.totalorder %s15, 0
    %p83 = por %p81, %p82
    %p84 = scmp.ne.s32.totalorder %s72, %s73
    %p85 = scmp.eq.s32.totalorder %s16, 1
    %p86 = por %p84, %p85
    %p88 = scmp.ne.s32.totalorder %s73, %s87
    %p89 = scmp.eq.s32.totalorder %s16, 0
    %p90 = por %p88, %p89
    %s92 = sadd.s32 %s91, 1
    %p95 = scmp.eq.s32.totalorder %s10, 1
    %p96 = scmp.ne.s32.totalorder %s91, %s93
    %p97 = scmp.eq.s32.totalorder %s10, 0
    %p98 = por %p96, %p97
    %p99 = scmp.ne.s32.totalorder %s91, %s93
    %p100 = scmp.eq.s32.totalorder %s15, 1
    %p101 = por %p99, %p100
    %p102 = scmp.ne.s32.totalorder %s93, %s94
    %p103 = scmp.eq.s32.totalorder %s15, 0
    %p104 = por %p102, %p103
    %p105 = scmp.ne.s32.totalorder %s93, %s94
    %p106 = scmp.eq.s32.totalorder %s16, 1
    %p107 = por %p105, %p106
    %p109 = scmp.ne.s32.totalorder %s94, %s108
    %p110 = scmp.eq.s32.totalorder %s16, 0
    %p111 = por %p109, %p110
    %s112 = ssub.s32 %s10, %s17
    %p113 = scmp.eq.s32.totalorder %s112, 0
    %s115 = sadd.s32 %s114, 1
    %s116 = scalar_select %p113, %s114, %s115
    %p119 = pneg %p113
    %p120 = scmp.eq.s32.totalorder %s10, 1
    %p121 = por %p119, %p120
    %p122 = scmp.ne.s32.totalorder %s114, %s117
    %p123 = scmp.eq.s32.totalorder %s10, 0
    %p124 = por %p122, %p123
    %p125 = scmp.ne.s32.totalorder %s114, %s117
    %p126 = scmp.eq.s32.totalorder %s15, 1
    %p127 = por %p125, %p126
    %p128 = scmp.ne.s32.totalorder %s117, %s118
    %p129 = scmp.eq.s32.totalorder %s15, 0
    %p130 = por %p128, %p129
    %p131 = scmp.ne.s32.totalorder %s117, %s118
    %p132 = scmp.eq.s32.totalorder %s16, 1
    %p133 = por %p131, %p132
    %p135 = scmp.ne.s32.totalorder %s118, %s134
    %p136 = scmp.eq.s32.totalorder %s16, 0
    %p137 = por %p135, %p136
    %p138 = scmp.le.s32.totalorder 1, %s10
    %p139 = scmp.lt.s32.totalorder %s10, 3
    %p140 = pnand %p138, %p139
    %p141 = pneg %p140
    // Predicated region
    $region9: #{self_attention_forward.6} parent=5 // pred_check
      _
    $region10: #{self_attention_forward.6} parent=5 // pred_check_branch
      %143 = sbr.rel (%p140) target = $region12
    $region11: #{self_attention_forward.6} parent=5 // pred_region
      %s144 = ssub.s32 %s10, 1
      // Predicated region
      $region13: #{self_attention_forward.6} parent=11 // pred_check
        %p145 = pneg %p83
      $region14: #{self_attention_forward.6} parent=11 // pred_check_branch
        %147 = sbr.rel (%p145) target = $region16
      $region15: #{self_attention_forward.6} parent=11 // pred_region
        _
      $region16: #{self_attention_forward.6} parent=11 // pred_fallthru
        _
      // Predicated region
      $region17: #{self_attention_forward.6} parent=11 // pred_check
        %p148 = pneg %p104
      $region18: #{self_attention_forward.6} parent=11 // pred_check_branch
        %150 = sbr.rel (%p148) target = $region20
      $region19: #{self_attention_forward.6} parent=11 // pred_region
        _
      $region20: #{self_attention_forward.6} parent=11 // pred_fallthru
        _
    $region12: #{self_attention_forward.6} parent=5 // pred_fallthru
      _
    %p151 = scmp.lt.s32.totalorder %s10, 2
    // Predicated region
    $region21: #{self_attention_forward.6} parent=5 // pred_check
      %p152 = pneg %p151
    $region22: #{self_attention_forward.6} parent=5 // pred_check_branch
      %154 = sbr.rel (%p152) target = $region24
    $region23: #{self_attention_forward.6} parent=5 // pred_region
      // Predicated region
      $region25: #{self_attention_forward.6} parent=23 // pred_check
        %p155 = pneg %p30
      $region26: #{self_attention_forward.6} parent=23 // pred_check_branch
        %157 = sbr.rel (%p155) target = $region28
      $region27: #{self_attention_forward.6} parent=23 // pred_region
        %p158 = scmp.lt.s32.totalorder %s10, 1
        %s159 = scalar_select %p158, %s10, 1
        %s160 = smul.addr %s159, 2
        %s161 = smul.addr %s160, 4
        %s162 = scalar_lea.vmem %s0, %s161
      $region28: #{self_attention_forward.6} parent=23 // pred_fallthru
        _
      // Predicated region
      $region29: #{self_attention_forward.6} parent=23 // pred_check
        %p163 = pneg %p56
      $region30: #{self_attention_forward.6} parent=23 // pred_check_branch
        %165 = sbr.rel (%p163) target = $region32
      $region31: #{self_attention_forward.6} parent=23 // pred_region
        %p166 = scmp.lt.s32.totalorder %s10, 1
        %s167 = scalar_select %p166, %s10, 1
        %s168 = smul.addr %s167, 4
        %s169 = scalar_lea.vmem %s1, %s168
      $region32: #{self_attention_forward.6} parent=23 // pred_fallthru
        _
    $region24: #{self_attention_forward.6} parent=5 // pred_fallthru
      _
    %p170 = scmp.le.s32.totalorder 1, %s10
    %p171 = scmp.lt.s32.totalorder %s10, 3
    %p172 = pnand %p170, %p171
    %p173 = pneg %p172
    // Predicated region
    $region33: #{self_attention_forward.6} parent=5 // pred_check
      _
    $region34: #{self_attention_forward.6} parent=5 // pred_check_branch
      %175 = sbr.rel (%p172) target = $region36
    $region35: #{self_attention_forward.6} parent=5 // pred_region
      %s176 = ssub.s32 %s10, 1
      %p177 = scmp.lt.s32.totalorder %s15, 1
      %s178 = scalar_select %p177, %s15, 1
      %s179 = smul.addr %s178, 2
      %s180 = smul.addr %s179, 4
      %s181 = scalar_lea.vmem %s0, %s180
      %p182 = pneg %p36
      %p183 = pneg %p33
      %p184 = scmp.lt.s32.totalorder %s15, 1
      %s185 = scalar_select %p184, %s15, 1
      %s186 = smul.addr %s185, 4
      %s187 = scalar_lea.vmem %s1, %s186
      %p188 = pneg %p62
      %p189 = pneg %p59
      %p190 = pneg %p83
      %p191 = pneg %p80
      %p192 = pneg %p104
      %p193 = pneg %p101
      %p194 = pneg %p130
      %p195 = pneg %p127
      %p196 = scmp.lt.s32.totalorder %s15, 1
      %s197 = scalar_select %p196, %s15, 1
      %s198 = smul.addr %s197, 4
      %s199 = smul.addr %s198, 4
      %s200 = scalar_lea.vmem %s4, %s199
      %p201 = scmp.lt.s32.totalorder %s15, 1
      %s202 = scalar_select %p201, %s15, 1
      %s203 = smul.addr %s202, 2
      %s204 = smul.addr %s203, 4
      %s205 = scalar_lea.vmem %s0, %s204
      %p206 = scmp.lt.s32.totalorder %s15, 1
      %s207 = scalar_select %p206, %s15, 1
      %s208 = smul.addr %s207, 4
      %s209 = scalar_lea.vmem %s1, %s208
      %p210 = scmp.lt.s32.totalorder %s15, 1
      %s211 = scalar_select %p210, %s15, 1
      %s212 = smul.addr %s211, 4
      %s213 = smul.addr %s212, 4
      %s214 = scalar_lea.vmem %s4, %s213
      %v216 = vld [vmem:[%s205] sm:$0xf]
      %v217 = vld [vmem:[%s205 + $0x4] sm:$0xf]
      %v218 = vunpack.c.l.bf16 %v216
      %v219 = vunpack.c.l.bf16 %v217
      %v220 = vld [vmem:[%s209] sm:$0x1]
      %v221 = vlaneseq
      %v222 = vshrl.u32 %v221, 7
      %v223 = vsub.s32 0, %v222
      %v224 = vrot.slane %v220, %v223
      %vm225 = vcmp.lt.s32.totalorder %v224, 0
      %v226 = vadd.s32 %v224, 128
      %v227 = vsel %vm225, %v226, %v224
      %228 = vset.pattern.permute.xlu0 %v227
      %229 = vperm.xlu0 %228, %v218
      %v230 = vpop.permute.xlu0 %229
      %231 = vset.pattern.permute.xlu0 %v227
      %232 = vperm.xlu0 %231, %v219
      %v233 = vpop.permute.xlu0 %232
      %v234 = vpack.c.bf16 %v233, %v230
      %v235 = vld [vmem:[%s209 + $0x1] sm:$0x1]
      %v236 = vlaneseq
      %v237 = vshrl.u32 %v236, 7
      %v238 = vsub.s32 0, %v237
      %v239 = vrot.slane %v235, %v238
      %vm240 = vcmp.lt.s32.totalorder %v239, 0
      %v241 = vadd.s32 %v239, 128
      %v242 = vsel %vm240, %v241, %v239
      %243 = vset.pattern.permute.xlu0 %v242
      %244 = vperm.xlu0 %243, %v218
      %v245 = vpop.permute.xlu0 %244
      %246 = vset.pattern.permute.xlu0 %v242
      %247 = vperm.xlu0 %246, %v219
      %v248 = vpop.permute.xlu0 %247
      %v249 = vpack.c.bf16 %v248, %v245
      %v250 = vld [vmem:[%s209 + $0x2] sm:$0x1]
      %v251 = vlaneseq
      %v252 = vshrl.u32 %v251, 7
      %v253 = vsub.s32 0, %v252
      %v254 = vrot.slane %v250, %v253
      %vm255 = vcmp.lt.s32.totalorder %v254, 0
      %v256 = vadd.s32 %v254, 128
      %v257 = vsel %vm255, %v256, %v254
      %258 = vset.pattern.permute.xlu0 %v257
      %259 = vperm.xlu0 %258, %v218
      %v260 = vpop.permute.xlu0 %259
      %261 = vset.pattern.permute.xlu0 %v257
      %262 = vperm.xlu0 %261, %v219
      %v263 = vpop.permute.xlu0 %262
      %v264 = vpack.c.bf16 %v263, %v260
      %v265 = vld [vmem:[%s209 + $0x3] sm:$0x1]
      %v266 = vlaneseq
      %v267 = vshrl.u32 %v266, 7
      %v268 = vsub.s32 0, %v267
      %v269 = vrot.slane %v265, %v268
      %vm270 = vcmp.lt.s32.totalorder %v269, 0
      %v271 = vadd.s32 %v269, 128
      %v272 = vsel %vm270, %v271, %v269
      %273 = vset.pattern.permute.xlu0 %v272
      %274 = vperm.xlu0 %273, %v218
      %v275 = vpop.permute.xlu0 %274
      %276 = vset.pattern.permute.xlu0 %v272
      %277 = vperm.xlu0 %276, %v219
      %v278 = vpop.permute.xlu0 %277
      %v279 = vpack.c.bf16 %v278, %v275
      %v280 = vld [vmem:[%s2] sm:$0xf]
      %v281 = vld [vmem:[%s2 + $0x4] sm:$0xf]
      %v282 = vld [vmem:[%s2 + $0x8] sm:$0xf]
      %v283 = vld [vmem:[%s2 + $0xc] sm:$0xf]
      %v288 = vunpack.c.l.b16 %v280
      %v289 = vunpack.c.l.b16 %v281
      %v290 = vunpack.c.l.b16 %v282
      %v291 = vunpack.c.l.b16 %v283
      %v292 = vpack.c.b16 %v289, %v288
      %v293 = vpack.c.b16 %v291, %v290
      %v296 = vunpack.c.l.b16 %v216
      %v297 = vunpack.c.l.b16 %v217
      %v298 = vpack.c.b16 %v297, %v296
      %vm300 = vcmask 130048
      %v302 = vsel %vm300, %v292, 0
      %v305 = vsel %vm300, %v293, 0
      %307 = vmatprep.subr.bf16.mxu0 0
      %308 = vmatpush1.bf16.msra.mxu0 %v298
      %309 = vmatprep.subr.bf16.mxu0 0
      %310 = vmatpush1.bf16.msra.mxu0 0
      %311 = vmatprep.subr.bf16.mxu0 0
      %312 = vmatpush1.bf16.msra.mxu0 0
      %313 = vmatprep.subr.bf16.mxu0 0
      %314 = vmatpush1.bf16.msra.mxu0 0
      %315 = vmatprep.subr.bf16.mxu0 0
      %316 = vmatpush1.bf16.msra.mxu0 0
      %317 = vmatprep.subr.bf16.mxu0 0
      %318 = vmatpush1.bf16.msra.mxu0 0
      %319 = vmatprep.subr.bf16.mxu0 0
      %320 = vmatpush1.bf16.msra.mxu0 0
      %321 = vmatprep.subr.bf16.mxu0 0
      %322 = vmatpush1.bf16.msra.mxu0 0
      %323 = vmatprep.subr.bf16.mxu0 0
      %324 = vmatpush1.bf16.msra.mxu0 0
      %325 = vmatprep.subr.bf16.mxu0 0
      %326 = vmatpush1.bf16.msra.mxu0 0
      %327 = vmatprep.subr.bf16.mxu0 0
      %328 = vmatpush1.bf16.msra.mxu0 0
      %329 = vmatprep.subr.bf16.mxu0 0
      %330 = vmatpush1.bf16.msra.mxu0 0
      %331 = vmatprep.subr.bf16.mxu0 0
      %332 = vmatpush1.bf16.msra.mxu0 0
      %333 = vmatprep.subr.bf16.mxu0 0
      %334 = vmatpush1.bf16.msra.mxu0 0
      %335 = vmatprep.subr.bf16.mxu0 0
      %336 = vmatpush1.bf16.msra.mxu0 0
      %337 = vmatprep.subr.bf16.mxu0 0
      %338 = vmatpush1.bf16.msra.mxu0 0
      %339 = vmatprep.mubr.bf16.mxu0 0
      %340 = vmatmul.mubr.bf16.gmra.mrb[0].mxu0 %v302
      %v341 = vpop.f32.mrb[0].mxu0
      %v342 = vadd.f32 0.0, %v341
      %v343 = vpop.f32.mrb[0].mxu0
      %v344 = vpop.f32.mrb[0].mxu0
      %v345 = vadd.f32 0.0, %v344
      %v346 = vpop.f32.mrb[0].mxu0
      %347 = vmatprep.mubr.bf16.mxu0 0
      %348 = vmatmul.mubr.bf16.gmra.mrb[0].mxu0 %v305
      %v349 = vpop.f32.mrb[0].mxu0
      %v350 = vadd.f32 0.0, %v349
      %v351 = vpop.f32.mrb[0].mxu0
      %v352 = vpop.f32.mrb[0].mxu0
      %v353 = vadd.f32 0.0, %v352
      %v354 = vpop.f32.mrb[0].mxu0
      %355 = vdwg.mxu0
      %v356 = vld [vmem:[%s3] sm:$0xf]
      %v357 = vld [vmem:[%s3 + $0x4] sm:$0xf]
      %v358 = vld [vmem:[%s3 + $0x8] sm:$0xf]
      %v359 = vld [vmem:[%s3 + $0xc] sm:$0xf]
      %v364 = vunpack.c.l.b16 %v356
      %v365 = vunpack.c.l.b16 %v357
      %v366 = vunpack.c.l.b16 %v358
      %v367 = vunpack.c.l.b16 %v359
      %v368 = vpack.c.b16 %v365, %v364
      %v369 = vpack.c.b16 %v367, %v366
      %v371 = vsel %vm300, %v368, 0
      %v374 = vsel %vm300, %v369, 0
      %376 = vmatprep.subr.bf16.mxu0 %v249
      %377 = vmatpush1.bf16.msra.mxu0 %v234
      %378 = vmatprep.subr.bf16.mxu0 0
      %379 = vmatpush1.bf16.msra.mxu0 0
      %380 = vmatprep.subr.bf16.mxu0 0
      %381 = vmatpush1.bf16.msra.mxu0 0
      %382 = vmatprep.subr.bf16.mxu0 0
      %383 = vmatpush1.bf16.msra.mxu0 0
      %384 = vmatprep.subr.bf16.mxu0 0
      %385 = vmatpush1.bf16.msra.mxu0 0
      %386 = vmatprep.subr.bf16.mxu0 0
      %387 = vmatpush1.bf16.msra.mxu0 0
      %388 = vmatprep.subr.bf16.mxu0 0
      %389 = vmatpush1.bf16.msra.mxu0 0
      %390 = vmatprep.subr.bf16.mxu0 0
      %391 = vmatpush1.bf16.msra.mxu0 0
      %392 = vmatprep.subr.bf16.mxu0 0
      %393 = vmatpush1.bf16.msra.mxu0 0
      %394 = vmatprep.subr.bf16.mxu0 0
      %395 = vmatpush1.bf16.msra.mxu0 0
      %396 = vmatprep.subr.bf16.mxu0 0
      %397 = vmatpush1.bf16.msra.mxu0 0
      %398 = vmatprep.subr.bf16.mxu0 0
      %399 = vmatpush1.bf16.msra.mxu0 0
      %400 = vmatprep.subr.bf16.mxu0 0
      %401 = vmatpush1.bf16.msra.mxu0 0
      %402 = vmatprep.subr.bf16.mxu0 0
      %403 = vmatpush1.bf16.msra.mxu0 0
      %404 = vmatprep.subr.bf16.mxu0 0
      %405 = vmatpush1.bf16.msra.mxu0 0
      %406 = vmatprep.subr.bf16.mxu0 0
      %407 = vmatpush1.bf16.msra.mxu0 0
      %408 = vmatprep.mubr.bf16.mxu0 0
      %409 = vmatmul.mubr.bf16.gmra.mrb[0].mxu0 %v371
      %v410 = vpop.f32.mrb[0].mxu0
      %v411 = vadd.f32 0.0, %v410
      %v412 = vpop.f32.mrb[0].mxu0
      %v413 = vadd.f32 0.0, %v412
      %v414 = vpop.f32.mrb[0].mxu0
      %v415 = vadd.f32 0.0, %v414
      %v416 = vpop.f32.mrb[0].mxu0
      %v417 = vadd.f32 0.0, %v416
      %418 = vmatprep.mubr.bf16.mxu0 0
      %419 = vmatmul.mubr.bf16.gmra.mrb[0].mxu0 %v374
      %v420 = vpop.f32.mrb[0].mxu0
      %v421 = vadd.f32 0.0, %v420
      %v422 = vpop.f32.mrb[0].mxu0
      %v423 = vadd.f32 0.0, %v422
      %v424 = vpop.f32.mrb[0].mxu0
      %v425 = vadd.f32 0.0, %v424
      %v426 = vpop.f32.mrb[0].mxu0
      %v427 = vadd.f32 0.0, %v426
      %428 = vdwg.mxu0
      %429 = vmatprep.subr.bf16.mxu0 %v279
      %430 = vmatpush1.bf16.msra.mxu0 %v264
      %431 = vmatprep.subr.bf16.mxu0 0
      %432 = vmatpush1.bf16.msra.mxu0 0
      %433 = vmatprep.subr.bf16.mxu0 0
      %434 = vmatpush1.bf16.msra.mxu0 0
      %435 = vmatprep.subr.bf16.mxu0 0
      %436 = vmatpush1.bf16.msra.mxu0 0
      %437 = vmatprep.subr.bf16.mxu0 0
      %438 = vmatpush1.bf16.msra.mxu0 0
      %439 = vmatprep.subr.bf16.mxu0 0
      %440 = vmatpush1.bf16.msra.mxu0 0
      %441 = vmatprep.subr.bf16.mxu0 0
      %442 = vmatpush1.bf16.msra.mxu0 0
      %443 = vmatprep.subr.bf16.mxu0 0
      %444 = vmatpush1.bf16.msra.mxu0 0
      %445 = vmatprep.subr.bf16.mxu0 0
      %446 = vmatpush1.bf16.msra.mxu0 0
      %447 = vmatprep.subr.bf16.mxu0 0
      %448 = vmatpush1.bf16.msra.mxu0 0
      %449 = vmatprep.subr.bf16.mxu0 0
      %450 = vmatpush1.bf16.msra.mxu0 0
      %451 = vmatprep.subr.bf16.mxu0 0
      %452 = vmatpush1.bf16.msra.mxu0 0
      %453 = vmatprep.subr.bf16.mxu0 0
      %454 = vmatpush1.bf16.msra.mxu0 0
      %455 = vmatprep.subr.bf16.mxu0 0
      %456 = vmatpush1.bf16.msra.mxu0 0
      %457 = vmatprep.subr.bf16.mxu0 0
      %458 = vmatpush1.bf16.msra.mxu0 0
      %459 = vmatprep.subr.bf16.mxu0 0
      %460 = vmatpush1.bf16.msra.mxu0 0
      %461 = vmatprep.mubr.bf16.mxu0 0
      %462 = vmatmul.mubr.bf16.gmra.mrb[0].mxu0 %v371
      %v463 = vpop.f32.mrb[0].mxu0
      %v464 = vadd.f32 0.0, %v463
      %v465 = vpop.f32.mrb[0].mxu0
      %v466 = vadd.f32 0.0, %v465
      %v467 = vpop.f32.mrb[0].mxu0
      %v468 = vadd.f32 0.0, %v467
      %v469 = vpop.f32.mrb[0].mxu0
      %v470 = vadd.f32 0.0, %v469
      %471 = vmatprep.mubr.bf16.mxu0 0
      %472 = vmatmul.mubr.bf16.gmra.mrb[0].mxu0 %v374
      %v473 = vpop.f32.mrb[0].mxu0
      %v474 = vadd.f32 0.0, %v473
      %v475 = vpop.f32.mrb[0].mxu0
      %v476 = vadd.f32 0.0, %v475
      %v477 = vpop.f32.mrb[0].mxu0
      %v478 = vadd.f32 0.0, %v477
      %v479 = vpop.f32.mrb[0].mxu0
      %v480 = vadd.f32 0.0, %v479
      %481 = vdwg.mxu0
      %v482 = vadd.f32 %v342, %v411
      %v483 = vadd.f32 %v345, %v415
      %v484 = vadd.f32 %v350, %v421
      %v485 = vadd.f32 %v353, %v425
      %486 = vadd.xlane.f32.xlu0 %v482
      %v487 = vpop.xlane.xlu0 %486
      %488 = vadd.xlane.f32.xlu0 %v483
      %v489 = vpop.xlane.xlu0 %488
      %490 = vadd.xlane.f32.xlu0 %v484
      %v491 = vpop.xlane.xlu0 %490
      %492 = vadd.xlane.f32.xlu0 %v485
      %v493 = vpop.xlane.xlu0 %492
      %v494 = vadd.f32 %v487, 0.0
      %v495 = vadd.f32 %v489, 0.0
      %v496 = vadd.f32 %v491, 0.0
      %v497 = vadd.f32 %v493, 0.0
      %v498 = vmul.f32 %v482, %v482
      %v499 = vmul.f32 %v483, %v483
      %v500 = vmul.f32 %v484, %v484
      %v501 = vmul.f32 %v485, %v485
      %502 = vadd.xlane.f32.xlu0 %v498
      %v503 = vpop.xlane.xlu0 %502
      %504 = vadd.xlane.f32.xlu0 %v499
      %v505 = vpop.xlane.xlu0 %504
      %506 = vadd.xlane.f32.xlu0 %v500
      %v507 = vpop.xlane.xlu0 %506
      %508 = vadd.xlane.f32.xlu0 %v501
      %v509 = vpop.xlane.xlu0 %508
      %v510 = vadd.f32 %v503, 0.0
      %v511 = vadd.f32 %v505, 0.0
      %v512 = vadd.f32 %v507, 0.0
      %v513 = vadd.f32 %v509, 0.0
      %v514 = vadd.f32 %v342, %v413
      %v515 = vadd.f32 %v345, %v417
      %v516 = vadd.f32 %v350, %v423
      %v517 = vadd.f32 %v353, %v427
      %518 = vadd.xlane.f32.xlu0 %v514
      %v519 = vpop.xlane.xlu0 %518
      %520 = vadd.xlane.f32.xlu0 %v515
      %v521 = vpop.xlane.xlu0 %520
      %522 = vadd.xlane.f32.xlu0 %v516
      %v523 = vpop.xlane.xlu0 %522
      %524 = vadd.xlane.f32.xlu0 %v517
      %v525 = vpop.xlane.xlu0 %524
      %v526 = vadd.f32 %v494, %v519
      %v527 = vadd.f32 %v495, %v521
      %v528 = vadd.f32 %v496, %v523
      %v529 = vadd.f32 %v497, %v525
      %v530 = vmul.f32 %v514, %v514
      %v531 = vmul.f32 %v515, %v515
      %v532 = vmul.f32 %v516, %v516
      %v533 = vmul.f32 %v517, %v517
      %534 = vadd.xlane.f32.xlu0 %v530
      %v535 = vpop.xlane.xlu0 %534
      %536 = vadd.xlane.f32.xlu0 %v531
      %v537 = vpop.xlane.xlu0 %536
      %538 = vadd.xlane.f32.xlu0 %v532
      %v539 = vpop.xlane.xlu0 %538
      %540 = vadd.xlane.f32.xlu0 %v533
      %v541 = vpop.xlane.xlu0 %540
      %v542 = vadd.f32 %v510, %v535
      %v543 = vadd.f32 %v511, %v537
      %v544 = vadd.f32 %v512, %v539
      %v545 = vadd.f32 %v513, %v541
      %v546 = vmax.f32 %v482, %v514
      %v547 = vmax.f32 %v483, %v515
      %v548 = vmax.f32 %v484, %v516
      %v549 = vmax.f32 %v485, %v517
      %v550 = vadd.f32 %v342, %v464
      %v551 = vadd.f32 %v345, %v468
      %v552 = vadd.f32 %v350, %v474
      %v553 = vadd.f32 %v353, %v478
      %554 = vadd.xlane.f32.xlu0 %v550
      %v555 = vpop.xlane.xlu0 %554
      %556 = vadd.xlane.f32.xlu0 %v551
      %v557 = vpop.xlane.xlu0 %556
      %558 = vadd.xlane.f32.xlu0 %v552
      %v559 = vpop.xlane.xlu0 %558
      %560 = vadd.xlane.f32.xlu0 %v553
      %v561 = vpop.xlane.xlu0 %560
      %v562 = vadd.f32 %v526, %v555
      %v563 = vadd.f32 %v527, %v557
      %v564 = vadd.f32 %v528, %v559
      %v565 = vadd.f32 %v529, %v561
      %v566 = vmul.f32 %v550, %v550
      %v567 = vmul.f32 %v551, %v551
      %v568 = vmul.f32 %v552, %v552
      %v569 = vmul.f32 %v553, %v553
      %570 = vadd.xlane.f32.xlu0 %v566
      %v571 = vpop.xlane.xlu0 %570
      %572 = vadd.xlane.f32.xlu0 %v567
      %v573 = vpop.xlane.xlu0 %572
      %574 = vadd.xlane.f32.xlu0 %v568
      %v575 = vpop.xlane.xlu0 %574
      %576 = vadd.xlane.f32.xlu0 %v569
      %v577 = vpop.xlane.xlu0 %576
      %v578 = vadd.f32 %v542, %v571
      %v579 = vadd.f32 %v543, %v573
      %v580 = vadd.f32 %v544, %v575
      %v581 = vadd.f32 %v545, %v577
      %v582 = vmax.f32 %v546, %v550
      %v583 = vmax.f32 %v547, %v551
      %v584 = vmax.f32 %v548, %v552
      %v585 = vmax.f32 %v549, %v553
      %v586 = vadd.f32 %v342, %v466
      %v587 = vadd.f32 %v345, %v470
      %v588 = vadd.f32 %v350, %v476
      %v589 = vadd.f32 %v353, %v480
      %590 = vadd.xlane.f32.xlu0 %v586
      %v591 = vpop.xlane.xlu0 %590
      %592 = vadd.xlane.f32.xlu0 %v587
      %v593 = vpop.xlane.xlu0 %592
      %594 = vadd.xlane.f32.xlu0 %v588
      %v595 = vpop.xlane.xlu0 %594
      %596 = vadd.xlane.f32.xlu0 %v589
      %v597 = vpop.xlane.xlu0 %596
      %v598 = vadd.f32 %v562, %v591
      %v599 = vadd.f32 %v563, %v593
      %v600 = vadd.f32 %v564, %v595
      %v601 = vadd.f32 %v565, %v597
      %v602 = vmul.f32 %v586, %v586
      %v603 = vmul.f32 %v587, %v587
      %v604 = vmul.f32 %v588, %v588
      %v605 = vmul.f32 %v589, %v589
      %606 = vadd.xlane.f32.xlu0 %v602
      %v607 = vpop.xlane.xlu0 %606
      %608 = vadd.xlane.f32.xlu0 %v603
      %v609 = vpop.xlane.xlu0 %608
      %610 = vadd.xlane.f32.xlu0 %v604
      %v611 = vpop.xlane.xlu0 %610
      %612 = vadd.xlane.f32.xlu0 %v605
      %v613 = vpop.xlane.xlu0 %612
      %v614 = vadd.f32 %v578, %v607
      %v615 = vadd.f32 %v579, %v609
      %v616 = vadd.f32 %v580, %v611
      %v617 = vadd.f32 %v581, %v613
      %v618 = vmax.f32 %v582, %v586
      %v619 = vmax.f32 %v583, %v587
      %v620 = vmax.f32 %v584, %v588
      %v621 = vmax.f32 %v585, %v589
      %v622 = vmul.f32 %v598, 0.001953125
      %v623 = vmul.f32 %v599, 0.001953125
      %v624 = vmul.f32 %v600, 0.001953125
      %v625 = vmul.f32 %v601, 0.001953125
      %v626 = vmul.f32 %v614, 0.001953125
      %v627 = vmul.f32 %v615, 0.001953125
      %v628 = vmul.f32 %v616, 0.001953125
      %v629 = vmul.f32 %v617, 0.001953125
      %v630 = vmul.f32 %v622, %v622
      %v631 = vmul.f32 %v623, %v623
      %v632 = vmul.f32 %v624, %v624
      %v633 = vmul.f32 %v625, %v625
      %v634 = vsub.f32 %v626, %v630
      %v635 = vsub.f32 %v627, %v631
      %v636 = vsub.f32 %v628, %v632
      %v637 = vsub.f32 %v629, %v633
      %v638 = vmax.f32 %v634, 0.0
      %v639 = vmax.f32 %v635, 0.0
      %v640 = vmax.f32 %v636, 0.0
      %v641 = vmax.f32 %v637, 0.0
      %v642 = vsub.f32 %v618, %v622
      %v643 = vsub.f32 %v619, %v623
      %v644 = vsub.f32 %v620, %v624
      %v645 = vsub.f32 %v621, %v625
      %v646 = vadd.f32 %v638, 1e-05
      %v647 = vadd.f32 %v639, 1e-05
      %v648 = vadd.f32 %v640, 1e-05
      %v649 = vadd.f32 %v641, 1e-05
      %v650 = vrsqrt.pop %v646
      %v651 = vrsqrt.pop %v647
      %v652 = vrsqrt.pop %v648
      %v653 = vrsqrt.pop %v649
      %v654 = vmul.f32 %v642, %v650
      %v655 = vmul.f32 %v643, %v651
      %v656 = vmul.f32 %v644, %v652
      %v657 = vmul.f32 %v645, %v653
      %vm658 = vcmp.ge.f32.partialorder %v654, 0.0
      %vm659 = vcmp.ge.f32.partialorder %v655, 0.0
      %vm660 = vcmp.ge.f32.partialorder %v656, 0.0
      %vm661 = vcmp.ge.f32.partialorder %v657, 0.0
      %v662 = vmul.f32 %v654, 0.2
      %v663 = vmul.f32 %v655, 0.2
      %v664 = vmul.f32 %v656, 0.2
      %v665 = vmul.f32 %v657, 0.2
      %v666 = vsel %vm658, %v654, %v662
      %v667 = vsel %vm659, %v655, %v663
      %v668 = vsel %vm660, %v656, %v664
      %v669 = vsel %vm661, %v657, %v665
      %v670 = vpack.c.bf16 %v667, %v666
      %v671 = vpack.c.bf16 %v669, %v668
      %v674 = vunpack.c.l.b16 %v670
      %v675 = vunpack.c.h.b16 %v670
      %v676 = vunpack.c.l.b16 %v671
      %v677 = vunpack.c.h.b16 %v671
      %v678 = vpack.c.b16 %v674, %v674
      %v679 = vpack.c.b16 %v675, %v675
      %v680 = vpack.c.b16 %v676, %v676
      %v681 = vpack.c.b16 %v677, %v677
      %686 = vst [vmem:[%s214] sm:$0xf] %v678
      %687 = vst [vmem:[%s214 + $0x4] sm:$0xf] %v679
      %688 = vst [vmem:[%s214 + $0x8] sm:$0xf] %v680
      %689 = vst [vmem:[%s214 + $0xc] sm:$0xf] %v681
      %p690 = scmp.lt.s32.totalorder %s15, 1
      %s691 = scalar_select %p690, %s15, 1
      %s692 = smul.addr %s691, 4
      %s693 = smul.addr %s692, 4
      %s694 = scalar_lea.vmem %s4, %s693
      // Predicated region
      $region37: #{self_attention_forward.6} parent=35 // pred_check
        %p695 = pneg %p127
      $region38: #{self_attention_forward.6} parent=35 // pred_check_branch
        %697 = sbr.rel (%p695) target = $region40
      $region39: #{self_attention_forward.6} parent=35 // pred_region
        _
      $region40: #{self_attention_forward.6} parent=35 // pred_fallthru
        _
    $region36: #{self_attention_forward.6} parent=5 // pred_fallthru
      _
    %p698 = scmp.le.s32.totalorder 2, %s10
    // Predicated region
    $region41: #{self_attention_forward.6} parent=5 // pred_check
      %p699 = pneg %p698
    $region42: #{self_attention_forward.6} parent=5 // pred_check_branch
      %701 = sbr.rel (%p699) target = $region44
    $region43: #{self_attention_forward.6} parent=5 // pred_region
      %s702 = ssub.s32 %s10, 2
      // Predicated region
      $region45: #{self_attention_forward.6} parent=43 // pred_check
        %p703 = pneg %p133
      $region46: #{self_attention_forward.6} parent=43 // pred_check_branch
        %705 = sbr.rel (%p703) target = $region48
      $region47: #{self_attention_forward.6} parent=43 // pred_region
        %p706 = scmp.lt.s32.totalorder %s16, 1
        %s707 = scalar_select %p706, %s16, 1
        %s708 = smul.addr %s707, 4
        %s709 = smul.addr %s708, 4
        %s710 = scalar_lea.vmem %s4, %s709
      $region48: #{self_attention_forward.6} parent=43 // pred_fallthru
        _
    $region44: #{self_attention_forward.6} parent=5 // pred_fallthru
      _
  $region6: #{self_attention_forward.6} parent=0 // loop_footer
    %s14 = sadd.s32 1, %s10
  $region7: #{self_attention_forward.6} parent=0 // loop_footer_branch
    %9 = sbr.rel target = $region3
  $region8: #{self_attention_forward.6} parent=0 // loop_exit
    _

// kernel: self_attention_forward.4
$region0: #{self_attention_forward.4}
  #allocation0 [shape = 'u32[]', space=smem, size = 0x4, offset = 0x4, fixed_abs, tag = 'smem constant byte address 0x4 - core index']
  #allocation1 [shape = 'u32[144,128]{1,0:T(1,128)}', space=vmem, size = 0x12000, scoped, tag = 'internal scratch']
  %s0 = inlined_call_operand.vmem [shape: f32[2,128,3], index: 0, kind: input, shape index: {}]
  %s1 = inlined_call_operand.vmem [shape: f32[2,3,128], index: 1, kind: input, shape index: {}]
  %s2 = inlined_call_operand.vmem [shape: s32[2,128,4], index: 2, kind: output, shape index: {}]
  %s3 = sld [smem:[#allocation0]]
  $region41: #{self_attention_forward.4} parent=0
    _
  %s5 = ssub.s32 1, %s3
  %s6 = scalar_select 0, %s5, %s3
  loop: start=0, step=1, limit=4
  $region2: #{self_attention_forward.4} parent=0 // loop_pre_header
    _
  $region3: #{self_attention_forward.4} parent=0 // loop_header
    %s8 = sphi 0, %s12
    %p9 = scmp.ge.s32.totalorder %s8, 4
    %s15 = sphi 0, %s27
    %s16 = sphi 0, %s23
    %s17 = sphi 0, %s15
    %s18 = sphi 0, %s16
    %s19 = sphi 0, %s17
    %s20 = sphi 0, %s18
    %s32 = sphi 0, %s34
    %s35 = sphi 0, %s32
    %s36 = sphi 0, %s35
    %s52 = sphi 0, %s36
    %s58 = sphi 0, %s60
    %s61 = sphi 0, %s58
    %s62 = sphi 0, %s61
    %s78 = sphi 0, %s62
    %s86 = sphi 0, %s88
    %s89 = sphi 0, %s86
    %s90 = sphi 0, %s89
    %s106 = sphi 0, %s90
  $region4: #{self_attention_forward.4} parent=0 // loop_header_branch
    %11 = sbr.rel (%p9) target = $region8
  $region5: #{self_attention_forward.4} parent=0 // loop_body
    %s13 = ssub.s32 %s8, 1
    %s14 = ssub.s32 %s8, 2
    %s21 = sadd.s32 1, %s16
    %p22 = scmp.ge.s32.totalorder %s21, 1
    %s23 = scalar_select %p22, 0, %s21
    %s24 = sadd.s32 1, %s15
    %s25 = scalar_select %p22, %s24, %s15
    %p26 = scmp.ge.s32.totalorder %s25, 2
    %s27 = scalar_select %p26, 0, %s25
    %s28 = ssub.s32 %s15, %s27
    %s29 = ssub.s32 %s16, %s23
    %s30 = sor.u32 %s28, %s29
    %p31 = scmp.eq.s32.totalorder %s30, 0
    %s33 = sadd.s32 %s32, 1
    %s34 = scalar_select %p31, %s32, %s33
    %p37 = pneg %p31
    %p38 = scmp.eq.s32.totalorder %s8, 1
    %p39 = por %p37, %p38
    %p40 = scmp.ne.s32.totalorder %s32, %s35
    %p41 = scmp.eq.s32.totalorder %s8, 0
    %p42 = por %p40, %p41
    %p43 = scmp.ne.s32.totalorder %s32, %s35
    %p44 = scmp.eq.s32.totalorder %s13, 1
    %p45 = por %p43, %p44
    %p46 = scmp.ne.s32.totalorder %s35, %s36
    %p47 = scmp.eq.s32.totalorder %s13, 0
    %p48 = por %p46, %p47
    %p49 = scmp.ne.s32.totalorder %s35, %s36
    %p50 = scmp.eq.s32.totalorder %s14, 1
    %p51 = por %p49, %p50
    %p53 = scmp.ne.s32.totalorder %s36, %s52
    %p54 = scmp.eq.s32.totalorder %s14, 0
    %p55 = por %p53, %p54
    %s56 = ssub.s32 %s15, %s27
    %p57 = scmp.eq.s32.totalorder %s56, 0
    %s59 = sadd.s32 %s58, 1
    %s60 = scalar_select %p57, %s58, %s59
    %p63 = pneg %p57
    %p64 = scmp.eq.s32.totalorder %s8, 1
    %p65 = por %p63, %p64
    %p66 = scmp.ne.s32.totalorder %s58, %s61
    %p67 = scmp.eq.s32.totalorder %s8, 0
    %p68 = por %p66, %p67
    %p69 = scmp.ne.s32.totalorder %s58, %s61
    %p70 = scmp.eq.s32.totalorder %s13, 1
    %p71 = por %p69, %p70
    %p72 = scmp.ne.s32.totalorder %s61, %s62
    %p73 = scmp.eq.s32.totalorder %s13, 0
    %p74 = por %p72, %p73
    %p75 = scmp.ne.s32.totalorder %s61, %s62
    %p76 = scmp.eq.s32.totalorder %s14, 1
    %p77 = por %p75, %p76
    %p79 = scmp.ne.s32.totalorder %s62, %s78
    %p80 = scmp.eq.s32.totalorder %s14, 0
    %p81 = por %p79, %p80
    %s82 = ssub.s32 %s15, %s27
    %s83 = ssub.s32 %s16, %s23
    %s84 = sor.u32 %s82, %s83
    %p85 = scmp.eq.s32.totalorder %s84, 0
    %s87 = sadd.s32 %s86, 1
    %s88 = scalar_select %p85, %s86, %s87
    %p91 = pneg %p85
    %p92 = scmp.eq.s32.totalorder %s8, 1
    %p93 = por %p91, %p92
    %p94 = scmp.ne.s32.totalorder %s86, %s89
    %p95 = scmp.eq.s32.totalorder %s8, 0
    %p96 = por %p94, %p95
    %p97 = scmp.ne.s32.totalorder %s86, %s89
    %p98 = scmp.eq.s32.totalorder %s13, 1
    %p99 = por %p97, %p98
    %p100 = scmp.ne.s32.totalorder %s89, %s90
    %p101 = scmp.eq.s32.totalorder %s13, 0
    %p102 = por %p100, %p101
    %p103 = scmp.ne.s32.totalorder %s89, %s90
    %p104 = scmp.eq.s32.totalorder %s14, 1
    %p105 = por %p103, %p104
    %p107 = scmp.ne.s32.totalorder %s90, %s106
    %p108 = scmp.eq.s32.totalorder %s14, 0
    %p109 = por %p107, %p108
    %p110 = scmp.le.s32.totalorder 1, %s8
    %p111 = scmp.lt.s32.totalorder %s8, 3
    %p112 = pnand %p110, %p111
    %p113 = pneg %p112
    // Predicated region
    $region9: #{self_attention_forward.4} parent=5 // pred_check
      _
    $region10: #{self_attention_forward.4} parent=5 // pred_check_branch
      %115 = sbr.rel (%p112) target = $region12
    $region11: #{self_attention_forward.4} parent=5 // pred_region
      %s116 = ssub.s32 %s8, 1
    $region12: #{self_attention_forward.4} parent=5 // pred_fallthru
      _
    %p117 = scmp.lt.s32.totalorder %s8, 2
    // Predicated region
    $region13: #{self_attention_forward.4} parent=5 // pred_check
      %p118 = pneg %p117
    $region14: #{self_attention_forward.4} parent=5 // pred_check_branch
      %120 = sbr.rel (%p118) target = $region16
    $region15: #{self_attention_forward.4} parent=5 // pred_region
      // Predicated region
      $region17: #{self_attention_forward.4} parent=15 // pred_check
        %p121 = pneg %p42
      $region18: #{self_attention_forward.4} parent=15 // pred_check_branch
        %123 = sbr.rel (%p121) target = $region20
      $region19: #{self_attention_forward.4} parent=15 // pred_region
        %s124 = smul.u32 16, %s16
        %p125 = scmp.lt.s32.totalorder %s15, 1
        %s126 = scalar_select %p125, %s15, 1
        %p127 = scmp.lt.s32.totalorder %s124, 15
        %s128 = scalar_select %p127, %s124, 15
        %s129 = smul.addr %s126, 16
        %s130 = sadd.s32 %s128, %s129
        %s131 = smul.addr %s130, 8
        %s132 = scalar_lea.vmem %s0, %s131
        %s133 = smul.u32 16, %s16
      $region20: #{self_attention_forward.4} parent=15 // pred_fallthru
        _
      // Predicated region
      $region21: #{self_attention_forward.4} parent=15 // pred_check
        %p134 = pneg %p68
      $region22: #{self_attention_forward.4} parent=15 // pred_check_branch
        %136 = sbr.rel (%p134) target = $region24
      $region23: #{self_attention_forward.4} parent=15 // pred_region
        %p137 = scmp.lt.s32.totalorder %s15, 1
        %s138 = scalar_select %p137, %s15, 1
        %s139 = smul.addr %s138, 4
        %s140 = scalar_lea.vmem %s1, %s139
      $region24: #{self_attention_forward.4} parent=15 // pred_fallthru
        _
    $region16: #{self_attention_forward.4} parent=5 // pred_fallthru
      _
    %p141 = scmp.le.s32.totalorder 1, %s8
    %p142 = scmp.lt.s32.totalorder %s8, 3
    %p143 = pnand %p141, %p142
    %p144 = pneg %p143
    // Predicated region
    $region25: #{self_attention_forward.4} parent=5 // pred_check
      _
    $region26: #{self_attention_forward.4} parent=5 // pred_check_branch
      %146 = sbr.rel (%p143) target = $region28
    $region27: #{self_attention_forward.4} parent=5 // pred_region
      %s147 = ssub.s32 %s8, 1
      %s148 = smul.u32 16, %s18
      %p149 = scmp.lt.s32.totalorder %s17, 1
      %s150 = scalar_select %p149, %s17, 1
      %p151 = scmp.lt.s32.totalorder %s148, 15
      %s152 = scalar_select %p151, %s148, 15
      %s153 = smul.addr %s150, 16
      %s154 = sadd.s32 %s152, %s153
      %s155 = smul.addr %s154, 8
      %s156 = scalar_lea.vmem %s0, %s155
      %p157 = pneg %p48
      %p158 = pneg %p45
      %p159 = scmp.lt.s32.totalorder %s17, 1
      %s160 = scalar_select %p159, %s17, 1
      %s161 = smul.addr %s160, 4
      %s162 = scalar_lea.vmem %s1, %s161
      %p163 = pneg %p74
      %p164 = pneg %p71
      %p165 = pneg %p102
      %p166 = pneg %p99
      %s167 = smul.u32 16, %s18
      %p168 = scmp.lt.s32.totalorder %s17, 1
      %s169 = scalar_select %p168, %s17, 1
      %p170 = scmp.lt.s32.totalorder %s167, 15
      %s171 = scalar_select %p170, %s167, 15
      %s172 = smul.addr %s169, 16
      %s173 = sadd.s32 %s171, %s172
      %s174 = smul.addr %s173, 8
      %s175 = scalar_lea.vmem %s2, %s174
      %s176 = smul.u32 16, %s18
      %p177 = scmp.lt.s32.totalorder %s17, 1
      %s178 = scalar_select %p177, %s17, 1
      %p179 = scmp.lt.s32.totalorder %s176, 15
      %s180 = scalar_select %p179, %s176, 15
      %s181 = smul.addr %s178, 16
      %s182 = sadd.s32 %s180, %s181
      %s183 = smul.addr %s182, 8
      %s184 = scalar_lea.vmem %s0, %s183
      %s185 = smul.u32 16, %s18
      %p186 = scmp.lt.s32.totalorder %s17, 1
      %s187 = scalar_select %p186, %s17, 1
      %s188 = smul.addr %s187, 4
      %s189 = scalar_lea.vmem %s1, %s188
      %s190 = smul.u32 16, %s18
      %p191 = scmp.lt.s32.totalorder %s17, 1
      %s192 = scalar_select %p191, %s17, 1
      %p193 = scmp.lt.s32.totalorder %s190, 15
      %s194 = scalar_select %p193, %s190, 15
      %s195 = smul.addr %s192, 16
      %s196 = sadd.s32 %s194, %s195
      %s197 = smul.addr %s196, 8
      %s198 = scalar_lea.vmem %s2, %s197
      %s199 = smul.u32 16, %s18
      %s200 = smul.u32 %s18, 128
      %v201 = vld [vmem:[%s184] sm:$0xff]
      %v202 = vld [vmem:[%s184 + $0x8] sm:$0xff]
      %v203 = vld [vmem:[%s184 + $0x10] sm:$0xff]
      %v204 = vld [vmem:[%s184 + $0x18] sm:$0xff]
      %v205 = vld [vmem:[%s184 + $0x20] sm:$0xff]
      %v206 = vld [vmem:[%s184 + $0x28] sm:$0xff]
      %v207 = vld [vmem:[%s184 + $0x30] sm:$0xff]
      %v208 = vld [vmem:[%s184 + $0x38] sm:$0xff]
      %v209 = vld [vmem:[%s184 + $0x40] sm:$0xff]
      %v210 = vld [vmem:[%s184 + $0x48] sm:$0xff]
      %v211 = vld [vmem:[%s184 + $0x50] sm:$0xff]
      %v212 = vld [vmem:[%s184 + $0x58] sm:$0xff]
      %v213 = vld [vmem:[%s184 + $0x60] sm:$0xff]
      %v214 = vld [vmem:[%s184 + $0x68] sm:$0xff]
      %v215 = vld [vmem:[%s184 + $0x70] sm:$0xff]
      %v216 = vld [vmem:[%s184 + $0x78] sm:$0xff]
      %v217 = vld [vmem:[%s189] sm:$0x1]
      %219 = vset.pattern.permute.xlu0 0
      %220 = vperm.xlu0 %219, %v201
      %v221 = vpop.permute.xlu0 %220
      %224 = vset.pattern.permute.xlu0 0
      %225 = vperm.xlu0 %224, %v202
      %v226 = vpop.permute.xlu0 %225
      %229 = vset.pattern.permute.xlu0 0
      %230 = vperm.xlu0 %229, %v203
      %v231 = vpop.permute.xlu0 %230
      %234 = vset.pattern.permute.xlu0 0
      %235 = vperm.xlu0 %234, %v204
      %v236 = vpop.permute.xlu0 %235
      %239 = vset.pattern.permute.xlu0 0
      %240 = vperm.xlu0 %239, %v205
      %v241 = vpop.permute.xlu0 %240
      %244 = vset.pattern.permute.xlu0 0
      %245 = vperm.xlu0 %244, %v206
      %v246 = vpop.permute.xlu0 %245
      %249 = vset.pattern.permute.xlu0 0
      %250 = vperm.xlu0 %249, %v207
      %v251 = vpop.permute.xlu0 %250
      %254 = vset.pattern.permute.xlu0 0
      %255 = vperm.xlu0 %254, %v208
      %v256 = vpop.permute.xlu0 %255
      %259 = vset.pattern.permute.xlu0 0
      %260 = vperm.xlu0 %259, %v209
      %v261 = vpop.permute.xlu0 %260
      %264 = vset.pattern.permute.xlu0 0
      %265 = vperm.xlu0 %264, %v210
      %v266 = vpop.permute.xlu0 %265
      %269 = vset.pattern.permute.xlu0 0
      %270 = vperm.xlu0 %269, %v211
      %v271 = vpop.permute.xlu0 %270
      %274 = vset.pattern.permute.xlu0 0
      %275 = vperm.xlu0 %274, %v212
      %v276 = vpop.permute.xlu0 %275
      %279 = vset.pattern.permute.xlu0 0
      %280 = vperm.xlu0 %279, %v213
      %v281 = vpop.permute.xlu0 %280
      %284 = vset.pattern.permute.xlu0 0
      %285 = vperm.xlu0 %284, %v214
      %v286 = vpop.permute.xlu0 %285
      %289 = vset.pattern.permute.xlu0 0
      %290 = vperm.xlu0 %289, %v215
      %v291 = vpop.permute.xlu0 %290
      %294 = vset.pattern.permute.xlu0 0
      %295 = vperm.xlu0 %294, %v216
      %v296 = vpop.permute.xlu0 %295
      %v298 = vlaneseq
      %v299 = vshrl.u32 %v298, 7
      %v300 = vsub.s32 0, %v299
      %v301 = vrot.slane %v217, %v300
      %v302 = vsub.f32 %v221, %v301
      %v303 = vsub.f32 %v226, %v301
      %v304 = vsub.f32 %v231, %v301
      %v305 = vsub.f32 %v236, %v301
      %v306 = vsub.f32 %v241, %v301
      %v307 = vsub.f32 %v246, %v301
      %v308 = vsub.f32 %v251, %v301
      %v309 = vsub.f32 %v256, %v301
      %v310 = vsub.f32 %v261, %v301
      %v311 = vsub.f32 %v266, %v301
      %v312 = vsub.f32 %v271, %v301
      %v313 = vsub.f32 %v276, %v301
      %v314 = vsub.f32 %v281, %v301
      %v315 = vsub.f32 %v286, %v301
      %v316 = vsub.f32 %v291, %v301
      %v317 = vsub.f32 %v296, %v301
      %v318 = vmul.f32 %v302, %v302
      %v319 = vmul.f32 %v303, %v303
      %v320 = vmul.f32 %v304, %v304
      %v321 = vmul.f32 %v305, %v305
      %v322 = vmul.f32 %v306, %v306
      %v323 = vmul.f32 %v307, %v307
      %v324 = vmul.f32 %v308, %v308
      %v325 = vmul.f32 %v309, %v309
      %v326 = vmul.f32 %v310, %v310
      %v327 = vmul.f32 %v311, %v311
      %v328 = vmul.f32 %v312, %v312
      %v329 = vmul.f32 %v313, %v313
      %v330 = vmul.f32 %v314, %v314
      %v331 = vmul.f32 %v315, %v315
      %v332 = vmul.f32 %v316, %v316
      %v333 = vmul.f32 %v317, %v317
      %v334 = vadd.f32 %v318, 0.0
      %v335 = vadd.f32 %v319, 0.0
      %v336 = vadd.f32 %v320, 0.0
      %v337 = vadd.f32 %v321, 0.0
      %v338 = vadd.f32 %v322, 0.0
      %v339 = vadd.f32 %v323, 0.0
      %v340 = vadd.f32 %v324, 0.0
      %v341 = vadd.f32 %v325, 0.0
      %v342 = vadd.f32 %v326, 0.0
      %v343 = vadd.f32 %v327, 0.0
      %v344 = vadd.f32 %v328, 0.0
      %v345 = vadd.f32 %v329, 0.0
      %v346 = vadd.f32 %v330, 0.0
      %v347 = vadd.f32 %v331, 0.0
      %v348 = vadd.f32 %v332, 0.0
      %v349 = vadd.f32 %v333, 0.0
      %v350 = vld [vmem:[%s189 + $0x1] sm:$0x1]
      %351 = vset.pattern.permute.xlu0 1
      %352 = vperm.xlu0 %351, %v201
      %v353 = vpop.permute.xlu0 %352
      %355 = vset.pattern.permute.xlu0 1
      %356 = vperm.xlu0 %355, %v202
      %v357 = vpop.permute.xlu0 %356
      %359 = vset.pattern.permute.xlu0 1
      %360 = vperm.xlu0 %359, %v203
      %v361 = vpop.permute.xlu0 %360
      %363 = vset.pattern.permute.xlu0 1
      %364 = vperm.xlu0 %363, %v204
      %v365 = vpop.permute.xlu0 %364
      %367 = vset.pattern.permute.xlu0 1
      %368 = vperm.xlu0 %367, %v205
      %v369 = vpop.permute.xlu0 %368
      %371 = vset.pattern.permute.xlu0 1
      %372 = vperm.xlu0 %371, %v206
      %v373 = vpop.permute.xlu0 %372
      %375 = vset.pattern.permute.xlu0 1
      %376 = vperm.xlu0 %375, %v207
      %v377 = vpop.permute.xlu0 %376
      %379 = vset.pattern.permute.xlu0 1
      %380 = vperm.xlu0 %379, %v208
      %v381 = vpop.permute.xlu0 %380
      %383 = vset.pattern.permute.xlu0 1
      %384 = vperm.xlu0 %383, %v209
      %v385 = vpop.permute.xlu0 %384
      %387 = vset.pattern.permute.xlu0 1
      %388 = vperm.xlu0 %387, %v210
      %v389 = vpop.permute.xlu0 %388
      %391 = vset.pattern.permute.xlu0 1
      %392 = vperm.xlu0 %391, %v211
      %v393 = vpop.permute.xlu0 %392
      %395 = vset.pattern.permute.xlu0 1
      %396 = vperm.xlu0 %395, %v212
      %v397 = vpop.permute.xlu0 %396
      %399 = vset.pattern.permute.xlu0 1
      %400 = vperm.xlu0 %399, %v213
      %v401 = vpop.permute.xlu0 %400
      %403 = vset.pattern.permute.xlu0 1
      %404 = vperm.xlu0 %403, %v214
      %v405 = vpop.permute.xlu0 %404
      %407 = vset.pattern.permute.xlu0 1
      %408 = vperm.xlu0 %407, %v215
      %v409 = vpop.permute.xlu0 %408
      %411 = vset.pattern.permute.xlu0 1
      %412 = vperm.xlu0 %411, %v216
      %v413 = vpop.permute.xlu0 %412
      %v415 = vlaneseq
      %v416 = vshrl.u32 %v415, 7
      %v417 = vsub.s32 0, %v416
      %v418 = vrot.slane %v350, %v417
      %v419 = vsub.f32 %v353, %v418
      %v420 = vsub.f32 %v357, %v418
      %v421 = vsub.f32 %v361, %v418
      %v422 = vsub.f32 %v365, %v418
      %v423 = vsub.f32 %v369, %v418
      %v424 = vsub.f32 %v373, %v418
      %v425 = vsub.f32 %v377, %v418
      %v426 = vsub.f32 %v381, %v418
      %v427 = vsub.f32 %v385, %v418
      %v428 = vsub.f32 %v389, %v418
      %v429 = vsub.f32 %v393, %v418
      %v430 = vsub.f32 %v397, %v418
      %v431 = vsub.f32 %v401, %v418
      %v432 = vsub.f32 %v405, %v418
      %v433 = vsub.f32 %v409, %v418
      %v434 = vsub.f32 %v413, %v418
      %v435 = vmul.f32 %v419, %v419
      %v436 = vmul.f32 %v420, %v420
      %v437 = vmul.f32 %v421, %v421
      %v438 = vmul.f32 %v422, %v422
      %v439 = vmul.f32 %v423, %v423
      %v440 = vmul.f32 %v424, %v424
      %v441 = vmul.f32 %v425, %v425
      %v442 = vmul.f32 %v426, %v426
      %v443 = vmul.f32 %v427, %v427
      %v444 = vmul.f32 %v428, %v428
      %v445 = vmul.f32 %v429, %v429
      %v446 = vmul.f32 %v430, %v430
      %v447 = vmul.f32 %v431, %v431
      %v448 = vmul.f32 %v432, %v432
      %v449 = vmul.f32 %v433, %v433
      %v450 = vmul.f32 %v434, %v434
      %v451 = vadd.f32 %v334, %v435
      %v452 = vadd.f32 %v335, %v436
      %v453 = vadd.f32 %v336, %v437
      %v454 = vadd.f32 %v337, %v438
      %v455 = vadd.f32 %v338, %v439
      %v456 = vadd.f32 %v339, %v440
      %v457 = vadd.f32 %v340, %v441
      %v458 = vadd.f32 %v341, %v442
      %v459 = vadd.f32 %v342, %v443
      %v460 = vadd.f32 %v343, %v444
      %v461 = vadd.f32 %v344, %v445
      %v462 = vadd.f32 %v345, %v446
      %v463 = vadd.f32 %v346, %v447
      %v464 = vadd.f32 %v347, %v448
      %v465 = vadd.f32 %v348, %v449
      %v466 = vadd.f32 %v349, %v450
      %v467 = vld [vmem:[%s189 + $0x2] sm:$0x1]
      %468 = vset.pattern.permute.xlu0 2
      %469 = vperm.xlu0 %468, %v201
      %v470 = vpop.permute.xlu0 %469
      %472 = vset.pattern.permute.xlu0 2
      %473 = vperm.xlu0 %472, %v202
      %v474 = vpop.permute.xlu0 %473
      %476 = vset.pattern.permute.xlu0 2
      %477 = vperm.xlu0 %476, %v203
      %v478 = vpop.permute.xlu0 %477
      %480 = vset.pattern.permute.xlu0 2
      %481 = vperm.xlu0 %480, %v204
      %v482 = vpop.permute.xlu0 %481
      %484 = vset.pattern.permute.xlu0 2
      %485 = vperm.xlu0 %484, %v205
      %v486 = vpop.permute.xlu0 %485
      %488 = vset.pattern.permute.xlu0 2
      %489 = vperm.xlu0 %488, %v206
      %v490 = vpop.permute.xlu0 %489
      %492 = vset.pattern.permute.xlu0 2
      %493 = vperm.xlu0 %492, %v207
      %v494 = vpop.permute.xlu0 %493
      %496 = vset.pattern.permute.xlu0 2
      %497 = vperm.xlu0 %496, %v208
      %v498 = vpop.permute.xlu0 %497
      %500 = vset.pattern.permute.xlu0 2
      %501 = vperm.xlu0 %500, %v209
      %v502 = vpop.permute.xlu0 %501
      %504 = vset.pattern.permute.xlu0 2
      %505 = vperm.xlu0 %504, %v210
      %v506 = vpop.permute.xlu0 %505
      %508 = vset.pattern.permute.xlu0 2
      %509 = vperm.xlu0 %508, %v211
      %v510 = vpop.permute.xlu0 %509
      %512 = vset.pattern.permute.xlu0 2
      %513 = vperm.xlu0 %512, %v212
      %v514 = vpop.permute.xlu0 %513
      %516 = vset.pattern.permute.xlu0 2
      %517 = vperm.xlu0 %516, %v213
      %v518 = vpop.permute.xlu0 %517
      %520 = vset.pattern.permute.xlu0 2
      %521 = vperm.xlu0 %520, %v214
      %v522 = vpop.permute.xlu0 %521
      %524 = vset.pattern.permute.xlu0 2
      %525 = vperm.xlu0 %524, %v215
      %v526 = vpop.permute.xlu0 %525
      %528 = vset.pattern.permute.xlu0 2
      %529 = vperm.xlu0 %528, %v216
      %v530 = vpop.permute.xlu0 %529
      %v532 = vlaneseq
      %v533 = vshrl.u32 %v532, 7
      %v534 = vsub.s32 0, %v533
      %v535 = vrot.slane %v467, %v534
      %v536 = vsub.f32 %v470, %v535
      %v537 = vsub.f32 %v474, %v535
      %v538 = vsub.f32 %v478, %v535
      %v539 = vsub.f32 %v482, %v535
      %v540 = vsub.f32 %v486, %v535
      %v541 = vsub.f32 %v490, %v535
      %v542 = vsub.f32 %v494, %v535
      %v543 = vsub.f32 %v498, %v535
      %v544 = vsub.f32 %v502, %v535
      %v545 = vsub.f32 %v506, %v535
      %v546 = vsub.f32 %v510, %v535
      %v547 = vsub.f32 %v514, %v535
      %v548 = vsub.f32 %v518, %v535
      %v549 = vsub.f32 %v522, %v535
      %v550 = vsub.f32 %v526, %v535
      %v551 = vsub.f32 %v530, %v535
      %v552 = vmul.f32 %v536, %v536
      %v553 = vmul.f32 %v537, %v537
      %v554 = vmul.f32 %v538, %v538
      %v555 = vmul.f32 %v539, %v539
      %v556 = vmul.f32 %v540, %v540
      %v557 = vmul.f32 %v541, %v541
      %v558 = vmul.f32 %v542, %v542
      %v559 = vmul.f32 %v543, %v543
      %v560 = vmul.f32 %v544, %v544
      %v561 = vmul.f32 %v545, %v545
      %v562 = vmul.f32 %v546, %v546
      %v563 = vmul.f32 %v547, %v547
      %v564 = vmul.f32 %v548, %v548
      %v565 = vmul.f32 %v549, %v549
      %v566 = vmul.f32 %v550, %v550
      %v567 = vmul.f32 %v551, %v551
      %v568 = vadd.f32 %v451, %v552
      %v569 = vadd.f32 %v452, %v553
      %v570 = vadd.f32 %v453, %v554
      %v571 = vadd.f32 %v454, %v555
      %v572 = vadd.f32 %v455, %v556
      %v573 = vadd.f32 %v456, %v557
      %v574 = vadd.f32 %v457, %v558
      %v575 = vadd.f32 %v458, %v559
      %v576 = vadd.f32 %v459, %v560
      %v577 = vadd.f32 %v460, %v561
      %v578 = vadd.f32 %v461, %v562
      %v579 = vadd.f32 %v462, %v563
      %v580 = vadd.f32 %v463, %v564
      %v581 = vadd.f32 %v464, %v565
      %v582 = vadd.f32 %v465, %v566
      %v583 = vadd.f32 %v466, %v567
      %v584 = vlaneseq
      %v585 = vand.u32 %v584, 127
      %v586 = vlaneseq
      %v587 = vshrl.u32 %v586, 7
      %v588 = vadd.s32 %v587, 8
      %v589 = vadd.s32 %v587, 16
      %v590 = vadd.s32 %v587, 24
      %v591 = vadd.s32 %v587, 32
      %v592 = vadd.s32 %v587, 40
      %v593 = vadd.s32 %v587, 48
      %v594 = vadd.s32 %v587, 56
      %v595 = vadd.s32 %v587, 64
      %v596 = vadd.s32 %v587, 72
      %v597 = vadd.s32 %v587, 80
      %v598 = vadd.s32 %v587, 88
      %v599 = vadd.s32 %v587, 96
      %v600 = vadd.s32 %v587, 104
      %v601 = vadd.s32 %v587, 112
      %v602 = vadd.s32 %v587, 120
      %v603 = vstv %s200
      %v604 = vadd.s32 %v587, %v603
      %v605 = vadd.s32 %v588, %v603
      %v606 = vadd.s32 %v589, %v603
      %v607 = vadd.s32 %v590, %v603
      %v608 = vadd.s32 %v591, %v603
      %v609 = vadd.s32 %v592, %v603
      %v610 = vadd.s32 %v593, %v603
      %v611 = vadd.s32 %v594, %v603
      %v612 = vadd.s32 %v595, %v603
      %v613 = vadd.s32 %v596, %v603
      %v614 = vadd.s32 %v597, %v603
      %v615 = vadd.s32 %v598, %v603
      %v616 = vadd.s32 %v599, %v603
      %v617 = vadd.s32 %v600, %v603
      %v618 = vadd.s32 %v601, %v603
      %v619 = vadd.s32 %v602, %v603
      %vm620 = vcmp.eq.s32.totalorder %v585, %v604
      %vm621 = vcmp.eq.s32.totalorder %v585, %v605
      %vm622 = vcmp.eq.s32.totalorder %v585, %v606
      %vm623 = vcmp.eq.s32.totalorder %v585, %v607
      %vm624 = vcmp.eq.s32.totalorder %v585, %v608
      %vm625 = vcmp.eq.s32.totalorder %v585, %v609
      %vm626 = vcmp.eq.s32.totalorder %v585, %v610
      %vm627 = vcmp.eq.s32.totalorder %v585, %v611
      %vm628 = vcmp.eq.s32.totalorder %v585, %v612
      %vm629 = vcmp.eq.s32.totalorder %v585, %v613
      %vm630 = vcmp.eq.s32.totalorder %v585, %v614
      %vm631 = vcmp.eq.s32.totalorder %v585, %v615
      %vm632 = vcmp.eq.s32.totalorder %v585, %v616
      %vm633 = vcmp.eq.s32.totalorder %v585, %v617
      %vm634 = vcmp.eq.s32.totalorder %v585, %v618
      %vm635 = vcmp.eq.s32.totalorder %v585, %v619
      %v636 = vsel %vm620, inf, %v568
      %v637 = vsel %vm621, inf, %v569
      %v638 = vsel %vm622, inf, %v570
      %v639 = vsel %vm623, inf, %v571
      %v640 = vsel %vm624, inf, %v572
      %v641 = vsel %vm625, inf, %v573
      %v642 = vsel %vm626, inf, %v574
      %v643 = vsel %vm627, inf, %v575
      %v644 = vsel %vm628, inf, %v576
      %v645 = vsel %vm629, inf, %v577
      %v646 = vsel %vm630, inf, %v578
      %v647 = vsel %vm631, inf, %v579
      %v648 = vsel %vm632, inf, %v580
      %v649 = vsel %vm633, inf, %v581
      %v650 = vsel %vm634, inf, %v582
      %v651 = vsel %vm635, inf, %v583
      %652 = vmin.xlane.f32.xlu0 %v636
      %v653 = vpop.xlane.xlu0 %652
      %654 = vmin.xlane.f32.xlu0 %v637
      %v655 = vpop.xlane.xlu0 %654
      %656 = vmin.xlane.f32.xlu0 %v638
      %v657 = vpop.xlane.xlu0 %656
      %658 = vmin.xlane.f32.xlu0 %v639
      %v659 = vpop.xlane.xlu0 %658
      %660 = vmin.xlane.f32.xlu0 %v640
      %v661 = vpop.xlane.xlu0 %660
      %662 = vmin.xlane.f32.xlu0 %v641
      %v663 = vpop.xlane.xlu0 %662
      %664 = vmin.xlane.f32.xlu0 %v642
      %v665 = vpop.xlane.xlu0 %664
      %666 = vmin.xlane.f32.xlu0 %v643
      %v667 = vpop.xlane.xlu0 %666
      %668 = vmin.xlane.f32.xlu0 %v644
      %v669 = vpop.xlane.xlu0 %668
      %670 = vmin.xlane.f32.xlu0 %v645
      %v671 = vpop.xlane.xlu0 %670
      %672 = vmin.xlane.f32.xlu0 %v646
      %v673 = vpop.xlane.xlu0 %672
      %674 = vmin.xlane.f32.xlu0 %v647
      %v675 = vpop.xlane.xlu0 %674
      %676 = vmin.xlane.f32.xlu0 %v648
      %v677 = vpop.xlane.xlu0 %676
      %678 = vmin.xlane.f32.xlu0 %v649
      %v679 = vpop.xlane.xlu0 %678
      %680 = vmin.xlane.f32.xlu0 %v650
      %v681 = vpop.xlane.xlu0 %680
      %682 = vmin.xlane.f32.xlu0 %v651
      %v683 = vpop.xlane.xlu0 %682
      %vm684 = vcmp.eq.f32.partialorder %v636, %v653
      %vm685 = vcmp.eq.f32.partialorder %v637, %v655
      %vm686 = vcmp.eq.f32.partialorder %v638, %v657
      %vm687 = vcmp.eq.f32.partialorder %v639, %v659
      %vm688 = vcmp.eq.f32.partialorder %v640, %v661
      %vm689 = vcmp.eq.f32.partialorder %v641, %v663
      %vm690 = vcmp.eq.f32.partialorder %v642, %v665
      %vm691 = vcmp.eq.f32.partialorder %v643, %v667
      %vm692 = vcmp.eq.f32.partialorder %v644, %v669
      %vm693 = vcmp.eq.f32.partialorder %v645, %v671
      %vm694 = vcmp.eq.f32.partialorder %v646, %v673
      %vm695 = vcmp.eq.f32.partialorder %v647, %v675
      %vm696 = vcmp.eq.f32.partialorder %v648, %v677
      %vm697 = vcmp.eq.f32.partialorder %v649, %v679
      %vm698 = vcmp.eq.f32.partialorder %v650, %v681
      %vm699 = vcmp.eq.f32.partialorder %v651, %v683
      %v700 = vsel %vm684, %v585, 128
      %v701 = vsel %vm685, %v585, 128
      %v702 = vsel %vm686, %v585, 128
      %v703 = vsel %vm687, %v585, 128
      %v704 = vsel %vm688, %v585, 128
      %v705 = vsel %vm689, %v585, 128
      %v706 = vsel %vm690, %v585, 128
      %v707 = vsel %vm691, %v585, 128
      %v708 = vsel %vm692, %v585, 128
      %v709 = vsel %vm693, %v585, 128
      %v710 = vsel %vm694, %v585, 128
      %v711 = vsel %vm695, %v585, 128
      %v712 = vsel %vm696, %v585, 128
      %v713 = vsel %vm697, %v585, 128
      %v714 = vsel %vm698, %v585, 128
      %v715 = vsel %vm699, %v585, 128
      %v716 = vand.u32 %v700, 65535
      %v717 = vshra.s32 %v700, 16
      %v718 = vcvt.s32.f32 %v716
      %v719 = vcvt.s32.f32 %v717
      %720 = vmin.xlane.f32.xlu0 %v719
      %v721 = vpop.xlane.xlu0 %720
      %vm722 = vcmp.eq.f32.partialorder %v719, %v721
      %v723 = vsel %vm722, %v718, inf
      %724 = vmin.xlane.f32.xlu0 %v723
      %v725 = vpop.xlane.xlu0 %724
      %v726 = vcvt.f32.s32 %v725
      %v727 = vcvt.f32.s32 %v721
      %v728 = vshll.u32 %v727, 16
      %v729 = vadd.s32 %v728, %v726
      %v730 = vand.u32 %v701, 65535
      %v731 = vshra.s32 %v701, 16
      %v732 = vcvt.s32.f32 %v730
      %v733 = vcvt.s32.f32 %v731
      %734 = vmin.xlane.f32.xlu0 %v733
      %v735 = vpop.xlane.xlu0 %734
      %vm736 = vcmp.eq.f32.partialorder %v733, %v735
      %v737 = vsel %vm736, %v732, inf
      %738 = vmin.xlane.f32.xlu0 %v737
      %v739 = vpop.xlane.xlu0 %738
      %v740 = vcvt.f32.s32 %v739
      %v741 = vcvt.f32.s32 %v735
      %v742 = vshll.u32 %v741, 16
      %v743 = vadd.s32 %v742, %v740
      %v744 = vand.u32 %v702, 65535
      %v745 = vshra.s32 %v702, 16
      %v746 = vcvt.s32.f32 %v744
      %v747 = vcvt.s32.f32 %v745
      %748 = vmin.xlane.f32.xlu0 %v747
      %v749 = vpop.xlane.xlu0 %748
      %vm750 = vcmp.eq.f32.partialorder %v747, %v749
      %v751 = vsel %vm750, %v746, inf
      %752 = vmin.xlane.f32.xlu0 %v751
      %v753 = vpop.xlane.xlu0 %752
      %v754 = vcvt.f32.s32 %v753
      %v755 = vcvt.f32.s32 %v749
      %v756 = vshll.u32 %v755, 16
      %v757 = vadd.s32 %v756, %v754
      %v758 = vand.u32 %v703, 65535
      %v759 = vshra.s32 %v703, 16
      %v760 = vcvt.s32.f32 %v758
      %v761 = vcvt.s32.f32 %v759
      %762 = vmin.xlane.f32.xlu0 %v761
      %v763 = vpop.xlane.xlu0 %762
      %vm764 = vcmp.eq.f32.partialorder %v761, %v763
      %v765 = vsel %vm764, %v760, inf
      %766 = vmin.xlane.f32.xlu0 %v765
      %v767 = vpop.xlane.xlu0 %766
      %v768 = vcvt.f32.s32 %v767
      %v769 = vcvt.f32.s32 %v763
      %v770 = vshll.u32 %v769, 16
      %v771 = vadd.s32 %v770, %v768
      %v772 = vand.u32 %v704, 65535
      %v773 = vshra.s32 %v704, 16
      %v774 = vcvt.s32.f32 %v772
      %v775 = vcvt.s32.f32 %v773
      %776 = vmin.xlane.f32.xlu0 %v775
      %v777 = vpop.xlane.xlu0 %776
      %vm778 = vcmp.eq.f32.partialorder %v775, %v777
      %v779 = vsel %vm778, %v774, inf
      %780 = vmin.xlane.f32.xlu0 %v779
      %v781 = vpop.xlane.xlu0 %780
      %v782 = vcvt.f32.s32 %v781
      %v783 = vcvt.f32.s32 %v777
      %v784 = vshll.u32 %v783, 16
      %v785 = vadd.s32 %v784, %v782
      %v786 = vand.u32 %v705, 65535
      %v787 = vshra.s32 %v705, 16
      %v788 = vcvt.s32.f32 %v786
      %v789 = vcvt.s32.f32 %v787
      %790 = vmin.xlane.f32.xlu0 %v789
      %v791 = vpop.xlane.xlu0 %790
      %vm792 = vcmp.eq.f32.partialorder %v789, %v791
      %v793 = vsel %vm792, %v788, inf
      %794 = vmin.xlane.f32.xlu0 %v793
      %v795 = vpop.xlane.xlu0 %794
      %v796 = vcvt.f32.s32 %v795
      %v797 = vcvt.f32.s32 %v791
      %v798 = vshll.u32 %v797, 16
      %v799 = vadd.s32 %v798, %v796
      %v800 = vand.u32 %v706, 65535
      %v801 = vshra.s32 %v706, 16
      %v802 = vcvt.s32.f32 %v800
      %v803 = vcvt.s32.f32 %v801
      %804 = vmin.xlane.f32.xlu0 %v803
      %v805 = vpop.xlane.xlu0 %804
      %vm806 = vcmp.eq.f32.partialorder %v803, %v805
      %v807 = vsel %vm806, %v802, inf
      %808 = vmin.xlane.f32.xlu0 %v807
      %v809 = vpop.xlane.xlu0 %808
      %v810 = vcvt.f32.s32 %v809
      %v811 = vcvt.f32.s32 %v805
      %v812 = vshll.u32 %v811, 16
      %v813 = vadd.s32 %v812, %v810
      %v814 = vand.u32 %v707, 65535
      %v815 = vshra.s32 %v707, 16
      %v816 = vcvt.s32.f32 %v814
      %v817 = vcvt.s32.f32 %v815
      %818 = vmin.xlane.f32.xlu0 %v817
      %v819 = vpop.xlane.xlu0 %818
      %vm820 = vcmp.eq.f32.partialorder %v817, %v819
      %v821 = vsel %vm820, %v816, inf
      %822 = vmin.xlane.f32.xlu0 %v821
      %v823 = vpop.xlane.xlu0 %822
      %v824 = vcvt.f32.s32 %v823
      %v825 = vcvt.f32.s32 %v819
      %v826 = vshll.u32 %v825, 16
      %v827 = vadd.s32 %v826, %v824
      %v828 = vand.u32 %v708, 65535
      %v829 = vshra.s32 %v708, 16
      %v830 = vcvt.s32.f32 %v828
      %v831 = vcvt.s32.f32 %v829
      %832 = vmin.xlane.f32.xlu0 %v831
      %v833 = vpop.xlane.xlu0 %832
      %vm834 = vcmp.eq.f32.partialorder %v831, %v833
      %v835 = vsel %vm834, %v830, inf
      %836 = vmin.xlane.f32.xlu0 %v835
      %v837 = vpop.xlane.xlu0 %836
      %v838 = vcvt.f32.s32 %v837
      %v839 = vcvt.f32.s32 %v833
      %v840 = vshll.u32 %v839, 16
      %v841 = vadd.s32 %v840, %v838
      %v842 = vand.u32 %v709, 65535
      %v843 = vshra.s32 %v709, 16
      %v844 = vcvt.s32.f32 %v842
      %v845 = vcvt.s32.f32 %v843
      %846 = vmin.xlane.f32.xlu0 %v845
      %v847 = vpop.xlane.xlu0 %846
      %vm848 = vcmp.eq.f32.partialorder %v845, %v847
      %v849 = vsel %vm848, %v844, inf
      %850 = vmin.xlane.f32.xlu0 %v849
      %v851 = vpop.xlane.xlu0 %850
      %v852 = vcvt.f32.s32 %v851
      %v853 = vcvt.f32.s32 %v847
      %v854 = vshll.u32 %v853, 16
      %v855 = vadd.s32 %v854, %v852
      %v856 = vand.u32 %v710, 65535
      %v857 = vshra.s32 %v710, 16
      %v858 = vcvt.s32.f32 %v856
      %v859 = vcvt.s32.f32 %v857
      %860 = vmin.xlane.f32.xlu0 %v859
      %v861 = vpop.xlane.xlu0 %860
      %vm862 = vcmp.eq.f32.partialorder %v859, %v861
      %v863 = vsel %vm862, %v858, inf
      %864 = vmin.xlane.f32.xlu0 %v863
      %v865 = vpop.xlane.xlu0 %864
      %v866 = vcvt.f32.s32 %v865
      %v867 = vcvt.f32.s32 %v861
      %v868 = vshll.u32 %v867, 16
      %v869 = vadd.s32 %v868, %v866
      %v870 = vand.u32 %v711, 65535
      %v871 = vshra.s32 %v711, 16
      %v872 = vcvt.s32.f32 %v870
      %v873 = vcvt.s32.f32 %v871
      %874 = vmin.xlane.f32.xlu0 %v873
      %v875 = vpop.xlane.xlu0 %874
      %vm876 = vcmp.eq.f32.partialorder %v873, %v875
      %v877 = vsel %vm876, %v872, inf
      %878 = vmin.xlane.f32.xlu0 %v877
      %v879 = vpop.xlane.xlu0 %878
      %v880 = vcvt.f32.s32 %v879
      %v881 = vcvt.f32.s32 %v875
      %v882 = vshll.u32 %v881, 16
      %v883 = vadd.s32 %v882, %v880
      %v884 = vand.u32 %v712, 65535
      %v885 = vshra.s32 %v712, 16
      %v886 = vcvt.s32.f32 %v884
      %v887 = vcvt.s32.f32 %v885
      %888 = vmin.xlane.f32.xlu0 %v887
      %v889 = vpop.xlane.xlu0 %888
      %vm890 = vcmp.eq.f32.partialorder %v887, %v889
      %v891 = vsel %vm890, %v886, inf
      %892 = vmin.xlane.f32.xlu0 %v891
      %v893 = vpop.xlane.xlu0 %892
      %v894 = vcvt.f32.s32 %v893
      %v895 = vcvt.f32.s32 %v889
      %v896 = vshll.u32 %v895, 16
      %v897 = vadd.s32 %v896, %v894
      %v898 = vand.u32 %v713, 65535
      %v899 = vshra.s32 %v713, 16
      %v900 = vcvt.s32.f32 %v898
      %v901 = vcvt.s32.f32 %v899
      %902 = vmin.xlane.f32.xlu0 %v901
      %v903 = vpop.xlane.xlu0 %902
      %vm904 = vcmp.eq.f32.partialorder %v901, %v903
      %v905 = vsel %vm904, %v900, inf
      %906 = vmin.xlane.f32.xlu0 %v905
      %v907 = vpop.xlane.xlu0 %906
      %v908 = vcvt.f32.s32 %v907
      %v909 = vcvt.f32.s32 %v903
      %v910 = vshll.u32 %v909, 16
      %v911 = vadd.s32 %v910, %v908
      %v912 = vand.u32 %v714, 65535
      %v913 = vshra.s32 %v714, 16
      %v914 = vcvt.s32.f32 %v912
      %v915 = vcvt.s32.f32 %v913
      %916 = vmin.xlane.f32.xlu0 %v915
      %v917 = vpop.xlane.xlu0 %916
      %vm918 = vcmp.eq.f32.partialorder %v915, %v917
      %v919 = vsel %vm918, %v914, inf
      %920 = vmin.xlane.f32.xlu0 %v919
      %v921 = vpop.xlane.xlu0 %920
      %v922 = vcvt.f32.s32 %v921
      %v923 = vcvt.f32.s32 %v917
      %v924 = vshll.u32 %v923, 16
      %v925 = vadd.s32 %v924, %v922
      %v926 = vand.u32 %v715, 65535
      %v927 = vshra.s32 %v715, 16
      %v928 = vcvt.s32.f32 %v926
      %v929 = vcvt.s32.f32 %v927
      %930 = vmin.xlane.f32.xlu0 %v929
      %v931 = vpop.xlane.xlu0 %930
      %vm932 = vcmp.eq.f32.partialorder %v929, %v931
      %v933 = vsel %vm932, %v928, inf
      %934 = vmin.xlane.f32.xlu0 %v933
      %v935 = vpop.xlane.xlu0 %934
      %v936 = vcvt.f32.s32 %v935
      %v937 = vcvt.f32.s32 %v931
      %v938 = vshll.u32 %v937, 16
      %v939 = vadd.s32 %v938, %v936
      %vm940 = vcmask 7168
      %941 = vst.msk [vmem:[%s198] sm:$0xff] %vm940, %v729
      %942 = vst.msk [vmem:[%s198 + $0x8] sm:$0xff] %vm940, %v743
      %943 = vst.msk [vmem:[%s198 + $0x10] sm:$0xff] %vm940, %v757
      %944 = vst.msk [vmem:[%s198 + $0x18] sm:$0xff] %vm940, %v771
      %945 = vst.msk [vmem:[%s198 + $0x20] sm:$0xff] %vm940, %v785
      %946 = vst.msk [vmem:[%s198 + $0x28] sm:$0xff] %vm940, %v799
      %947 = vst.msk [vmem:[%s198 + $0x30] sm:$0xff] %vm940, %v813
      %948 = vst.msk [vmem:[%s198 + $0x38] sm:$0xff] %vm940, %v827
      %949 = vst.msk [vmem:[%s198 + $0x40] sm:$0xff] %vm940, %v841
      %950 = vst.msk [vmem:[%s198 + $0x48] sm:$0xff] %vm940, %v855
      %951 = vst.msk [vmem:[%s198 + $0x50] sm:$0xff] %vm940, %v869
      %952 = vst.msk [vmem:[%s198 + $0x58] sm:$0xff] %vm940, %v883
      %953 = vst.msk [vmem:[%s198 + $0x60] sm:$0xff] %vm940, %v897
      %954 = vst.msk [vmem:[%s198 + $0x68] sm:$0xff] %vm940, %v911
      %955 = vst.msk [vmem:[%s198 + $0x70] sm:$0xff] %vm940, %v925
      %956 = vst.msk [vmem:[%s198 + $0x78] sm:$0xff] %vm940, %v939
      %vm957 = vcmp.eq.s32.totalorder %v585, %v729
      %vm958 = vcmp.eq.s32.totalorder %v585, %v743
      %vm959 = vcmp.eq.s32.totalorder %v585, %v757
      %vm960 = vcmp.eq.s32.totalorder %v585, %v771
      %vm961 = vcmp.eq.s32.totalorder %v585, %v785
      %vm962 = vcmp.eq.s32.totalorder %v585, %v799
      %vm963 = vcmp.eq.s32.totalorder %v585, %v813
      %vm964 = vcmp.eq.s32.totalorder %v585, %v827
      %vm965 = vcmp.eq.s32.totalorder %v585, %v841
      %vm966 = vcmp.eq.s32.totalorder %v585, %v855
      %vm967 = vcmp.eq.s32.totalorder %v585, %v869
      %vm968 = vcmp.eq.s32.totalorder %v585, %v883
      %vm969 = vcmp.eq.s32.totalorder %v585, %v897
      %vm970 = vcmp.eq.s32.totalorder %v585, %v911
      %vm971 = vcmp.eq.s32.totalorder %v585, %v925
      %vm972 = vcmp.eq.s32.totalorder %v585, %v939
      %v973 = vsel %vm957, inf, %v636
      %v974 = vsel %vm958, inf, %v637
      %v975 = vsel %vm959, inf, %v638
      %v976 = vsel %vm960, inf, %v639
      %v977 = vsel %vm961, inf, %v640
      %v978 = vsel %vm962, inf, %v641
      %v979 = vsel %vm963, inf, %v642
      %v980 = vsel %vm964, inf, %v643
      %v981 = vsel %vm965, inf, %v644
      %v982 = vsel %vm966, inf, %v645
      %v983 = vsel %vm967, inf, %v646
      %v984 = vsel %vm968, inf, %v647
      %v985 = vsel %vm969, inf, %v648
      %v986 = vsel %vm970, inf, %v649
      %v987 = vsel %vm971, inf, %v650
      %v988 = vsel %vm972, inf, %v651
      %989 = vmin.xlane.f32.xlu0 %v973
      %v990 = vpop.xlane.xlu0 %989
      %991 = vmin.xlane.f32.xlu0 %v974
      %v992 = vpop.xlane.xlu0 %991
      %993 = vmin.xlane.f32.xlu0 %v975
      %v994 = vpop.xlane.xlu0 %993
      %995 = vmin.xlane.f32.xlu0 %v976
      %v996 = vpop.xlane.xlu0 %995
      %997 = vmin.xlane.f32.xlu0 %v977
      %v998 = vpop.xlane.xlu0 %997
      %999 = vmin.xlane.f32.xlu0 %v978
      %v1000 = vpop.xlane.xlu0 %999
      %1001 = vmin.xlane.f32.xlu0 %v979
      %v1002 = vpop.xlane.xlu0 %1001
      %1003 = vmin.xlane.f32.xlu0 %v980
      %v1004 = vpop.xlane.xlu0 %1003
      %1005 = vmin.xlane.f32.xlu0 %v981
      %v1006 = vpop.xlane.xlu0 %1005
      %1007 = vmin.xlane.f32.xlu0 %v982
      %v1008 = vpop.xlane.xlu0 %1007
      %1009 = vmin.xlane.f32.xlu0 %v983
      %v1010 = vpop.xlane.xlu0 %1009
      %1011 = vmin.xlane.f32.xlu0 %v984
      %v1012 = vpop.xlane.xlu0 %1011
      %1013 = vmin.xlane.f32.xlu0 %v985
      %v1014 = vpop.xlane.xlu0 %1013
      %1015 = vmin.xlane.f32.xlu0 %v986
      %v1016 = vpop.xlane.xlu0 %1015
      %1017 = vmin.xlane.f32.xlu0 %v987
      %v1018 = vpop.xlane.xlu0 %1017
      %1019 = vmin.xlane.f32.xlu0 %v988
      %v1020 = vpop.xlane.xlu0 %1019
      %vm1021 = vcmp.eq.f32.partialorder %v973, %v990
      %vm1022 = vcmp.eq.f32.partialorder %v974, %v992
      %vm1023 = vcmp.eq.f32.partialorder %v975, %v994
      %vm1024 = vcmp.eq.f32.partialorder %v976, %v996
      %vm1025 = vcmp.eq.f32.partialorder %v977, %v998
      %vm1026 = vcmp.eq.f32.partialorder %v978, %v1000
      %vm1027 = vcmp.eq.f32.partialorder %v979, %v1002
      %vm1028 = vcmp.eq.f32.partialorder %v980, %v1004
      %vm1029 = vcmp.eq.f32.partialorder %v981, %v1006
      %vm1030 = vcmp.eq.f32.partialorder %v982, %v1008
      %vm1031 = vcmp.eq.f32.partialorder %v983, %v1010
      %vm1032 = vcmp.eq.f32.partialorder %v984, %v1012
      %vm1033 = vcmp.eq.f32.partialorder %v985, %v1014
      %vm1034 = vcmp.eq.f32.partialorder %v986, %v1016
      %vm1035 = vcmp.eq.f32.partialorder %v987, %v1018
      %vm1036 = vcmp.eq.f32.partialorder %v988, %v1020
      %v1037 = vsel %vm1021, %v585, 128
      %v1038 = vsel %vm1022, %v585, 128
      %v1039 = vsel %vm1023, %v585, 128
      %v1040 = vsel %vm1024, %v585, 128
      %v1041 = vsel %vm1025, %v585, 128
      %v1042 = vsel %vm1026, %v585, 128
      %v1043 = vsel %vm1027, %v585, 128
      %v1044 = vsel %vm1028, %v585, 128
      %v1045 = vsel %vm1029, %v585, 128
      %v1046 = vsel %vm1030, %v585, 128
      %v1047 = vsel %vm1031, %v585, 128
      %v1048 = vsel %vm1032, %v585, 128
      %v1049 = vsel %vm1033, %v585, 128
      %v1050 = vsel %vm1034, %v585, 128
      %v1051 = vsel %vm1035, %v585, 128
      %v1052 = vsel %vm1036, %v585, 128
      %v1053 = vand.u32 %v1037, 65535
      %v1054 = vshra.s32 %v1037, 16
      %v1055 = vcvt.s32.f32 %v1053
      %v1056 = vcvt.s32.f32 %v1054
      %1057 = vmin.xlane.f32.xlu0 %v1056
      %v1058 = vpop.xlane.xlu0 %1057
      %vm1059 = vcmp.eq.f32.partialorder %v1056, %v1058
      %v1060 = vsel %vm1059, %v1055, inf
      %1061 = vmin.xlane.f32.xlu0 %v1060
      %v1062 = vpop.xlane.xlu0 %1061
      %v1063 = vcvt.f32.s32 %v1062
      %v1064 = vcvt.f32.s32 %v1058
      %v1065 = vshll.u32 %v1064, 16
      %v1066 = vadd.s32 %v1065, %v1063
      %v1067 = vand.u32 %v1038, 65535
      %v1068 = vshra.s32 %v1038, 16
      %v1069 = vcvt.s32.f32 %v1067
      %v1070 = vcvt.s32.f32 %v1068
      %1071 = vmin.xlane.f32.xlu0 %v1070
      %v1072 = vpop.xlane.xlu0 %1071
      %vm1073 = vcmp.eq.f32.partialorder %v1070, %v1072
      %v1074 = vsel %vm1073, %v1069, inf
      %1075 = vmin.xlane.f32.xlu0 %v1074
      %v1076 = vpop.xlane.xlu0 %1075
      %v1077 = vcvt.f32.s32 %v1076
      %v1078 = vcvt.f32.s32 %v1072
      %v1079 = vshll.u32 %v1078, 16
      %v1080 = vadd.s32 %v1079, %v1077
      %v1081 = vand.u32 %v1039, 65535
      %v1082 = vshra.s32 %v1039, 16
      %v1083 = vcvt.s32.f32 %v1081
      %v1084 = vcvt.s32.f32 %v1082
      %1085 = vmin.xlane.f32.xlu0 %v1084
      %v1086 = vpop.xlane.xlu0 %1085
      %vm1087 = vcmp.eq.f32.partialorder %v1084, %v1086
      %v1088 = vsel %vm1087, %v1083, inf
      %1089 = vmin.xlane.f32.xlu0 %v1088
      %v1090 = vpop.xlane.xlu0 %1089
      %v1091 = vcvt.f32.s32 %v1090
      %v1092 = vcvt.f32.s32 %v1086
      %v1093 = vshll.u32 %v1092, 16
      %v1094 = vadd.s32 %v1093, %v1091
      %v1095 = vand.u32 %v1040, 65535
      %v1096 = vshra.s32 %v1040, 16
      %v1097 = vcvt.s32.f32 %v1095
      %v1098 = vcvt.s32.f32 %v1096
      %1099 = vmin.xlane.f32.xlu0 %v1098
      %v1100 = vpop.xlane.xlu0 %1099
      %vm1101 = vcmp.eq.f32.partialorder %v1098, %v1100
      %v1102 = vsel %vm1101, %v1097, inf
      %1103 = vmin.xlane.f32.xlu0 %v1102
      %v1104 = vpop.xlane.xlu0 %1103
      %v1105 = vcvt.f32.s32 %v1104
      %v1106 = vcvt.f32.s32 %v1100
      %v1107 = vshll.u32 %v1106, 16
      %v1108 = vadd.s32 %v1107, %v1105
      %v1109 = vand.u32 %v1041, 65535
      %v1110 = vshra.s32 %v1041, 16
      %v1111 = vcvt.s32.f32 %v1109
      %v1112 = vcvt.s32.f32 %v1110
      %1113 = vmin.xlane.f32.xlu0 %v1112
      %v1114 = vpop.xlane.xlu0 %1113
      %vm1115 = vcmp.eq.f32.partialorder %v1112, %v1114
      %v1116 = vsel %vm1115, %v1111, inf
      %1117 = vmin.xlane.f32.xlu0 %v1116
      %v1118 = vpop.xlane.xlu0 %1117
      %v1119 = vcvt.f32.s32 %v1118
      %v1120 = vcvt.f32.s32 %v1114
      %v1121 = vshll.u32 %v1120, 16
      %v1122 = vadd.s32 %v1121, %v1119
      %v1123 = vand.u32 %v1042, 65535
      %v1124 = vshra.s32 %v1042, 16
      %v1125 = vcvt.s32.f32 %v1123
      %v1126 = vcvt.s32.f32 %v1124
      %1127 = vmin.xlane.f32.xlu0 %v1126
      %v1128 = vpop.xlane.xlu0 %1127
      %vm1129 = vcmp.eq.f32.partialorder %v1126, %v1128
      %v1130 = vsel %vm1129, %v1125, inf
      %1131 = vmin.xlane.f32.xlu0 %v1130
      %v1132 = vpop.xlane.xlu0 %1131
      %v1133 = vcvt.f32.s32 %v1132
      %v1134 = vcvt.f32.s32 %v1128
      %v1135 = vshll.u32 %v1134, 16
      %v1136 = vadd.s32 %v1135, %v1133
      %v1137 = vand.u32 %v1043, 65535
      %v1138 = vshra.s32 %v1043, 16
      %v1139 = vcvt.s32.f32 %v1137
      %v1140 = vcvt.s32.f32 %v1138
      %1141 = vmin.xlane.f32.xlu0 %v1140
      %v1142 = vpop.xlane.xlu0 %1141
      %vm1143 = vcmp.eq.f32.partialorder %v1140, %v1142
      %v1144 = vsel %vm1143, %v1139, inf
      %1145 = vmin.xlane.f32.xlu0 %v1144
      %v1146 = vpop.xlane.xlu0 %1145
      %v1147 = vcvt.f32.s32 %v1146
      %v1148 = vcvt.f32.s32 %v1142
      %v1149 = vshll.u32 %v1148, 16
      %v1150 = vadd.s32 %v1149, %v1147
      %v1151 = vand.u32 %v1044, 65535
      %v1152 = vshra.s32 %v1044, 16
      %v1153 = vcvt.s32.f32 %v1151
      %v1154 = vcvt.s32.f32 %v1152
      %1155 = vmin.xlane.f32.xlu0 %v1154
      %v1156 = vpop.xlane.xlu0 %1155
      %vm1157 = vcmp.eq.f32.partialorder %v1154, %v1156
      %v1158 = vsel %vm1157, %v1153, inf
      %1159 = vmin.xlane.f32.xlu0 %v1158
      %v1160 = vpop.xlane.xlu0 %1159
      %v1161 = vcvt.f32.s32 %v1160
      %v1162 = vcvt.f32.s32 %v1156
      %v1163 = vshll.u32 %v1162, 16
      %v1164 = vadd.s32 %v1163, %v1161
      %v1165 = vand.u32 %v1045, 65535
      %v1166 = vshra.s32 %v1045, 16
      %v1167 = vcvt.s32.f32 %v1165
      %v1168 = vcvt.s32.f32 %v1166
      %1169 = vmin.xlane.f32.xlu0 %v1168
      %v1170 = vpop.xlane.xlu0 %1169
      %vm1171 = vcmp.eq.f32.partialorder %v1168, %v1170
      %v1172 = vsel %vm1171, %v1167, inf
      %1173 = vmin.xlane.f32.xlu0 %v1172
      %v1174 = vpop.xlane.xlu0 %1173
      %v1175 = vcvt.f32.s32 %v1174
      %v1176 = vcvt.f32.s32 %v1170
      %v1177 = vshll.u32 %v1176, 16
      %v1178 = vadd.s32 %v1177, %v1175
      %v1179 = vand.u32 %v1046, 65535
      %v1180 = vshra.s32 %v1046, 16
      %v1181 = vcvt.s32.f32 %v1179
      %v1182 = vcvt.s32.f32 %v1180
      %1183 = vmin.xlane.f32.xlu0 %v1182
      %v1184 = vpop.xlane.xlu0 %1183
      %vm1185 = vcmp.eq.f32.partialorder %v1182, %v1184
      %v1186 = vsel %vm1185, %v1181, inf
      %1187 = vmin.xlane.f32.xlu0 %v1186
      %v1188 = vpop.xlane.xlu0 %1187
      %v1189 = vcvt.f32.s32 %v1188
      %v1190 = vcvt.f32.s32 %v1184
      %v1191 = vshll.u32 %v1190, 16
      %v1192 = vadd.s32 %v1191, %v1189
      %v1193 = vand.u32 %v1047, 65535
      %v1194 = vshra.s32 %v1047, 16
      %v1195 = vcvt.s32.f32 %v1193
      %v1196 = vcvt.s32.f32 %v1194
      %1197 = vmin.xlane.f32.xlu0 %v1196
      %v1198 = vpop.xlane.xlu0 %1197
      %vm1199 = vcmp.eq.f32.partialorder %v1196, %v1198
      %v1200 = vsel %vm1199, %v1195, inf
      %1201 = vmin.xlane.f32.xlu0 %v1200
      %v1202 = vpop.xlane.xlu0 %1201
      %v1203 = vcvt.f32.s32 %v1202
      %v1204 = vcvt.f32.s32 %v1198
      %v1205 = vshll.u32 %v1204, 16
      %v1206 = vadd.s32 %v1205, %v1203
      %v1207 = vand.u32 %v1048, 65535
      %v1208 = vshra.s32 %v1048, 16
      %v1209 = vcvt.s32.f32 %v1207
      %v1210 = vcvt.s32.f32 %v1208
      %1211 = vmin.xlane.f32.xlu0 %v1210
      %v1212 = vpop.xlane.xlu0 %1211
      %vm1213 = vcmp.eq.f32.partialorder %v1210, %v1212
      %v1214 = vsel %vm1213, %v1209, inf
      %1215 = vmin.xlane.f32.xlu0 %v1214
      %v1216 = vpop.xlane.xlu0 %1215
      %v1217 = vcvt.f32.s32 %v1216
      %v1218 = vcvt.f32.s32 %v1212
      %v1219 = vshll.u32 %v1218, 16
      %v1220 = vadd.s32 %v1219, %v1217
      %v1221 = vand.u32 %v1049, 65535
      %v1222 = vshra.s32 %v1049, 16
      %v1223 = vcvt.s32.f32 %v1221
      %v1224 = vcvt.s32.f32 %v1222
      %1225 = vmin.xlane.f32.xlu0 %v1224
      %v1226 = vpop.xlane.xlu0 %1225
      %vm1227 = vcmp.eq.f32.partialorder %v1224, %v1226
      %v1228 = vsel %vm1227, %v1223, inf
      %1229 = vmin.xlane.f32.xlu0 %v1228
      %v1230 = vpop.xlane.xlu0 %1229
      %v1231 = vcvt.f32.s32 %v1230
      %v1232 = vcvt.f32.s32 %v1226
      %v1233 = vshll.u32 %v1232, 16
      %v1234 = vadd.s32 %v1233, %v1231
      %v1235 = vand.u32 %v1050, 65535
      %v1236 = vshra.s32 %v1050, 16
      %v1237 = vcvt.s32.f32 %v1235
      %v1238 = vcvt.s32.f32 %v1236
      %1239 = vmin.xlane.f32.xlu0 %v1238
      %v1240 = vpop.xlane.xlu0 %1239
      %vm1241 = vcmp.eq.f32.partialorder %v1238, %v1240
      %v1242 = vsel %vm1241, %v1237, inf
      %1243 = vmin.xlane.f32.xlu0 %v1242
      %v1244 = vpop.xlane.xlu0 %1243
      %v1245 = vcvt.f32.s32 %v1244
      %v1246 = vcvt.f32.s32 %v1240
      %v1247 = vshll.u32 %v1246, 16
      %v1248 = vadd.s32 %v1247, %v1245
      %v1249 = vand.u32 %v1051, 65535
      %v1250 = vshra.s32 %v1051, 16
      %v1251 = vcvt.s32.f32 %v1249
      %v1252 = vcvt.s32.f32 %v1250
      %1253 = vmin.xlane.f32.xlu0 %v1252
      %v1254 = vpop.xlane.xlu0 %1253
      %vm1255 = vcmp.eq.f32.partialorder %v1252, %v1254
      %v1256 = vsel %vm1255, %v1251, inf
      %1257 = vmin.xlane.f32.xlu0 %v1256
      %v1258 = vpop.xlane.xlu0 %1257
      %v1259 = vcvt.f32.s32 %v1258
      %v1260 = vcvt.f32.s32 %v1254
      %v1261 = vshll.u32 %v1260, 16
      %v1262 = vadd.s32 %v1261, %v1259
      %v1263 = vand.u32 %v1052, 65535
      %v1264 = vshra.s32 %v1052, 16
      %v1265 = vcvt.s32.f32 %v1263
      %v1266 = vcvt.s32.f32 %v1264
      %1267 = vmin.xlane.f32.xlu0 %v1266
      %v1268 = vpop.xlane.xlu0 %1267
      %vm1269 = vcmp.eq.f32.partialorder %v1266, %v1268
      %v1270 = vsel %vm1269, %v1265, inf
      %1271 = vmin.xlane.f32.xlu0 %v1270
      %v1272 = vpop.xlane.xlu0 %1271
      %v1273 = vcvt.f32.s32 %v1272
      %v1274 = vcvt.f32.s32 %v1268
      %v1275 = vshll.u32 %v1274, 16
      %v1276 = vadd.s32 %v1275, %v1273
      %vm1277 = vcmask 15368
      %1278 = vst.msk [vmem:[%s198] sm:$0xff] %vm1277, %v1066
      %1279 = vst.msk [vmem:[%s198 + $0x8] sm:$0xff] %vm1277, %v1080
      %1280 = vst.msk [vmem:[%s198 + $0x10] sm:$0xff] %vm1277, %v1094
      %1281 = vst.msk [vmem:[%s198 + $0x18] sm:$0xff] %vm1277, %v1108
      %1282 = vst.msk [vmem:[%s198 + $0x20] sm:$0xff] %vm1277, %v1122
      %1283 = vst.msk [vmem:[%s198 + $0x28] sm:$0xff] %vm1277, %v1136
      %1284 = vst.msk [vmem:[%s198 + $0x30] sm:$0xff] %vm1277, %v1150
      %1285 = vst.msk [vmem:[%s198 + $0x38] sm:$0xff] %vm1277, %v1164
      %1286 = vst.msk [vmem:[%s198 + $0x40] sm:$0xff] %vm1277, %v1178
      %1287 = vst.msk [vmem:[%s198 + $0x48] sm:$0xff] %vm1277, %v1192
      %1288 = vst.msk [vmem:[%s198 + $0x50] sm:$0xff] %vm1277, %v1206
      %1289 = vst.msk [vmem:[%s198 + $0x58] sm:$0xff] %vm1277, %v1220
      %1290 = vst.msk [vmem:[%s198 + $0x60] sm:$0xff] %vm1277, %v1234
      %1291 = vst.msk [vmem:[%s198 + $0x68] sm:$0xff] %vm1277, %v1248
      %1292 = vst.msk [vmem:[%s198 + $0x70] sm:$0xff] %vm1277, %v1262
      %1293 = vst.msk [vmem:[%s198 + $0x78] sm:$0xff] %vm1277, %v1276
      %vm1294 = vcmp.eq.s32.totalorder %v585, %v1066
      %vm1295 = vcmp.eq.s32.totalorder %v585, %v1080
      %vm1296 = vcmp.eq.s32.totalorder %v585, %v1094
      %vm1297 = vcmp.eq.s32.totalorder %v585, %v1108
      %vm1298 = vcmp.eq.s32.totalorder %v585, %v1122
      %vm1299 = vcmp.eq.s32.totalorder %v585, %v1136
      %vm1300 = vcmp.eq.s32.totalorder %v585, %v1150
      %vm1301 = vcmp.eq.s32.totalorder %v585, %v1164
      %vm1302 = vcmp.eq.s32.totalorder %v585, %v1178
      %vm1303 = vcmp.eq.s32.totalorder %v585, %v1192
      %vm1304 = vcmp.eq.s32.totalorder %v585, %v1206
      %vm1305 = vcmp.eq.s32.totalorder %v585, %v1220
      %vm1306 = vcmp.eq.s32.totalorder %v585, %v1234
      %vm1307 = vcmp.eq.s32.totalorder %v585, %v1248
      %vm1308 = vcmp.eq.s32.totalorder %v585, %v1262
      %vm1309 = vcmp.eq.s32.totalorder %v585, %v1276
      %v1310 = vsel %vm1294, inf, %v973
      %v1311 = vsel %vm1295, inf, %v974
      %v1312 = vsel %vm1296, inf, %v975
      %v1313 = vsel %vm1297, inf, %v976
      %v1314 = vsel %vm1298, inf, %v977
      %v1315 = vsel %vm1299, inf, %v978
      %v1316 = vsel %vm1300, inf, %v979
      %v1317 = vsel %vm1301, inf, %v980
      %v1318 = vsel %vm1302, inf, %v981
      %v1319 = vsel %vm1303, inf, %v982
      %v1320 = vsel %vm1304, inf, %v983
      %v1321 = vsel %vm1305, inf, %v984
      %v1322 = vsel %vm1306, inf, %v985
      %v1323 = vsel %vm1307, inf, %v986
      %v1324 = vsel %vm1308, inf, %v987
      %v1325 = vsel %vm1309, inf, %v988
      %1326 = vmin.xlane.f32.xlu0 %v1310
      %v1327 = vpop.xlane.xlu0 %1326
      %1328 = vmin.xlane.f32.xlu0 %v1311
      %v1329 = vpop.xlane.xlu0 %1328
      %1330 = vmin.xlane.f32.xlu0 %v1312
      %v1331 = vpop.xlane.xlu0 %1330
      %1332 = vmin.xlane.f32.xlu0 %v1313
      %v1333 = vpop.xlane.xlu0 %1332
      %1334 = vmin.xlane.f32.xlu0 %v1314
      %v1335 = vpop.xlane.xlu0 %1334
      %1336 = vmin.xlane.f32.xlu0 %v1315
      %v1337 = vpop.xlane.xlu0 %1336
      %1338 = vmin.xlane.f32.xlu0 %v1316
      %v1339 = vpop.xlane.xlu0 %1338
      %1340 = vmin.xlane.f32.xlu0 %v1317
      %v1341 = vpop.xlane.xlu0 %1340
      %1342 = vmin.xlane.f32.xlu0 %v1318
      %v1343 = vpop.xlane.xlu0 %1342
      %1344 = vmin.xlane.f32.xlu0 %v1319
      %v1345 = vpop.xlane.xlu0 %1344
      %1346 = vmin.xlane.f32.xlu0 %v1320
      %v1347 = vpop.xlane.xlu0 %1346
      %1348 = vmin.xlane.f32.xlu0 %v1321
      %v1349 = vpop.xlane.xlu0 %1348
      %1350 = vmin.xlane.f32.xlu0 %v1322
      %v1351 = vpop.xlane.xlu0 %1350
      %1352 = vmin.xlane.f32.xlu0 %v1323
      %v1353 = vpop.xlane.xlu0 %1352
      %1354 = vmin.xlane.f32.xlu0 %v1324
      %v1355 = vpop.xlane.xlu0 %1354
      %1356 = vmin.xlane.f32.xlu0 %v1325
      %v1357 = vpop.xlane.xlu0 %1356
      %vm1358 = vcmp.eq.f32.partialorder %v1310, %v1327
      %vm1359 = vcmp.eq.f32.partialorder %v1311, %v1329
      %vm1360 = vcmp.eq.f32.partialorder %v1312, %v1331
      %vm1361 = vcmp.eq.f32.partialorder %v1313, %v1333
      %vm1362 = vcmp.eq.f32.partialorder %v1314, %v1335
      %vm1363 = vcmp.eq.f32.partialorder %v1315, %v1337
      %vm1364 = vcmp.eq.f32.partialorder %v1316, %v1339
      %vm1365 = vcmp.eq.f32.partialorder %v1317, %v1341
      %vm1366 = vcmp.eq.f32.partialorder %v1318, %v1343
      %vm1367 = vcmp.eq.f32.partialorder %v1319, %v1345
      %vm1368 = vcmp.eq.f32.partialorder %v1320, %v1347
      %vm1369 = vcmp.eq.f32.partialorder %v1321, %v1349
      %vm1370 = vcmp.eq.f32.partialorder %v1322, %v1351
      %vm1371 = vcmp.eq.f32.partialorder %v1323, %v1353
      %vm1372 = vcmp.eq.f32.partialorder %v1324, %v1355
      %vm1373 = vcmp.eq.f32.partialorder %v1325, %v1357
      %v1374 = vsel %vm1358, %v585, 128
      %v1375 = vsel %vm1359, %v585, 128
      %v1376 = vsel %vm1360, %v585, 128
      %v1377 = vsel %vm1361, %v585, 128
      %v1378 = vsel %vm1362, %v585, 128
      %v1379 = vsel %vm1363, %v585, 128
      %v1380 = vsel %vm1364, %v585, 128
      %v1381 = vsel %vm1365, %v585, 128
      %v1382 = vsel %vm1366, %v585, 128
      %v1383 = vsel %vm1367, %v585, 128
      %v1384 = vsel %vm1368, %v585, 128
      %v1385 = vsel %vm1369, %v585, 128
      %v1386 = vsel %vm1370, %v585, 128
      %v1387 = vsel %vm1371, %v585, 128
      %v1388 = vsel %vm1372, %v585, 128
      %v1389 = vsel %vm1373, %v585, 128
      %v1390 = vand.u32 %v1374, 65535
      %v1391 = vshra.s32 %v1374, 16
      %v1392 = vcvt.s32.f32 %v1390
      %v1393 = vcvt.s32.f32 %v1391
      %1394 = vmin.xlane.f32.xlu0 %v1393
      %v1395 = vpop.xlane.xlu0 %1394
      %vm1396 = vcmp.eq.f32.partialorder %v1393, %v1395
      %v1397 = vsel %vm1396, %v1392, inf
      %1398 = vmin.xlane.f32.xlu0 %v1397
      %v1399 = vpop.xlane.xlu0 %1398
      %v1400 = vcvt.f32.s32 %v1399
      %v1401 = vcvt.f32.s32 %v1395
      %v1402 = vshll.u32 %v1401, 16
      %v1403 = vadd.s32 %v1402, %v1400
      %v1404 = vand.u32 %v1375, 65535
      %v1405 = vshra.s32 %v1375, 16
      %v1406 = vcvt.s32.f32 %v1404
      %v1407 = vcvt.s32.f32 %v1405
      %1408 = vmin.xlane.f32.xlu0 %v1407
      %v1409 = vpop.xlane.xlu0 %1408
      %vm1410 = vcmp.eq.f32.partialorder %v1407, %v1409
      %v1411 = vsel %vm1410, %v1406, inf
      %1412 = vmin.xlane.f32.xlu0 %v1411
      %v1413 = vpop.xlane.xlu0 %1412
      %v1414 = vcvt.f32.s32 %v1413
      %v1415 = vcvt.f32.s32 %v1409
      %v1416 = vshll.u32 %v1415, 16
      %v1417 = vadd.s32 %v1416, %v1414
      %v1418 = vand.u32 %v1376, 65535
      %v1419 = vshra.s32 %v1376, 16
      %v1420 = vcvt.s32.f32 %v1418
      %v1421 = vcvt.s32.f32 %v1419
      %1422 = vmin.xlane.f32.xlu0 %v1421
      %v1423 = vpop.xlane.xlu0 %1422
      %vm1424 = vcmp.eq.f32.partialorder %v1421, %v1423
      %v1425 = vsel %vm1424, %v1420, inf
      %1426 = vmin.xlane.f32.xlu0 %v1425
      %v1427 = vpop.xlane.xlu0 %1426
      %v1428 = vcvt.f32.s32 %v1427
      %v1429 = vcvt.f32.s32 %v1423
      %v1430 = vshll.u32 %v1429, 16
      %v1431 = vadd.s32 %v1430, %v1428
      %v1432 = vand.u32 %v1377, 65535
      %v1433 = vshra.s32 %v1377, 16
      %v1434 = vcvt.s32.f32 %v1432
      %v1435 = vcvt.s32.f32 %v1433
      %1436 = vmin.xlane.f32.xlu0 %v1435
      %v1437 = vpop.xlane.xlu0 %1436
      %vm1438 = vcmp.eq.f32.partialorder %v1435, %v1437
      %v1439 = vsel %vm1438, %v1434, inf
      %1440 = vmin.xlane.f32.xlu0 %v1439
      %v1441 = vpop.xlane.xlu0 %1440
      %v1442 = vcvt.f32.s32 %v1441
      %v1443 = vcvt.f32.s32 %v1437
      %v1444 = vshll.u32 %v1443, 16
      %v1445 = vadd.s32 %v1444, %v1442
      %v1446 = vand.u32 %v1378, 65535
      %v1447 = vshra.s32 %v1378, 16
      %v1448 = vcvt.s32.f32 %v1446
      %v1449 = vcvt.s32.f32 %v1447
      %1450 = vmin.xlane.f32.xlu0 %v1449
      %v1451 = vpop.xlane.xlu0 %1450
      %vm1452 = vcmp.eq.f32.partialorder %v1449, %v1451
      %v1453 = vsel %vm1452, %v1448, inf
      %1454 = vmin.xlane.f32.xlu0 %v1453
      %v1455 = vpop.xlane.xlu0 %1454
      %v1456 = vcvt.f32.s32 %v1455
      %v1457 = vcvt.f32.s32 %v1451
      %v1458 = vshll.u32 %v1457, 16
      %v1459 = vadd.s32 %v1458, %v1456
      %v1460 = vand.u32 %v1379, 65535
      %v1461 = vshra.s32 %v1379, 16
      %v1462 = vcvt.s32.f32 %v1460
      %v1463 = vcvt.s32.f32 %v1461
      %1464 = vmin.xlane.f32.xlu0 %v1463
      %v1465 = vpop.xlane.xlu0 %1464
      %vm1466 = vcmp.eq.f32.partialorder %v1463, %v1465
      %v1467 = vsel %vm1466, %v1462, inf
      %1468 = vmin.xlane.f32.xlu0 %v1467
      %v1469 = vpop.xlane.xlu0 %1468
      %v1470 = vcvt.f32.s32 %v1469
      %v1471 = vcvt.f32.s32 %v1465
      %v1472 = vshll.u32 %v1471, 16
      %v1473 = vadd.s32 %v1472, %v1470
      %v1474 = vand.u32 %v1380, 65535
      %v1475 = vshra.s32 %v1380, 16
      %v1476 = vcvt.s32.f32 %v1474
      %v1477 = vcvt.s32.f32 %v1475
      %1478 = vmin.xlane.f32.xlu0 %v1477
      %v1479 = vpop.xlane.xlu0 %1478
      %vm1480 = vcmp.eq.f32.partialorder %v1477, %v1479
      %v1481 = vsel %vm1480, %v1476, inf
      %1482 = vmin.xlane.f32.xlu0 %v1481
      %v1483 = vpop.xlane.xlu0 %1482
      %v1484 = vcvt.f32.s32 %v1483
      %v1485 = vcvt.f32.s32 %v1479
      %v1486 = vshll.u32 %v1485, 16
      %v1487 = vadd.s32 %v1486, %v1484
      %v1488 = vand.u32 %v1381, 65535
      %v1489 = vshra.s32 %v1381, 16
      %v1490 = vcvt.s32.f32 %v1488
      %v1491 = vcvt.s32.f32 %v1489
      %1492 = vmin.xlane.f32.xlu0 %v1491
      %v1493 = vpop.xlane.xlu0 %1492
      %vm1494 = vcmp.eq.f32.partialorder %v1491, %v1493
      %v1495 = vsel %vm1494, %v1490, inf
      %1496 = vmin.xlane.f32.xlu0 %v1495
      %v1497 = vpop.xlane.xlu0 %1496
      %v1498 = vcvt.f32.s32 %v1497
      %v1499 = vcvt.f32.s32 %v1493
      %v1500 = vshll.u32 %v1499, 16
      %v1501 = vadd.s32 %v1500, %v1498
      %v1502 = vand.u32 %v1382, 65535
      %v1503 = vshra.s32 %v1382, 16
      %v1504 = vcvt.s32.f32 %v1502
      %v1505 = vcvt.s32.f32 %v1503
      %1506 = vmin.xlane.f32.xlu0 %v1505
      %v1507 = vpop.xlane.xlu0 %1506
      %vm1508 = vcmp.eq.f32.partialorder %v1505, %v1507
      %v1509 = vsel %vm1508, %v1504, inf
      %1510 = vmin.xlane.f32.xlu0 %v1509
      %v1511 = vpop.xlane.xlu0 %1510
      %v1512 = vcvt.f32.s32 %v1511
      %v1513 = vcvt.f32.s32 %v1507
      %v1514 = vshll.u32 %v1513, 16
      %v1515 = vadd.s32 %v1514, %v1512
      %v1516 = vand.u32 %v1383, 65535
      %v1517 = vshra.s32 %v1383, 16
      %v1518 = vcvt.s32.f32 %v1516
      %v1519 = vcvt.s32.f32 %v1517
      %1520 = vmin.xlane.f32.xlu0 %v1519
      %v1521 = vpop.xlane.xlu0 %1520
      %vm1522 = vcmp.eq.f32.partialorder %v1519, %v1521
      %v1523 = vsel %vm1522, %v1518, inf
      %1524 = vmin.xlane.f32.xlu0 %v1523
      %v1525 = vpop.xlane.xlu0 %1524
      %v1526 = vcvt.f32.s32 %v1525
      %v1527 = vcvt.f32.s32 %v1521
      %v1528 = vshll.u32 %v1527, 16
      %v1529 = vadd.s32 %v1528, %v1526
      %v1530 = vand.u32 %v1384, 65535
      %v1531 = vshra.s32 %v1384, 16
      %v1532 = vcvt.s32.f32 %v1530
      %v1533 = vcvt.s32.f32 %v1531
      %1534 = vmin.xlane.f32.xlu0 %v1533
      %v1535 = vpop.xlane.xlu0 %1534
      %vm1536 = vcmp.eq.f32.partialorder %v1533, %v1535
      %v1537 = vsel %vm1536, %v1532, inf
      %1538 = vmin.xlane.f32.xlu0 %v1537
      %v1539 = vpop.xlane.xlu0 %1538
      %v1540 = vcvt.f32.s32 %v1539
      %v1541 = vcvt.f32.s32 %v1535
      %v1542 = vshll.u32 %v1541, 16
      %v1543 = vadd.s32 %v1542, %v1540
      %v1544 = vand.u32 %v1385, 65535
      %v1545 = vshra.s32 %v1385, 16
      %v1546 = vcvt.s32.f32 %v1544
      %v1547 = vcvt.s32.f32 %v1545
      %1548 = vmin.xlane.f32.xlu0 %v1547
      %v1549 = vpop.xlane.xlu0 %1548
      %vm1550 = vcmp.eq.f32.partialorder %v1547, %v1549
      %v1551 = vsel %vm1550, %v1546, inf
      %1552 = vmin.xlane.f32.xlu0 %v1551
      %v1553 = vpop.xlane.xlu0 %1552
      %v1554 = vcvt.f32.s32 %v1553
      %v1555 = vcvt.f32.s32 %v1549
      %v1556 = vshll.u32 %v1555, 16
      %v1557 = vadd.s32 %v1556, %v1554
      %v1558 = vand.u32 %v1386, 65535
      %v1559 = vshra.s32 %v1386, 16
      %v1560 = vcvt.s32.f32 %v1558
      %v1561 = vcvt.s32.f32 %v1559
      %1562 = vmin.xlane.f32.xlu0 %v1561
      %v1563 = vpop.xlane.xlu0 %1562
      %vm1564 = vcmp.eq.f32.partialorder %v1561, %v1563
      %v1565 = vsel %vm1564, %v1560, inf
      %1566 = vmin.xlane.f32.xlu0 %v1565
      %v1567 = vpop.xlane.xlu0 %1566
      %v1568 = vcvt.f32.s32 %v1567
      %v1569 = vcvt.f32.s32 %v1563
      %v1570 = vshll.u32 %v1569, 16
      %v1571 = vadd.s32 %v1570, %v1568
      %v1572 = vand.u32 %v1387, 65535
      %v1573 = vshra.s32 %v1387, 16
      %v1574 = vcvt.s32.f32 %v1572
      %v1575 = vcvt.s32.f32 %v1573
      %1576 = vmin.xlane.f32.xlu0 %v1575
      %v1577 = vpop.xlane.xlu0 %1576
      %vm1578 = vcmp.eq.f32.partialorder %v1575, %v1577
      %v1579 = vsel %vm1578, %v1574, inf
      %1580 = vmin.xlane.f32.xlu0 %v1579
      %v1581 = vpop.xlane.xlu0 %1580
      %v1582 = vcvt.f32.s32 %v1581
      %v1583 = vcvt.f32.s32 %v1577
      %v1584 = vshll.u32 %v1583, 16
      %v1585 = vadd.s32 %v1584, %v1582
      %v1586 = vand.u32 %v1388, 65535
      %v1587 = vshra.s32 %v1388, 16
      %v1588 = vcvt.s32.f32 %v1586
      %v1589 = vcvt.s32.f32 %v1587
      %1590 = vmin.xlane.f32.xlu0 %v1589
      %v1591 = vpop.xlane.xlu0 %1590
      %vm1592 = vcmp.eq.f32.partialorder %v1589, %v1591
      %v1593 = vsel %vm1592, %v1588, inf
      %1594 = vmin.xlane.f32.xlu0 %v1593
      %v1595 = vpop.xlane.xlu0 %1594
      %v1596 = vcvt.f32.s32 %v1595
      %v1597 = vcvt.f32.s32 %v1591
      %v1598 = vshll.u32 %v1597, 16
      %v1599 = vadd.s32 %v1598, %v1596
      %v1600 = vand.u32 %v1389, 65535
      %v1601 = vshra.s32 %v1389, 16
      %v1602 = vcvt.s32.f32 %v1600
      %v1603 = vcvt.s32.f32 %v1601
      %1604 = vmin.xlane.f32.xlu0 %v1603
      %v1605 = vpop.xlane.xlu0 %1604
      %vm1606 = vcmp.eq.f32.partialorder %v1603, %v1605
      %v1607 = vsel %vm1606, %v1602, inf
      %1608 = vmin.xlane.f32.xlu0 %v1607
      %v1609 = vpop.xlane.xlu0 %1608
      %v1610 = vcvt.f32.s32 %v1609
      %v1611 = vcvt.f32.s32 %v1605
      %v1612 = vshll.u32 %v1611, 16
      %v1613 = vadd.s32 %v1612, %v1610
      %vm1614 = vcmask 23568
      %1615 = vst.msk [vmem:[%s198] sm:$0xff] %vm1614, %v1403
      %1616 = vst.msk [vmem:[%s198 + $0x8] sm:$0xff] %vm1614, %v1417
      %1617 = vst.msk [vmem:[%s198 + $0x10] sm:$0xff] %vm1614, %v1431
      %1618 = vst.msk [vmem:[%s198 + $0x18] sm:$0xff] %vm1614, %v1445
      %1619 = vst.msk [vmem:[%s198 + $0x20] sm:$0xff] %vm1614, %v1459
      %1620 = vst.msk [vmem:[%s198 + $0x28] sm:$0xff] %vm1614, %v1473
      %1621 = vst.msk [vmem:[%s198 + $0x30] sm:$0xff] %vm1614, %v1487
      %1622 = vst.msk [vmem:[%s198 + $0x38] sm:$0xff] %vm1614, %v1501
      %1623 = vst.msk [vmem:[%s198 + $0x40] sm:$0xff] %vm1614, %v1515
      %1624 = vst.msk [vmem:[%s198 + $0x48] sm:$0xff] %vm1614, %v1529
      %1625 = vst.msk [vmem:[%s198 + $0x50] sm:$0xff] %vm1614, %v1543
      %1626 = vst.msk [vmem:[%s198 + $0x58] sm:$0xff] %vm1614, %v1557
      %1627 = vst.msk [vmem:[%s198 + $0x60] sm:$0xff] %vm1614, %v1571
      %1628 = vst.msk [vmem:[%s198 + $0x68] sm:$0xff] %vm1614, %v1585
      %1629 = vst.msk [vmem:[%s198 + $0x70] sm:$0xff] %vm1614, %v1599
      %1630 = vst.msk [vmem:[%s198 + $0x78] sm:$0xff] %vm1614, %v1613
      %vm1631 = vcmp.eq.s32.totalorder %v585, %v1403
      %vm1632 = vcmp.eq.s32.totalorder %v585, %v1417
      %vm1633 = vcmp.eq.s32.totalorder %v585, %v1431
      %vm1634 = vcmp.eq.s32.totalorder %v585, %v1445
      %vm1635 = vcmp.eq.s32.totalorder %v585, %v1459
      %vm1636 = vcmp.eq.s32.totalorder %v585, %v1473
      %vm1637 = vcmp.eq.s32.totalorder %v585, %v1487
      %vm1638 = vcmp.eq.s32.totalorder %v585, %v1501
      %vm1639 = vcmp.eq.s32.totalorder %v585, %v1515
      %vm1640 = vcmp.eq.s32.totalorder %v585, %v1529
      %vm1641 = vcmp.eq.s32.totalorder %v585, %v1543
      %vm1642 = vcmp.eq.s32.totalorder %v585, %v1557
      %vm1643 = vcmp.eq.s32.totalorder %v585, %v1571
      %vm1644 = vcmp.eq.s32.totalorder %v585, %v1585
      %vm1645 = vcmp.eq.s32.totalorder %v585, %v1599
      %vm1646 = vcmp.eq.s32.totalorder %v585, %v1613
      %v1647 = vsel %vm1631, inf, %v1310
      %v1648 = vsel %vm1632, inf, %v1311
      %v1649 = vsel %vm1633, inf, %v1312
      %v1650 = vsel %vm1634, inf, %v1313
      %v1651 = vsel %vm1635, inf, %v1314
      %v1652 = vsel %vm1636, inf, %v1315
      %v1653 = vsel %vm1637, inf, %v1316
      %v1654 = vsel %vm1638, inf, %v1317
      %v1655 = vsel %vm1639, inf, %v1318
      %v1656 = vsel %vm1640, inf, %v1319
      %v1657 = vsel %vm1641, inf, %v1320
      %v1658 = vsel %vm1642, inf, %v1321
      %v1659 = vsel %vm1643, inf, %v1322
      %v1660 = vsel %vm1644, inf, %v1323
      %v1661 = vsel %vm1645, inf, %v1324
      %v1662 = vsel %vm1646, inf, %v1325
      %1663 = vmin.xlane.f32.xlu0 %v1647
      %v1664 = vpop.xlane.xlu0 %1663
      %1665 = vmin.xlane.f32.xlu0 %v1648
      %v1666 = vpop.xlane.xlu0 %1665
      %1667 = vmin.xlane.f32.xlu0 %v1649
      %v1668 = vpop.xlane.xlu0 %1667
      %1669 = vmin.xlane.f32.xlu0 %v1650
      %v1670 = vpop.xlane.xlu0 %1669
      %1671 = vmin.xlane.f32.xlu0 %v1651
      %v1672 = vpop.xlane.xlu0 %1671
      %1673 = vmin.xlane.f32.xlu0 %v1652
      %v1674 = vpop.xlane.xlu0 %1673
      %1675 = vmin.xlane.f32.xlu0 %v1653
      %v1676 = vpop.xlane.xlu0 %1675
      %1677 = vmin.xlane.f32.xlu0 %v1654
      %v1678 = vpop.xlane.xlu0 %1677
      %1679 = vmin.xlane.f32.xlu0 %v1655
      %v1680 = vpop.xlane.xlu0 %1679
      %1681 = vmin.xlane.f32.xlu0 %v1656
      %v1682 = vpop.xlane.xlu0 %1681
      %1683 = vmin.xlane.f32.xlu0 %v1657
      %v1684 = vpop.xlane.xlu0 %1683
      %1685 = vmin.xlane.f32.xlu0 %v1658
      %v1686 = vpop.xlane.xlu0 %1685
      %1687 = vmin.xlane.f32.xlu0 %v1659
      %v1688 = vpop.xlane.xlu0 %1687
      %1689 = vmin.xlane.f32.xlu0 %v1660
      %v1690 = vpop.xlane.xlu0 %1689
      %1691 = vmin.xlane.f32.xlu0 %v1661
      %v1692 = vpop.xlane.xlu0 %1691
      %1693 = vmin.xlane.f32.xlu0 %v1662
      %v1694 = vpop.xlane.xlu0 %1693
      %vm1695 = vcmp.eq.f32.partialorder %v1647, %v1664
      %vm1696 = vcmp.eq.f32.partialorder %v1648, %v1666
      %vm1697 = vcmp.eq.f32.partialorder %v1649, %v1668
      %vm1698 = vcmp.eq.f32.partialorder %v1650, %v1670
      %vm1699 = vcmp.eq.f32.partialorder %v1651, %v1672
      %vm1700 = vcmp.eq.f32.partialorder %v1652, %v1674
      %vm1701 = vcmp.eq.f32.partialorder %v1653, %v1676
      %vm1702 = vcmp.eq.f32.partialorder %v1654, %v1678
      %vm1703 = vcmp.eq.f32.partialorder %v1655, %v1680
      %vm1704 = vcmp.eq.f32.partialorder %v1656, %v1682
      %vm1705 = vcmp.eq.f32.partialorder %v1657, %v1684
      %vm1706 = vcmp.eq.f32.partialorder %v1658, %v1686
      %vm1707 = vcmp.eq.f32.partialorder %v1659, %v1688
      %vm1708 = vcmp.eq.f32.partialorder %v1660, %v1690
      %vm1709 = vcmp.eq.f32.partialorder %v1661, %v1692
      %vm1710 = vcmp.eq.f32.partialorder %v1662, %v1694
      %v1711 = vsel %vm1695, %v585, 128
      %v1712 = vsel %vm1696, %v585, 128
      %v1713 = vsel %vm1697, %v585, 128
      %v1714 = vsel %vm1698, %v585, 128
      %v1715 = vsel %vm1699, %v585, 128
      %v1716 = vsel %vm1700, %v585, 128
      %v1717 = vsel %vm1701, %v585, 128
      %v1718 = vsel %vm1702, %v585, 128
      %v1719 = vsel %vm1703, %v585, 128
      %v1720 = vsel %vm1704, %v585, 128
      %v1721 = vsel %vm1705, %v585, 128
      %v1722 = vsel %vm1706, %v585, 128
      %v1723 = vsel %vm1707, %v585, 128
      %v1724 = vsel %vm1708, %v585, 128
      %v1725 = vsel %vm1709, %v585, 128
      %v1726 = vsel %vm1710, %v585, 128
      %v1727 = vand.u32 %v1711, 65535
      %v1728 = vshra.s32 %v1711, 16
      %v1729 = vcvt.s32.f32 %v1727
      %v1730 = vcvt.s32.f32 %v1728
      %1731 = vmin.xlane.f32.xlu0 %v1730
      %v1732 = vpop.xlane.xlu0 %1731
      %vm1733 = vcmp.eq.f32.partialorder %v1730, %v1732
      %v1734 = vsel %vm1733, %v1729, inf
      %1735 = vmin.xlane.f32.xlu0 %v1734
      %v1736 = vpop.xlane.xlu0 %1735
      %v1737 = vcvt.f32.s32 %v1736
      %v1738 = vcvt.f32.s32 %v1732
      %v1739 = vshll.u32 %v1738, 16
      %v1740 = vadd.s32 %v1739, %v1737
      %v1741 = vand.u32 %v1712, 65535
      %v1742 = vshra.s32 %v1712, 16
      %v1743 = vcvt.s32.f32 %v1741
      %v1744 = vcvt.s32.f32 %v1742
      %1745 = vmin.xlane.f32.xlu0 %v1744
      %v1746 = vpop.xlane.xlu0 %1745
      %vm1747 = vcmp.eq.f32.partialorder %v1744, %v1746
      %v1748 = vsel %vm1747, %v1743, inf
      %1749 = vmin.xlane.f32.xlu0 %v1748
      %v1750 = vpop.xlane.xlu0 %1749
      %v1751 = vcvt.f32.s32 %v1750
      %v1752 = vcvt.f32.s32 %v1746
      %v1753 = vshll.u32 %v1752, 16
      %v1754 = vadd.s32 %v1753, %v1751
      %v1755 = vand.u32 %v1713, 65535
      %v1756 = vshra.s32 %v1713, 16
      %v1757 = vcvt.s32.f32 %v1755
      %v1758 = vcvt.s32.f32 %v1756
      %1759 = vmin.xlane.f32.xlu0 %v1758
      %v1760 = vpop.xlane.xlu0 %1759
      %vm1761 = vcmp.eq.f32.partialorder %v1758, %v1760
      %v1762 = vsel %vm1761, %v1757, inf
      %1763 = vmin.xlane.f32.xlu0 %v1762
      %v1764 = vpop.xlane.xlu0 %1763
      %v1765 = vcvt.f32.s32 %v1764
      %v1766 = vcvt.f32.s32 %v1760
      %v1767 = vshll.u32 %v1766, 16
      %v1768 = vadd.s32 %v1767, %v1765
      %v1769 = vand.u32 %v1714, 65535
      %v1770 = vshra.s32 %v1714, 16
      %v1771 = vcvt.s32.f32 %v1769
      %v1772 = vcvt.s32.f32 %v1770
      %1773 = vmin.xlane.f32.xlu0 %v1772
      %v1774 = vpop.xlane.xlu0 %1773
      %vm1775 = vcmp.eq.f32.partialorder %v1772, %v1774
      %v1776 = vsel %vm1775, %v1771, inf
      %1777 = vmin.xlane.f32.xlu0 %v1776
      %v1778 = vpop.xlane.xlu0 %1777
      %v1779 = vcvt.f32.s32 %v1778
      %v1780 = vcvt.f32.s32 %v1774
      %v1781 = vshll.u32 %v1780, 16
      %v1782 = vadd.s32 %v1781, %v1779
      %v1783 = vand.u32 %v1715, 65535
      %v1784 = vshra.s32 %v1715, 16
      %v1785 = vcvt.s32.f32 %v1783
      %v1786 = vcvt.s32.f32 %v1784
      %1787 = vmin.xlane.f32.xlu0 %v1786
      %v1788 = vpop.xlane.xlu0 %1787
      %vm1789 = vcmp.eq.f32.partialorder %v1786, %v1788
      %v1790 = vsel %vm1789, %v1785, inf
      %1791 = vmin.xlane.f32.xlu0 %v1790
      %v1792 = vpop.xlane.xlu0 %1791
      %v1793 = vcvt.f32.s32 %v1792
      %v1794 = vcvt.f32.s32 %v1788
      %v1795 = vshll.u32 %v1794, 16
      %v1796 = vadd.s32 %v1795, %v1793
      %v1797 = vand.u32 %v1716, 65535
      %v1798 = vshra.s32 %v1716, 16
      %v1799 = vcvt.s32.f32 %v1797
      %v1800 = vcvt.s32.f32 %v1798
      %1801 = vmin.xlane.f32.xlu0 %v1800
      %v1802 = vpop.xlane.xlu0 %1801
      %vm1803 = vcmp.eq.f32.partialorder %v1800, %v1802
      %v1804 = vsel %vm1803, %v1799, inf
      %1805 = vmin.xlane.f32.xlu0 %v1804
      %v1806 = vpop.xlane.xlu0 %1805
      %v1807 = vcvt.f32.s32 %v1806
      %v1808 = vcvt.f32.s32 %v1802
      %v1809 = vshll.u32 %v1808, 16
      %v1810 = vadd.s32 %v1809, %v1807
      %v1811 = vand.u32 %v1717, 65535
      %v1812 = vshra.s32 %v1717, 16
      %v1813 = vcvt.s32.f32 %v1811
      %v1814 = vcvt.s32.f32 %v1812
      %1815 = vmin.xlane.f32.xlu0 %v1814
      %v1816 = vpop.xlane.xlu0 %1815
      %vm1817 = vcmp.eq.f32.partialorder %v1814, %v1816
      %v1818 = vsel %vm1817, %v1813, inf
      %1819 = vmin.xlane.f32.xlu0 %v1818
      %v1820 = vpop.xlane.xlu0 %1819
      %v1821 = vcvt.f32.s32 %v1820
      %v1822 = vcvt.f32.s32 %v1816
      %v1823 = vshll.u32 %v1822, 16
      %v1824 = vadd.s32 %v1823, %v1821
      %v1825 = vand.u32 %v1718, 65535
      %v1826 = vshra.s32 %v1718, 16
      %v1827 = vcvt.s32.f32 %v1825
      %v1828 = vcvt.s32.f32 %v1826
      %1829 = vmin.xlane.f32.xlu0 %v1828
      %v1830 = vpop.xlane.xlu0 %1829
      %vm1831 = vcmp.eq.f32.partialorder %v1828, %v1830
      %v1832 = vsel %vm1831, %v1827, inf
      %1833 = vmin.xlane.f32.xlu0 %v1832
      %v1834 = vpop.xlane.xlu0 %1833
      %v1835 = vcvt.f32.s32 %v1834
      %v1836 = vcvt.f32.s32 %v1830
      %v1837 = vshll.u32 %v1836, 16
      %v1838 = vadd.s32 %v1837, %v1835
      %v1839 = vand.u32 %v1719, 65535
      %v1840 = vshra.s32 %v1719, 16
      %v1841 = vcvt.s32.f32 %v1839
      %v1842 = vcvt.s32.f32 %v1840
      %1843 = vmin.xlane.f32.xlu0 %v1842
      %v1844 = vpop.xlane.xlu0 %1843
      %vm1845 = vcmp.eq.f32.partialorder %v1842, %v1844
      %v1846 = vsel %vm1845, %v1841, inf
      %1847 = vmin.xlane.f32.xlu0 %v1846
      %v1848 = vpop.xlane.xlu0 %1847
      %v1849 = vcvt.f32.s32 %v1848
      %v1850 = vcvt.f32.s32 %v1844
      %v1851 = vshll.u32 %v1850, 16
      %v1852 = vadd.s32 %v1851, %v1849
      %v1853 = vand.u32 %v1720, 65535
      %v1854 = vshra.s32 %v1720, 16
      %v1855 = vcvt.s32.f32 %v1853
      %v1856 = vcvt.s32.f32 %v1854
      %1857 = vmin.xlane.f32.xlu0 %v1856
      %v1858 = vpop.xlane.xlu0 %1857
      %vm1859 = vcmp.eq.f32.partialorder %v1856, %v1858
      %v1860 = vsel %vm1859, %v1855, inf
      %1861 = vmin.xlane.f32.xlu0 %v1860
      %v1862 = vpop.xlane.xlu0 %1861
      %v1863 = vcvt.f32.s32 %v1862
      %v1864 = vcvt.f32.s32 %v1858
      %v1865 = vshll.u32 %v1864, 16
      %v1866 = vadd.s32 %v1865, %v1863
      %v1867 = vand.u32 %v1721, 65535
      %v1868 = vshra.s32 %v1721, 16
      %v1869 = vcvt.s32.f32 %v1867
      %v1870 = vcvt.s32.f32 %v1868
      %1871 = vmin.xlane.f32.xlu0 %v1870
      %v1872 = vpop.xlane.xlu0 %1871
      %vm1873 = vcmp.eq.f32.partialorder %v1870, %v1872
      %v1874 = vsel %vm1873, %v1869, inf
      %1875 = vmin.xlane.f32.xlu0 %v1874
      %v1876 = vpop.xlane.xlu0 %1875
      %v1877 = vcvt.f32.s32 %v1876
      %v1878 = vcvt.f32.s32 %v1872
      %v1879 = vshll.u32 %v1878, 16
      %v1880 = vadd.s32 %v1879, %v1877
      %v1881 = vand.u32 %v1722, 65535
      %v1882 = vshra.s32 %v1722, 16
      %v1883 = vcvt.s32.f32 %v1881
      %v1884 = vcvt.s32.f32 %v1882
      %1885 = vmin.xlane.f32.xlu0 %v1884
      %v1886 = vpop.xlane.xlu0 %1885
      %vm1887 = vcmp.eq.f32.partialorder %v1884, %v1886
      %v1888 = vsel %vm1887, %v1883, inf
      %1889 = vmin.xlane.f32.xlu0 %v1888
      %v1890 = vpop.xlane.xlu0 %1889
      %v1891 = vcvt.f32.s32 %v1890
      %v1892 = vcvt.f32.s32 %v1886
      %v1893 = vshll.u32 %v1892, 16
      %v1894 = vadd.s32 %v1893, %v1891
      %v1895 = vand.u32 %v1723, 65535
      %v1896 = vshra.s32 %v1723, 16
      %v1897 = vcvt.s32.f32 %v1895
      %v1898 = vcvt.s32.f32 %v1896
      %1899 = vmin.xlane.f32.xlu0 %v1898
      %v1900 = vpop.xlane.xlu0 %1899
      %vm1901 = vcmp.eq.f32.partialorder %v1898, %v1900
      %v1902 = vsel %vm1901, %v1897, inf
      %1903 = vmin.xlane.f32.xlu0 %v1902
      %v1904 = vpop.xlane.xlu0 %1903
      %v1905 = vcvt.f32.s32 %v1904
      %v1906 = vcvt.f32.s32 %v1900
      %v1907 = vshll.u32 %v1906, 16
      %v1908 = vadd.s32 %v1907, %v1905
      %v1909 = vand.u32 %v1724, 65535
      %v1910 = vshra.s32 %v1724, 16
      %v1911 = vcvt.s32.f32 %v1909
      %v1912 = vcvt.s32.f32 %v1910
      %1913 = vmin.xlane.f32.xlu0 %v1912
      %v1914 = vpop.xlane.xlu0 %1913
      %vm1915 = vcmp.eq.f32.partialorder %v1912, %v1914
      %v1916 = vsel %vm1915, %v1911, inf
      %1917 = vmin.xlane.f32.xlu0 %v1916
      %v1918 = vpop.xlane.xlu0 %1917
      %v1919 = vcvt.f32.s32 %v1918
      %v1920 = vcvt.f32.s32 %v1914
      %v1921 = vshll.u32 %v1920, 16
      %v1922 = vadd.s32 %v1921, %v1919
      %v1923 = vand.u32 %v1725, 65535
      %v1924 = vshra.s32 %v1725, 16
      %v1925 = vcvt.s32.f32 %v1923
      %v1926 = vcvt.s32.f32 %v1924
      %1927 = vmin.xlane.f32.xlu0 %v1926
      %v1928 = vpop.xlane.xlu0 %1927
      %vm1929 = vcmp.eq.f32.partialorder %v1926, %v1928
      %v1930 = vsel %vm1929, %v1925, inf
      %1931 = vmin.xlane.f32.xlu0 %v1930
      %v1932 = vpop.xlane.xlu0 %1931
      %v1933 = vcvt.f32.s32 %v1932
      %v1934 = vcvt.f32.s32 %v1928
      %v1935 = vshll.u32 %v1934, 16
      %v1936 = vadd.s32 %v1935, %v1933
      %v1937 = vand.u32 %v1726, 65535
      %v1938 = vshra.s32 %v1726, 16
      %v1939 = vcvt.s32.f32 %v1937
      %v1940 = vcvt.s32.f32 %v1938
      %1941 = vmin.xlane.f32.xlu0 %v1940
      %v1942 = vpop.xlane.xlu0 %1941
      %vm1943 = vcmp.eq.f32.partialorder %v1940, %v1942
      %v1944 = vsel %vm1943, %v1939, inf
      %1945 = vmin.xlane.f32.xlu0 %v1944
      %v1946 = vpop.xlane.xlu0 %1945
      %v1947 = vcvt.f32.s32 %v1946
      %v1948 = vcvt.f32.s32 %v1942
      %v1949 = vshll.u32 %v1948, 16
      %v1950 = vadd.s32 %v1949, %v1947
      %vm1951 = vcmask 31768
      %1952 = vst.msk [vmem:[%s198] sm:$0xff] %vm1951, %v1740
      %1953 = vst.msk [vmem:[%s198 + $0x8] sm:$0xff] %vm1951, %v1754
      %1954 = vst.msk [vmem:[%s198 + $0x10] sm:$0xff] %vm1951, %v1768
      %1955 = vst.msk [vmem:[%s198 + $0x18] sm:$0xff] %vm1951, %v1782
      %1956 = vst.msk [vmem:[%s198 + $0x20] sm:$0xff] %vm1951, %v1796
      %1957 = vst.msk [vmem:[%s198 + $0x28] sm:$0xff] %vm1951, %v1810
      %1958 = vst.msk [vmem:[%s198 + $0x30] sm:$0xff] %vm1951, %v1824
      %1959 = vst.msk [vmem:[%s198 + $0x38] sm:$0xff] %vm1951, %v1838
      %1960 = vst.msk [vmem:[%s198 + $0x40] sm:$0xff] %vm1951, %v1852
      %1961 = vst.msk [vmem:[%s198 + $0x48] sm:$0xff] %vm1951, %v1866
      %1962 = vst.msk [vmem:[%s198 + $0x50] sm:$0xff] %vm1951, %v1880
      %1963 = vst.msk [vmem:[%s198 + $0x58] sm:$0xff] %vm1951, %v1894
      %1964 = vst.msk [vmem:[%s198 + $0x60] sm:$0xff] %vm1951, %v1908
      %1965 = vst.msk [vmem:[%s198 + $0x68] sm:$0xff] %vm1951, %v1922
      %1966 = vst.msk [vmem:[%s198 + $0x70] sm:$0xff] %vm1951, %v1936
      %1967 = vst.msk [vmem:[%s198 + $0x78] sm:$0xff] %vm1951, %v1950
      %s1968 = smul.u32 16, %s18
      %p1969 = scmp.lt.s32.totalorder %s17, 1
      %s1970 = scalar_select %p1969, %s17, 1
      %p1971 = scmp.lt.s32.totalorder %s1968, 15
      %s1972 = scalar_select %p1971, %s1968, 15
      %s1973 = smul.addr %s1970, 16
      %s1974 = sadd.s32 %s1972, %s1973
      %s1975 = smul.addr %s1974, 8
      %s1976 = scalar_lea.vmem %s2, %s1975
      // Predicated region
      $region29: #{self_attention_forward.4} parent=27 // pred_check
        %p1977 = pneg %p99
      $region30: #{self_attention_forward.4} parent=27 // pred_check_branch
        %1979 = sbr.rel (%p1977) target = $region32
      $region31: #{self_attention_forward.4} parent=27 // pred_region
        %s1980 = smul.u32 16, %s18
      $region32: #{self_attention_forward.4} parent=27 // pred_fallthru
        _
    $region28: #{self_attention_forward.4} parent=5 // pred_fallthru
      _
    %p1981 = scmp.le.s32.totalorder 2, %s8
    // Predicated region
    $region33: #{self_attention_forward.4} parent=5 // pred_check
      %p1982 = pneg %p1981
    $region34: #{self_attention_forward.4} parent=5 // pred_check_branch
      %1984 = sbr.rel (%p1982) target = $region36
    $region35: #{self_attention_forward.4} parent=5 // pred_region
      %s1985 = ssub.s32 %s8, 2
      // Predicated region
      $region37: #{self_attention_forward.4} parent=35 // pred_check
        %p1986 = pneg %p105
      $region38: #{self_attention_forward.4} parent=35 // pred_check_branch
        %1988 = sbr.rel (%p1986) target = $region40
      $region39: #{self_attention_forward.4} parent=35 // pred_region
        %s1989 = smul.u32 16, %s20
        %p1990 = scmp.lt.s32.totalorder %s19, 1
        %s1991 = scalar_select %p1990, %s19, 1
        %p1992 = scmp.lt.s32.totalorder %s1989, 15
        %s1993 = scalar_select %p1992, %s1989, 15
        %s1994 = smul.addr %s1991, 16
        %s1995 = sadd.s32 %s1993, %s1994
        %s1996 = smul.addr %s1995, 8
        %s1997 = scalar_lea.vmem %s2, %s1996
      $region40: #{self_attention_forward.4} parent=35 // pred_fallthru
        _
    $region36: #{self_attention_forward.4} parent=5 // pred_fallthru
      _
  $region6: #{self_attention_forward.4} parent=0 // loop_footer
    %s12 = sadd.s32 1, %s8
  $region7: #{self_attention_forward.4} parent=0 // loop_footer_branch
    %7 = sbr.rel target = $region3
  $region8: #{self_attention_forward.4} parent=0 // loop_exit
    _

// kernel: self_attention_forward.7
$region0: #{self_attention_forward.7}
  #allocation0 [shape = 'u32[]', space=smem, size = 0x4, offset = 0x4, fixed_abs, tag = 'smem constant byte address 0x4 - core index']
  #allocation1 [shape = 'u32[144,128]{1,0:T(1,128)}', space=vmem, size = 0x12000, scoped, tag = 'internal scratch']
  %s0 = inlined_call_operand.vmem [shape: bf16[2,16,128], index: 0, kind: input, shape index: {}]
  %s1 = inlined_call_operand.vmem [shape: bf16[2,16,128], index: 1, kind: input, shape index: {}]
  %s2 = inlined_call_operand.vmem [shape: bf16[2,32,128], index: 2, kind: input, shape index: {}]
  %s3 = inlined_call_operand.vmem [shape: bf16[16,64], index: 3, kind: input, shape index: {}]
  %s4 = inlined_call_operand.hbm [shape: f32[2,16,128], index: 4, kind: output, shape index: {}]
  %s5 = sld [smem:[#allocation0]]
  $region49: #{self_attention_forward.7} parent=0
    _
  %s7 = ssub.s32 1, %s5
  %s8 = scalar_select 0, %s7, %s5
  $region1: #{self_attention_forward.7} parent=0
    #allocation2 [shape = 'u8[16384]{0}', space=vmem, size = 0x4000, scoped, tag = 'output window, operand 0']
    #allocation3 [shape = 's32[2]{0}', space=sflag, size = 0x8, scoped, tag = 'scoped memory for self_attention_forward.7']
    %9 = vsyncpa [#allocation3], 0
    %s10 = scalar_lea.sflag [#allocation3], 1
    %11 = vsyncpa %s10, 0
    loop: start=0, step=1, limit=4
    $region2: #{self_attention_forward.7} parent=1 // loop_pre_header
      _
    $region3: #{self_attention_forward.7} parent=1 // loop_header
      %s13 = sphi 0, %s17
      %p14 = scmp.ge.s32.totalorder %s13, 4
      %s23 = sphi 0, %s25
      %s26 = sphi 0, %s23
      %s27 = sphi 0, %s26
      %s43 = sphi 0, %s27
      %s49 = sphi 0, %s51
      %s52 = sphi 0, %s49
      %s53 = sphi 0, %s52
      %s69 = sphi 0, %s53
      %s75 = sphi 0, %s77
      %s78 = sphi 0, %s75
      %s79 = sphi 0, %s78
      %s95 = sphi 0, %s79
      %s99 = sphi 0, %s99
      %s101 = sphi 0, %s99
      %s102 = sphi 0, %s101
      %s116 = sphi 0, %s102
      %s122 = sphi 0, %s124
      %s125 = sphi 0, %s122
      %s126 = sphi 0, %s125
      %s142 = sphi 0, %s126
    $region4: #{self_attention_forward.7} parent=1 // loop_header_branch
      %16 = sbr.rel (%p14) target = $region8
    $region5: #{self_attention_forward.7} parent=1 // loop_body
      %s18 = ssub.s32 %s13, 1
      %s19 = ssub.s32 %s13, 2
      %s20 = sadd.s32 %s13, 1
      %s21 = ssub.s32 %s13, %s20
      %p22 = scmp.eq.s32.totalorder %s21, 0
      %s24 = sadd.s32 %s23, 1
      %s25 = scalar_select %p22, %s23, %s24
      %p28 = pneg %p22
      %p29 = scmp.eq.s32.totalorder %s13, 1
      %p30 = por %p28, %p29
      %p31 = scmp.ne.s32.totalorder %s23, %s26
      %p32 = scmp.eq.s32.totalorder %s13, 0
      %p33 = por %p31, %p32
      %p34 = scmp.ne.s32.totalorder %s23, %s26
      %p35 = scmp.eq.s32.totalorder %s18, 1
      %p36 = por %p34, %p35
      %p37 = scmp.ne.s32.totalorder %s26, %s27
      %p38 = scmp.eq.s32.totalorder %s18, 0
      %p39 = por %p37, %p38
      %p40 = scmp.ne.s32.totalorder %s26, %s27
      %p41 = scmp.eq.s32.totalorder %s19, 1
      %p42 = por %p40, %p41
      %p44 = scmp.ne.s32.totalorder %s27, %s43
      %p45 = scmp.eq.s32.totalorder %s19, 0
      %p46 = por %p44, %p45
      %s47 = ssub.s32 %s13, %s20
      %p48 = scmp.eq.s32.totalorder %s47, 0
      %s50 = sadd.s32 %s49, 1
      %s51 = scalar_select %p48, %s49, %s50
      %p54 = pneg %p48
      %p55 = scmp.eq.s32.totalorder %s13, 1
      %p56 = por %p54, %p55
      %p57 = scmp.ne.s32.totalorder %s49, %s52
      %p58 = scmp.eq.s32.totalorder %s13, 0
      %p59 = por %p57, %p58
      %p60 = scmp.ne.s32.totalorder %s49, %s52
      %p61 = scmp.eq.s32.totalorder %s18, 1
      %p62 = por %p60, %p61
      %p63 = scmp.ne.s32.totalorder %s52, %s53
      %p64 = scmp.eq.s32.totalorder %s18, 0
      %p65 = por %p63, %p64
      %p66 = scmp.ne.s32.totalorder %s52, %s53
      %p67 = scmp.eq.s32.totalorder %s19, 1
      %p68 = por %p66, %p67
      %p70 = scmp.ne.s32.totalorder %s53, %s69
      %p71 = scmp.eq.s32.totalorder %s19, 0
      %p72 = por %p70, %p71
      %s73 = ssub.s32 %s13, %s20
      %p74 = scmp.eq.s32.totalorder %s73, 0
      %s76 = sadd.s32 %s75, 1
      %s77 = scalar_select %p74, %s75, %s76
      %p80 = pneg %p74
      %p81 = scmp.eq.s32.totalorder %s13, 1
      %p82 = por %p80, %p81
      %p83 = scmp.ne.s32.totalorder %s75, %s78
      %p84 = scmp.eq.s32.totalorder %s13, 0
      %p85 = por %p83, %p84
      %p86 = scmp.ne.s32.totalorder %s75, %s78
      %p87 = scmp.eq.s32.totalorder %s18, 1
      %p88 = por %p86, %p87
      %p89 = scmp.ne.s32.totalorder %s78, %s79
      %p90 = scmp.eq.s32.totalorder %s18, 0
      %p91 = por %p89, %p90
      %p92 = scmp.ne.s32.totalorder %s78, %s79
      %p93 = scmp.eq.s32.totalorder %s19, 1
      %p94 = por %p92, %p93
      %p96 = scmp.ne.s32.totalorder %s79, %s95
      %p97 = scmp.eq.s32.totalorder %s19, 0
      %p98 = por %p96, %p97
      %s100 = sadd.s32 %s99, 1
      %p103 = scmp.eq.s32.totalorder %s13, 1
      %p104 = scmp.ne.s32.totalorder %s99, %s101
      %p105 = scmp.eq.s32.totalorder %s13, 0
      %p106 = por %p104, %p105
      %p107 = scmp.ne.s32.totalorder %s99, %s101
      %p108 = scmp.eq.s32.totalorder %s18, 1
      %p109 = por %p107, %p108
      %p110 = scmp.ne.s32.totalorder %s101, %s102
      %p111 = scmp.eq.s32.totalorder %s18, 0
      %p112 = por %p110, %p111
      %p113 = scmp.ne.s32.totalorder %s101, %s102
      %p114 = scmp.eq.s32.totalorder %s19, 1
      %p115 = por %p113, %p114
      %p117 = scmp.ne.s32.totalorder %s102, %s116
      %p118 = scmp.eq.s32.totalorder %s19, 0
      %p119 = por %p117, %p118
      %s120 = ssub.s32 %s13, %s20
      %p121 = scmp.eq.s32.totalorder %s120, 0
      %s123 = sadd.s32 %s122, 1
      %s124 = scalar_select %p121, %s122, %s123
      %p127 = pneg %p121
      %p128 = scmp.eq.s32.totalorder %s13, 1
      %p129 = por %p127, %p128
      %p130 = scmp.ne.s32.totalorder %s122, %s125
      %p131 = scmp.eq.s32.totalorder %s13, 0
      %p132 = por %p130, %p131
      %p133 = scmp.ne.s32.totalorder %s122, %s125
      %p134 = scmp.eq.s32.totalorder %s18, 1
      %p135 = por %p133, %p134
      %p136 = scmp.ne.s32.totalorder %s125, %s126
      %p137 = scmp.eq.s32.totalorder %s18, 0
      %p138 = por %p136, %p137
      %p139 = scmp.ne.s32.totalorder %s125, %s126
      %p140 = scmp.eq.s32.totalorder %s19, 1
      %p141 = por %p139, %p140
      %p143 = scmp.ne.s32.totalorder %s126, %s142
      %p144 = scmp.eq.s32.totalorder %s19, 0
      %p145 = por %p143, %p144
      %p146 = scmp.le.s32.totalorder 1, %s13
      %p147 = scmp.lt.s32.totalorder %s13, 3
      %p148 = pnand %p146, %p147
      %p149 = pneg %p148
      // Predicated region
      $region9: #{self_attention_forward.7} parent=5 // pred_check
        _
      $region10: #{self_attention_forward.7} parent=5 // pred_check_branch
        %151 = sbr.rel (%p148) target = $region12
      $region11: #{self_attention_forward.7} parent=5 // pred_region
        %s152 = ssub.s32 %s13, 1
        // Predicated region
        $region13: #{self_attention_forward.7} parent=11 // pred_check
          %p153 = pneg %p112
        $region14: #{self_attention_forward.7} parent=11 // pred_check_branch
          %155 = sbr.rel (%p153) target = $region16
        $region15: #{self_attention_forward.7} parent=11 // pred_region
          _
        $region16: #{self_attention_forward.7} parent=11 // pred_fallthru
          _
      $region12: #{self_attention_forward.7} parent=5 // pred_fallthru
        _
      %p156 = scmp.lt.s32.totalorder %s13, 2
      // Predicated region
      $region17: #{self_attention_forward.7} parent=5 // pred_check
        %p157 = pneg %p156
      $region18: #{self_attention_forward.7} parent=5 // pred_check_branch
        %159 = sbr.rel (%p157) target = $region20
      $region19: #{self_attention_forward.7} parent=5 // pred_region
        // Predicated region
        $region21: #{self_attention_forward.7} parent=19 // pred_check
          %p160 = pneg %p33
        $region22: #{self_attention_forward.7} parent=19 // pred_check_branch
          %162 = sbr.rel (%p160) target = $region24
        $region23: #{self_attention_forward.7} parent=19 // pred_region
          %p163 = scmp.lt.s32.totalorder %s13, 1
          %s164 = scalar_select %p163, %s13, 1
          %s165 = smul.addr %s164, 2
          %s166 = smul.addr %s165, 4
          %s167 = scalar_lea.vmem %s0, %s166
        $region24: #{self_attention_forward.7} parent=19 // pred_fallthru
          _
        // Predicated region
        $region25: #{self_attention_forward.7} parent=19 // pred_check
          %p168 = pneg %p59
        $region26: #{self_attention_forward.7} parent=19 // pred_check_branch
          %170 = sbr.rel (%p168) target = $region28
        $region27: #{self_attention_forward.7} parent=19 // pred_region
          %p171 = scmp.lt.s32.totalorder %s13, 1
          %s172 = scalar_select %p171, %s13, 1
          %s173 = smul.addr %s172, 2
          %s174 = smul.addr %s173, 4
          %s175 = scalar_lea.vmem %s1, %s174
        $region28: #{self_attention_forward.7} parent=19 // pred_fallthru
          _
        // Predicated region
        $region29: #{self_attention_forward.7} parent=19 // pred_check
          %p176 = pneg %p85
        $region30: #{self_attention_forward.7} parent=19 // pred_check_branch
          %178 = sbr.rel (%p176) target = $region32
        $region31: #{self_attention_forward.7} parent=19 // pred_region
          %p179 = scmp.lt.s32.totalorder %s13, 1
          %s180 = scalar_select %p179, %s13, 1
          %s181 = smul.addr %s180, 4
          %s182 = smul.addr %s181, 4
          %s183 = scalar_lea.vmem %s2, %s182
        $region32: #{self_attention_forward.7} parent=19 // pred_fallthru
          _
      $region20: #{self_attention_forward.7} parent=5 // pred_fallthru
        _
      %p184 = scmp.le.s32.totalorder 1, %s13
      %p185 = scmp.lt.s32.totalorder %s13, 3
      %p186 = pnand %p184, %p185
      %p187 = pneg %p186
      // Predicated region
      $region33: #{self_attention_forward.7} parent=5 // pred_check
        _
      $region34: #{self_attention_forward.7} parent=5 // pred_check_branch
        %189 = sbr.rel (%p186) target = $region36
      $region35: #{self_attention_forward.7} parent=5 // pred_region
        %s190 = ssub.s32 %s13, 1
        %p191 = scmp.lt.s32.totalorder %s18, 1
        %s192 = scalar_select %p191, %s18, 1
        %s193 = smul.addr %s192, 2
        %s194 = smul.addr %s193, 4
        %s195 = scalar_lea.vmem %s0, %s194
        %p196 = pneg %p39
        %p197 = pneg %p36
        %p198 = scmp.lt.s32.totalorder %s18, 1
        %s199 = scalar_select %p198, %s18, 1
        %s200 = smul.addr %s199, 2
        %s201 = smul.addr %s200, 4
        %s202 = scalar_lea.vmem %s1, %s201
        %p203 = pneg %p65
        %p204 = pneg %p62
        %p205 = scmp.lt.s32.totalorder %s18, 1
        %s206 = scalar_select %p205, %s18, 1
        %s207 = smul.addr %s206, 4
        %s208 = smul.addr %s207, 4
        %s209 = scalar_lea.vmem %s2, %s208
        %p210 = pneg %p91
        %p211 = pneg %p88
        %p212 = pneg %p112
        %p213 = pneg %p109
        %p214 = pneg %p138
        %p215 = pneg %p135
        %s216 = sand.u32 %s125, 1
        %s217 = scalar_lea.sflag [#allocation3], %s216
        %s218 = sand.u32 %s125, 1
        %s219 = smul.addr %s218, 16
        %s220 = scalar_lea.vmem [#allocation2], %s219
        %p221 = scmp.lt.s32.totalorder %s18, 1
        %s222 = scalar_select %p221, %s18, 1
        %s223 = smul.addr %s222, 2
        %s224 = smul.addr %s223, 4
        %s225 = scalar_lea.vmem %s0, %s224
        %p226 = scmp.lt.s32.totalorder %s18, 1
        %s227 = scalar_select %p226, %s18, 1
        %s228 = smul.addr %s227, 2
        %s229 = smul.addr %s228, 4
        %s230 = scalar_lea.vmem %s1, %s229
        %p231 = scmp.lt.s32.totalorder %s18, 1
        %s232 = scalar_select %p231, %s18, 1
        %s233 = smul.addr %s232, 4
        %s234 = smul.addr %s233, 4
        %s235 = scalar_lea.vmem %s2, %s234
        %v237 = vld [vmem:[%s225] sm:$0xf]
        %v238 = vld [vmem:[%s225 + $0x4] sm:$0xf]
        %v239 = vld [vmem:[%s230] sm:$0xf]
        %v240 = vld [vmem:[%s230 + $0x4] sm:$0xf]
        %v241 = vld [vmem:[%s235] sm:$0xf]
        %v242 = vld [vmem:[%s235 + $0x4] sm:$0xf]
        %v243 = vld [vmem:[%s235 + $0x8] sm:$0xf]
        %v244 = vld [vmem:[%s235 + $0xc] sm:$0xf]
        %v247 = vunpack.c.l.b16 %v237
        %v248 = vunpack.c.l.b16 %v238
        %v249 = vpack.c.b16 %v248, %v247
        %v253 = vunpack.c.l.b16 %v239
        %v254 = vunpack.c.l.b16 %v240
        %v255 = vpack.c.b16 %v254, %v253
        %v261 = vunpack.c.l.b16 %v241
        %v262 = vunpack.c.l.b16 %v242
        %v263 = vunpack.c.l.b16 %v243
        %v264 = vunpack.c.l.b16 %v244
        %v265 = vpack.c.b16 %v262, %v261
        %v266 = vpack.c.b16 %v264, %v263
        %v269 = vld [vmem:[%s3] sm:$0xf]
        %v270 = vld [vmem:[%s3 + $0x4] sm:$0xf]
        %v273 = vunpack.c.l.b16 %v269
        %v274 = vunpack.c.l.b16 %v270
        %v275 = vpack.c.b16 %v274, %v273
        %vm276 = vcmask 523264
        %v278 = vsel %vm276, %v275, 0
        %280 = vmatprep.subr.bf16.mxu0 0
        %281 = vmatpush1.bf16.msra.mxu0 %v249
        %282 = vmatprep.subr.bf16.mxu0 0
        %283 = vmatpush1.bf16.msra.mxu0 %v255
        %284 = vmatprep.subr.bf16.mxu0 0
        %285 = vmatpush1.bf16.msra.mxu0 %v265
        %286 = vmatprep.subr.bf16.mxu0 0
        %287 = vmatpush1.bf16.msra.mxu0 %v266
        %288 = vmatprep.subr.bf16.mxu0 0
        %289 = vmatpush1.bf16.msra.mxu0 0
        %290 = vmatprep.subr.bf16.mxu0 0
        %291 = vmatpush1.bf16.msra.mxu0 0
        %292 = vmatprep.subr.bf16.mxu0 0
        %293 = vmatpush1.bf16.msra.mxu0 0
        %294 = vmatprep.subr.bf16.mxu0 0
        %295 = vmatpush1.bf16.msra.mxu0 0
        %296 = vmatprep.subr.bf16.mxu0 0
        %297 = vmatpush1.bf16.msra.mxu0 0
        %298 = vmatprep.subr.bf16.mxu0 0
        %299 = vmatpush1.bf16.msra.mxu0 0
        %300 = vmatprep.subr.bf16.mxu0 0
        %301 = vmatpush1.bf16.msra.mxu0 0
        %302 = vmatprep.subr.bf16.mxu0 0
        %303 = vmatpush1.bf16.msra.mxu0 0
        %304 = vmatprep.subr.bf16.mxu0 0
        %305 = vmatpush1.bf16.msra.mxu0 0
        %306 = vmatprep.subr.bf16.mxu0 0
        %307 = vmatpush1.bf16.msra.mxu0 0
        %308 = vmatprep.subr.bf16.mxu0 0
        %309 = vmatpush1.bf16.msra.mxu0 0
        %310 = vmatprep.subr.bf16.mxu0 0
        %311 = vmatpush1.bf16.msra.mxu0 0
        %312 = vmatprep.mubr.bf16.mxu0 0
        %313 = vmatmul.mubr.bf16.gmra.mrb[0].mxu0 %v278
        %v314 = vpop.f32.mrb[0].mxu0
        %v315 = vadd.f32 0.0, %v314
        %v316 = vpop.f32.mrb[0].mxu0
        %v317 = vpop.f32.mrb[0].mxu0
        %v318 = vadd.f32 0.0, %v317
        %v319 = vpop.f32.mrb[0].mxu0
        %320 = vdwg.mxu0
        %321 = vadd.xlane.f32.xlu0 %v315
        %v322 = vpop.xlane.xlu0 %321
        %323 = vadd.xlane.f32.xlu0 %v318
        %v324 = vpop.xlane.xlu0 %323
        %v325 = vmul.f32 %v322, 0.0078125
        %v326 = vmul.f32 %v324, 0.0078125
        %v327 = vmul.f32 %v315, %v315
        %v328 = vmul.f32 %v318, %v318
        %329 = vadd.xlane.f32.xlu0 %v327
        %v330 = vpop.xlane.xlu0 %329
        %331 = vadd.xlane.f32.xlu0 %v328
        %v332 = vpop.xlane.xlu0 %331
        %v333 = vmul.f32 %v330, 0.0078125
        %v334 = vmul.f32 %v332, 0.0078125
        %v335 = vmul.f32 %v325, %v325
        %v336 = vmul.f32 %v326, %v326
        %v337 = vsub.f32 %v333, %v335
        %v338 = vsub.f32 %v334, %v336
        %v339 = vmax.f32 %v337, 0.0
        %v340 = vmax.f32 %v338, 0.0
        %v341 = vsub.f32 %v315, %v325
        %v342 = vsub.f32 %v318, %v326
        %v343 = vadd.f32 %v339, 1e-05
        %v344 = vadd.f32 %v340, 1e-05
        %v345 = vrsqrt.pop %v343
        %v346 = vrsqrt.pop %v344
        %v347 = vmul.f32 %v341, %v345
        %v348 = vmul.f32 %v342, %v346
        %vm349 = vcmp.ge.f32.partialorder %v347, 0.0
        %vm350 = vcmp.ge.f32.partialorder %v348, 0.0
        %v351 = vmul.f32 %v347, 0.2
        %v352 = vmul.f32 %v348, 0.2
        %v353 = vsel %vm349, %v347, %v351
        %v354 = vsel %vm350, %v348, %v352
        %355 = vst [vmem:[%s220] sm:$0xff] %v353
        %356 = vst [vmem:[%s220 + $0x8] sm:$0xff] %v354
        %s357 = sand.u32 %s125, 1
        %s358 = scalar_lea.sflag [#allocation3], %s357
        %s359 = sand.u32 %s125, 1
        %s360 = smul.addr %s359, 16
        %s361 = scalar_lea.vmem [#allocation2], %s360
        // Predicated region
        $region37: #{self_attention_forward.7} parent=35 // pred_check
          %p362 = pneg %p135
        $region38: #{self_attention_forward.7} parent=35 // pred_check_branch
          %364 = sbr.rel (%p362) target = $region40
        $region39: #{self_attention_forward.7} parent=35 // pred_region
          %s366 = ssub.s32 256, 256
          %367 = vsyncadd %s358, %s366
          %s368 = smul.addr %s18, 2
          %s369 = smul.addr %s368, 128
          %s370 = scalar_lea.hbm %s4, %s369
          %s371 = sshll.u32 %s361, 4
          %s372 = int_to_ptr.vmem [resolvable:$true] %s371
          %377 = dma.vmem_to_hbm [thread:$0]  %s372, 256, %s370, %s358, 128, 128, 8
        $region40: #{self_attention_forward.7} parent=35 // pred_fallthru
          _
      $region36: #{self_attention_forward.7} parent=5 // pred_fallthru
        _
      %p378 = scmp.le.s32.totalorder 2, %s13
      // Predicated region
      $region41: #{self_attention_forward.7} parent=5 // pred_check
        %p379 = pneg %p378
      $region42: #{self_attention_forward.7} parent=5 // pred_check_branch
        %381 = sbr.rel (%p379) target = $region44
      $region43: #{self_attention_forward.7} parent=5 // pred_region
        %s382 = ssub.s32 %s13, 2
        // Predicated region
        $region45: #{self_attention_forward.7} parent=43 // pred_check
          %p383 = pneg %p141
        $region46: #{self_attention_forward.7} parent=43 // pred_check_branch
          %385 = sbr.rel (%p383) target = $region48
        $region47: #{self_attention_forward.7} parent=43 // pred_region
          %s386 = sand.u32 %s126, 1
          %s387 = scalar_lea.sflag [#allocation3], %s386
          %s388 = sand.u32 %s126, 1
          %s389 = smul.addr %s388, 16
          %s390 = scalar_lea.vmem [#allocation2], %s389
          %391 = dma.done %s387, 256
        $region48: #{self_attention_forward.7} parent=43 // pred_fallthru
          _
      $region44: #{self_attention_forward.7} parent=5 // pred_fallthru
        _
    $region6: #{self_attention_forward.7} parent=1 // loop_footer
      %s17 = sadd.s32 1, %s13
    $region7: #{self_attention_forward.7} parent=1 // loop_footer_branch
      %12 = sbr.rel target = $region3
    $region8: #{self_attention_forward.7} parent=1 // loop_exit
      _
    %392 = vsyncpa [#allocation3], 1
    %s393 = scalar_lea.sflag [#allocation3], 1
    %394 = vsyncpa %s393, 1

</llo_original>
